<compile_context>
chip_gen: v7x
topology: tpu7x:2x2x1
jax: 0.10.0
libtpu: 0.0.40
codegen_flags: <defaults>
</compile_context>

<pallas_src>
import functools

import jax
import jax.numpy as jnp
from jax.experimental import pallas as pl
from jax.experimental.pallas import tpu as pltpu

PATCH = 16
IMG = 224
NP_SIDE = IMG // PATCH            # 14
N_PATCH = NP_SIDE * NP_SIDE       # 196
FEAT = PATCH * PATCH * 3          # 768
SEQ = N_PATCH + 1                 # 197  (patches + cls token)


# --------------------------- Pallas kernel ---------------------------------
def _pre_work_kernel(x_ref, w_ref, bias_ref, out_ref, *, bt):
    # x_ref   : (bt, N_PATCH, FEAT)  patchified image rows (K-permuted order)
    # w_ref   : (FEAT, tn)           row-permuted Linear weight tile (in, out)
    # bias_ref: (SEQ, tn)            precomputed  [emd; cls] @ W + b  slab
    # out_ref : (bt, SEQ, tn)
    w = w_ref[...]
    patch_bias = bias_ref[0:N_PATCH, :]       # (196, tn)
    cls_row = bias_ref[N_PATCH:SEQ, :]        # (1, tn)
    for i in range(bt):                       # static unroll (bt is small)
        mm = jnp.dot(x_ref[i], w, preferred_element_type=jnp.float32)
        out_ref[i, 0:N_PATCH, :] = mm + patch_bias
        out_ref[i, N_PATCH:SEQ, :] = cls_row


# ------------------------------ wrapper -------------------------------------
def _patchify(x):
    """Exact math equivalent of the PyTorch view/permute chain, but with the
    feature (K) axis in (c, hi, wi) order so the innermost 16-element runs
    stay contiguous (the matching permutation is folded into W's rows)."""
    B = x.shape[0]
    p = x.reshape(B, 3, NP_SIDE, PATCH, NP_SIDE, PATCH)   # (b, c, hb, hi, wb, wi)
    p = jnp.transpose(p, (0, 4, 2, 1, 3, 5))              # (b, wb, hb, c, hi, wi)
    return p.reshape(B, N_PATCH, FEAT)                    # (B, 196, 768)


def _prepare_params(params):
    """Fold the activation K-permutation into W's rows and precompute the
    combined bias slab  bias2d = [emd; cls] @ W + b  (param-sized, trace-time)."""
    w = params["w"]                                       # (FEAT, FEAT) = weight.T (in, out)
    b = params["b"]                                       # (1, FEAT)
    # PyTorch feature order: k = c*256 + wi*16 + hi ; kernel order: k' = c*256 + hi*16 + wi
    # so W_perm[c, hi, wi, :] = W[c, wi, hi, :]
    w_perm = jnp.transpose(w.reshape(3, PATCH, PATCH, FEAT),
                           (0, 2, 1, 3)).reshape(FEAT, FEAT)
    emd_ext = jnp.concatenate([params["emd"][0], params["cls"][0]], axis=0)  # (197, 768)
    bias2d = jnp.dot(emd_ext, w, precision=jax.lax.Precision.HIGHEST) + b    # (197, 768)
    return w_perm, bias2d


def _pick_tiling(B):
    """Return (batch block Bt, number of output-column tiles)."""
    if B == 1:
        return 1, 2          # 2-way column split keeps both v7x TensorCores busy
    for bt in (8, 4, 2):     # batch-block larger B, keep >=2 grid steps
        if B % bt == 0 and B // bt >= 2:
            return bt, 1
    return 1, 1


def pre_work_forward(x, params):
    """x: (B, 3, 224, 224) f32 image batch. Returns (B, 197, 768)."""
    B = x.shape[0]
    p = _patchify(x)
    w_perm, bias2d = _prepare_params(params)

    bt, n_col = _pick_tiling(B)
    tn = FEAT // n_col
    grid = (B // bt, n_col)

    kernel = functools.partial(_pre_work_kernel, bt=bt)
    return pl.pallas_call(
        kernel,
        out_shape=jax.ShapeDtypeStruct((B, SEQ, FEAT), jnp.float32),
        grid=grid,
        in_specs=[
            pl.BlockSpec((bt, N_PATCH, FEAT), lambda i, j: (i, 0, 0)),  # patches
            pl.BlockSpec((FEAT, tn), lambda i, j: (0, j)),              # weight (resident)
            pl.BlockSpec((SEQ, tn), lambda i, j: (0, j)),               # fused bias slab
        ],
        out_specs=pl.BlockSpec((bt, SEQ, tn), lambda i, j: (i, 0, j)),
        compiler_params=pltpu.CompilerParams(
            dimension_semantics=("parallel", "parallel")),
    )(p, w_perm, bias2d)


# --------------- pure-JAX reference mirroring the PyTorch code --------------
def pre_work_ref(x, params):
    B = x.shape[0]
    y = x.reshape(B, 3, IMG, -1, PATCH)
    y = jnp.transpose(y, (0, 1, 4, 3, 2))
    y = y.reshape(B, 3, y.shape[2], y.shape[3], -1, PATCH)
    y = jnp.transpose(y, (0, 3, 4, 1, 2, 5))
    y = y.reshape(B, y.shape[1], y.shape[2], -1)
    y = y.reshape(B, -1, y.shape[3])
    seq = jnp.concatenate(
        [y + params["emd"],
         jnp.broadcast_to(params["cls"], (B, 1, FEAT))], axis=1)
    out = jnp.einsum("bsf,fo->bso", seq, params["w"],
                     precision=jax.lax.Precision.HIGHEST)
    return out + params["b"]


def init_params(key):
    # The PyTorch module leaves cls/emd uninitialized (torch.Tensor); use small
    # random values so the numerical check is meaningful.
    k1, k2, k3, k4 = jax.random.split(key, 4)
    cls = jax.random.normal(k1, (1, 1, FEAT), jnp.float32) * 0.02
    emd = jax.random.normal(k2, (1, N_PATCH, FEAT), jnp.float32) * 0.02
    w = jax.random.normal(k3, (FEAT, FEAT), jnp.float32) * 0.02  # nn.Linear.weight.T
    b = jax.random.normal(k4, (1, FEAT), jnp.float32) * 0.02
    return dict(cls=cls, emd=emd, w=w, b=b)


if __name__ == "__main__":
    B = 2  # module hard-codes 3x224x224 -> 196 patches of 768 features
    key = jax.random.PRNGKey(0)
    kx, kp = jax.random.split(key)
    x = jax.random.normal(kx, (B, 3, IMG, IMG), jnp.float32)
    params = init_params(kp)

    out = jax.jit(pre_work_forward)(x, params)
    out = jax.block_until_ready(out)

    ref = pre_work_ref(x, params)
    assert out.shape == (B, SEQ, FEAT)
    max_err = float(jnp.max(jnp.abs(out - ref)))
    assert jnp.allclose(out, ref, rtol=2e-4, atol=2e-4), f"max abs err {max_err}"
    print("KERNEL_OK")
</pallas_src>

<mosaic_0001>
module attributes {stable_mosaic.version = 11 : i64} {
  func.func @_pre_work_kernel(%arg0: i32, %arg1: i32, %arg2: memref<1x196x768xf32, #tpu.memory_space<vmem>>, %arg3: memref<768x768xf32, #tpu.memory_space<vmem>>, %arg4: memref<197x768xf32, #tpu.memory_space<vmem>>, %arg5: memref<1x197x768xf32, #tpu.memory_space<vmem>>) attributes {dimension_semantics = [#tpu.dimension_semantics<parallel>, #tpu.dimension_semantics<parallel>], iteration_bounds = array<i64: 2, 1>, scalar_prefetch = 0 : i64, scratch_operands = 0 : i64, tpu.core_type = #tpu.core_type<tc>, window_params = [{transform_indices = @transform_0, window_bounds = array<i64: 1, 196, 768>}, {transform_indices = @transform_1, window_bounds = array<i64: 768, 768>}, {transform_indices = @transform_2, window_bounds = array<i64: 197, 768>}, {transform_indices = @transform_3, window_bounds = array<i64: 1, 197, 768>}]} {
    %c0 = arith.constant 0 : index
    %c0_0 = arith.constant 0 : index
    %0 = vector.load %arg3[%c0, %c0_0] : memref<768x768xf32, #tpu.memory_space<vmem>>, vector<768x768xf32>
    %c0_1 = arith.constant 0 : index
    %c0_2 = arith.constant 0 : index
    %1 = vector.load %arg4[%c0_1, %c0_2] : memref<197x768xf32, #tpu.memory_space<vmem>>, vector<196x768xf32>
    %c196 = arith.constant 196 : index
    %c0_3 = arith.constant 0 : index
    %2 = vector.load %arg4[%c196, %c0_3] : memref<197x768xf32, #tpu.memory_space<vmem>>, vector<1x768xf32>
    %c0_4 = arith.constant 0 : index
    %c0_5 = arith.constant 0 : index
    %c0_6 = arith.constant 0 : index
    %3 = vector.load %arg2[%c0_4, %c0_5, %c0_6] : memref<1x196x768xf32, #tpu.memory_space<vmem>>, vector<1x196x768xf32>
    %4 = vector.shape_cast %3 : vector<1x196x768xf32> to vector<196x768xf32>
    %cst = arith.constant dense<0.000000e+00> : vector<196x768xf32>
    %5 = tpu.matmul %4, %0, %cst {dimension_numbers = #tpu.dot_dimension_numbers<[1], [0], [0], [1], [0, 0, 1, 1], [], []>} : vector<196x768xf32>, vector<768x768xf32>, vector<196x768xf32> -> vector<196x768xf32>
    %6 = arith.addf %5, %1 : vector<196x768xf32>
    %c0_7 = arith.constant 0 : index
    %c0_8 = arith.constant 0 : index
    %c0_9 = arith.constant 0 : index
    %7 = vector.load %arg5[%c0_7, %c0_8, %c0_9] : memref<1x197x768xf32, #tpu.memory_space<vmem>>, vector<1x196x768xf32>
    %8 = vector.shape_cast %7 : vector<1x196x768xf32> to vector<196x768xf32>
    %9 = vector.shape_cast %6 : vector<196x768xf32> to vector<1x196x768xf32>
    tpu.vector_store %arg5[%c0_7, %c0_8, %c0_9], %9 {strides = array<i32>} : memref<1x197x768xf32, #tpu.memory_space<vmem>>, vector<1x196x768xf32>,
    %c0_10 = arith.constant 0 : index
    %c196_11 = arith.constant 196 : index
    %c0_12 = arith.constant 0 : index
    %10 = vector.load %arg5[%c0_10, %c196_11, %c0_12] : memref<1x197x768xf32, #tpu.memory_space<vmem>>, vector<1x1x768xf32>
    %11 = vector.shape_cast %10 : vector<1x1x768xf32> to vector<1x768xf32>
    %12 = vector.shape_cast %2 : vector<1x768xf32> to vector<1x1x768xf32>
    tpu.vector_store %arg5[%c0_10, %c196_11, %c0_12], %12 {strides = array<i32>} : memref<1x197x768xf32, #tpu.memory_space<vmem>>, vector<1x1x768xf32>,
    return
  }
  func.func @transform_0(%arg0: i32, %arg1: i32) -> (i32, i32, i32) {
    %c0_i32 = arith.constant 0 : i32
    %c0_i32_0 = arith.constant 0 : i32
    %c0_i32_1 = arith.constant 0 : i32
    return %arg0, %c0_i32, %c0_i32_0 : i32, i32, i32
  }
  func.func @transform_1(%arg0: i32, %arg1: i32) -> (i32, i32) {
    %c0_i32 = arith.constant 0 : i32
    %c0_i32_0 = arith.constant 0 : i32
    return %c0_i32, %arg1 : i32, i32
  }
  func.func @transform_2(%arg0: i32, %arg1: i32) -> (i32, i32) {
    %c0_i32 = arith.constant 0 : i32
    %c0_i32_0 = arith.constant 0 : i32
    return %c0_i32, %arg1 : i32, i32
  }
  func.func @transform_3(%arg0: i32, %arg1: i32) -> (i32, i32, i32) {
    %c0_i32 = arith.constant 0 : i32
    %c0_i32_0 = arith.constant 0 : i32
    return %arg0, %c0_i32, %arg1 : i32, i32, i32
  }
}

</mosaic_0001>

<llo_original>
// kernel: pre_work_forward.1
$region0: #{pre_work_forward.1}
  #allocation0 [shape = 'u32[]', space=smem, size = 0x4, offset = 0x4, fixed_abs, tag = 'smem constant byte address 0x4 - core index']
  #allocation1 [shape = 'u32[144,128]{1,0:T(1,128)}', space=vmem, size = 0x12000, scoped, tag = 'internal scratch']
  %s0 = inlined_call_operand.vmem [shape: f32[2,196,768], index: 0, kind: input, shape index: {}]
  %s1 = inlined_call_operand.vmem [shape: f32[768,768], index: 1, kind: input, shape index: {}]
  %s2 = inlined_call_operand.vmem [shape: f32[197,768], index: 2, kind: input, shape index: {}]
  %s3 = inlined_call_operand.vmem [shape: f32[2,197,768], index: 3, kind: output, shape index: {}]
  %s4 = sld [smem:[#allocation0]]
  $region45: #{pre_work_forward.1} parent=0
    _
  %s6 = ssub.s32 1, %s4
  %s7 = scalar_select 0, %s6, %s4
  loop: start=0, step=1, limit=4
  $region2: #{pre_work_forward.1} parent=0 // loop_pre_header
    _
  $region3: #{pre_work_forward.1} parent=0 // loop_header
    %s9 = sphi 0, %s13
    %p10 = scmp.ge.s32.totalorder %s9, 4
    %s16 = sphi 0, %s28
    %s17 = sphi 0, %s24
    %s18 = sphi 0, %s16
    %s19 = sphi 0, %s17
    %s20 = sphi 0, %s18
    %s21 = sphi 0, %s19
    %s31 = sphi 0, %s33
    %s34 = sphi 0, %s31
    %s35 = sphi 0, %s34
    %s51 = sphi 0, %s35
    %s57 = sphi 0, %s59
    %s60 = sphi 0, %s57
    %s61 = sphi 0, %s60
    %s77 = sphi 0, %s61
    %s83 = sphi 0, %s85
    %s86 = sphi 0, %s83
    %s87 = sphi 0, %s86
    %s103 = sphi 0, %s87
    %s111 = sphi 0, %s113
    %s114 = sphi 0, %s111
    %s115 = sphi 0, %s114
    %s131 = sphi 0, %s115
  $region4: #{pre_work_forward.1} parent=0 // loop_header_branch
    %12 = sbr.rel (%p10) target = $region8
  $region5: #{pre_work_forward.1} parent=0 // loop_body
    %s14 = ssub.s32 %s9, 1
    %s15 = ssub.s32 %s9, 2
    %s22 = sadd.s32 1, %s17
    %p23 = scmp.ge.s32.totalorder %s22, 1
    %s24 = scalar_select %p23, 0, %s22
    %s25 = sadd.s32 1, %s16
    %s26 = scalar_select %p23, %s25, %s16
    %p27 = scmp.ge.s32.totalorder %s26, 2
    %s28 = scalar_select %p27, 0, %s26
    %s29 = ssub.s32 %s16, %s28
    %p30 = scmp.eq.s32.totalorder %s29, 0
    %s32 = sadd.s32 %s31, 1
    %s33 = scalar_select %p30, %s31, %s32
    %p36 = pneg %p30
    %p37 = scmp.eq.s32.totalorder %s9, 1
    %p38 = por %p36, %p37
    %p39 = scmp.ne.s32.totalorder %s31, %s34
    %p40 = scmp.eq.s32.totalorder %s9, 0
    %p41 = por %p39, %p40
    %p42 = scmp.ne.s32.totalorder %s31, %s34
    %p43 = scmp.eq.s32.totalorder %s14, 1
    %p44 = por %p42, %p43
    %p45 = scmp.ne.s32.totalorder %s34, %s35
    %p46 = scmp.eq.s32.totalorder %s14, 0
    %p47 = por %p45, %p46
    %p48 = scmp.ne.s32.totalorder %s34, %s35
    %p49 = scmp.eq.s32.totalorder %s15, 1
    %p50 = por %p48, %p49
    %p52 = scmp.ne.s32.totalorder %s35, %s51
    %p53 = scmp.eq.s32.totalorder %s15, 0
    %p54 = por %p52, %p53
    %s55 = ssub.s32 %s17, %s24
    %p56 = scmp.eq.s32.totalorder %s55, 0
    %s58 = sadd.s32 %s57, 1
    %s59 = scalar_select %p56, %s57, %s58
    %p62 = pneg %p56
    %p63 = scmp.eq.s32.totalorder %s9, 1
    %p64 = por %p62, %p63
    %p65 = scmp.ne.s32.totalorder %s57, %s60
    %p66 = scmp.eq.s32.totalorder %s9, 0
    %p67 = por %p65, %p66
    %p68 = scmp.ne.s32.totalorder %s57, %s60
    %p69 = scmp.eq.s32.totalorder %s14, 1
    %p70 = por %p68, %p69
    %p71 = scmp.ne.s32.totalorder %s60, %s61
    %p72 = scmp.eq.s32.totalorder %s14, 0
    %p73 = por %p71, %p72
    %p74 = scmp.ne.s32.totalorder %s60, %s61
    %p75 = scmp.eq.s32.totalorder %s15, 1
    %p76 = por %p74, %p75
    %p78 = scmp.ne.s32.totalorder %s61, %s77
    %p79 = scmp.eq.s32.totalorder %s15, 0
    %p80 = por %p78, %p79
    %s81 = ssub.s32 %s17, %s24
    %p82 = scmp.eq.s32.totalorder %s81, 0
    %s84 = sadd.s32 %s83, 1
    %s85 = scalar_select %p82, %s83, %s84
    %p88 = pneg %p82
    %p89 = scmp.eq.s32.totalorder %s9, 1
    %p90 = por %p88, %p89
    %p91 = scmp.ne.s32.totalorder %s83, %s86
    %p92 = scmp.eq.s32.totalorder %s9, 0
    %p93 = por %p91, %p92
    %p94 = scmp.ne.s32.totalorder %s83, %s86
    %p95 = scmp.eq.s32.totalorder %s14, 1
    %p96 = por %p94, %p95
    %p97 = scmp.ne.s32.totalorder %s86, %s87
    %p98 = scmp.eq.s32.totalorder %s14, 0
    %p99 = por %p97, %p98
    %p100 = scmp.ne.s32.totalorder %s86, %s87
    %p101 = scmp.eq.s32.totalorder %s15, 1
    %p102 = por %p100, %p101
    %p104 = scmp.ne.s32.totalorder %s87, %s103
    %p105 = scmp.eq.s32.totalorder %s15, 0
    %p106 = por %p104, %p105
    %s107 = ssub.s32 %s16, %s28
    %s108 = ssub.s32 %s17, %s24
    %s109 = sor.u32 %s107, %s108
    %p110 = scmp.eq.s32.totalorder %s109, 0
    %s112 = sadd.s32 %s111, 1
    %s113 = scalar_select %p110, %s111, %s112
    %p116 = pneg %p110
    %p117 = scmp.eq.s32.totalorder %s9, 1
    %p118 = por %p116, %p117
    %p119 = scmp.ne.s32.totalorder %s111, %s114
    %p120 = scmp.eq.s32.totalorder %s9, 0
    %p121 = por %p119, %p120
    %p122 = scmp.ne.s32.totalorder %s111, %s114
    %p123 = scmp.eq.s32.totalorder %s14, 1
    %p124 = por %p122, %p123
    %p125 = scmp.ne.s32.totalorder %s114, %s115
    %p126 = scmp.eq.s32.totalorder %s14, 0
    %p127 = por %p125, %p126
    %p128 = scmp.ne.s32.totalorder %s114, %s115
    %p129 = scmp.eq.s32.totalorder %s15, 1
    %p130 = por %p128, %p129
    %p132 = scmp.ne.s32.totalorder %s115, %s131
    %p133 = scmp.eq.s32.totalorder %s15, 0
    %p134 = por %p132, %p133
    %p135 = scmp.le.s32.totalorder 1, %s9
    %p136 = scmp.lt.s32.totalorder %s9, 3
    %p137 = pnand %p135, %p136
    %p138 = pneg %p137
    // Predicated region
    $region9: #{pre_work_forward.1} parent=5 // pred_check
      _
    $region10: #{pre_work_forward.1} parent=5 // pred_check_branch
      %140 = sbr.rel (%p137) target = $region12
    $region11: #{pre_work_forward.1} parent=5 // pred_region
      %s141 = ssub.s32 %s9, 1
      // Predicated region
      $region13: #{pre_work_forward.1} parent=11 // pred_check
        %p142 = pneg %p73
      $region14: #{pre_work_forward.1} parent=11 // pred_check_branch
        %144 = sbr.rel (%p142) target = $region16
      $region15: #{pre_work_forward.1} parent=11 // pred_region
        %s145 = smul.u32 6, %s19
        %p146 = scmp.lt.s32.totalorder %s145, 5
        %s147 = scalar_select %p146, %s145, 5
        %s148 = smul.addr %s147, 8
        %s149 = scalar_lea.vmem %s1, %s148
        %s150 = smul.u32 6, %s19
      $region16: #{pre_work_forward.1} parent=11 // pred_fallthru
        _
      // Predicated region
      $region17: #{pre_work_forward.1} parent=11 // pred_check
        %p151 = pneg %p99
      $region18: #{pre_work_forward.1} parent=11 // pred_check_branch
        %153 = sbr.rel (%p151) target = $region20
      $region19: #{pre_work_forward.1} parent=11 // pred_region
        %s154 = smul.u32 6, %s19
        %p155 = scmp.lt.s32.totalorder %s154, 5
        %s156 = scalar_select %p155, %s154, 5
        %s157 = smul.addr %s156, 8
        %s158 = scalar_lea.vmem %s2, %s157
        %s159 = smul.u32 6, %s19
      $region20: #{pre_work_forward.1} parent=11 // pred_fallthru
        _
    $region12: #{pre_work_forward.1} parent=5 // pred_fallthru
      _
    %p160 = scmp.lt.s32.totalorder %s9, 2
    // Predicated region
    $region21: #{pre_work_forward.1} parent=5 // pred_check
      %p161 = pneg %p160
    $region22: #{pre_work_forward.1} parent=5 // pred_check_branch
      %163 = sbr.rel (%p161) target = $region24
    $region23: #{pre_work_forward.1} parent=5 // pred_region
      // Predicated region
      $region25: #{pre_work_forward.1} parent=23 // pred_check
        %p164 = pneg %p41
      $region26: #{pre_work_forward.1} parent=23 // pred_check_branch
        %166 = sbr.rel (%p164) target = $region28
      $region27: #{pre_work_forward.1} parent=23 // pred_region
        %p167 = scmp.lt.s32.totalorder %s16, 1
        %s168 = scalar_select %p167, %s16, 1
        %s169 = smul.addr %s168, 150
        %s170 = smul.addr %s169, 8
        %s171 = scalar_lea.vmem %s0, %s170
      $region28: #{pre_work_forward.1} parent=23 // pred_fallthru
        _
    $region24: #{pre_work_forward.1} parent=5 // pred_fallthru
      _
    %p172 = scmp.le.s32.totalorder 1, %s9
    %p173 = scmp.lt.s32.totalorder %s9, 3
    %p174 = pnand %p172, %p173
    %p175 = pneg %p174
    // Predicated region
    $region29: #{pre_work_forward.1} parent=5 // pred_check
      _
    $region30: #{pre_work_forward.1} parent=5 // pred_check_branch
      %177 = sbr.rel (%p174) target = $region32
    $region31: #{pre_work_forward.1} parent=5 // pred_region
      %s178 = ssub.s32 %s9, 1
      %p179 = scmp.lt.s32.totalorder %s18, 1
      %s180 = scalar_select %p179, %s18, 1
      %s181 = smul.addr %s180, 150
      %s182 = smul.addr %s181, 8
      %s183 = scalar_lea.vmem %s0, %s182
      %p184 = pneg %p47
      %p185 = pneg %p44
      %s186 = smul.u32 6, %s19
      %p187 = scmp.lt.s32.totalorder %s186, 5
      %s188 = scalar_select %p187, %s186, 5
      %s189 = smul.addr %s188, 8
      %s190 = scalar_lea.vmem %s1, %s189
      %p191 = pneg %p73
      %p192 = pneg %p70
      %s193 = smul.u32 6, %s19
      %p194 = scmp.lt.s32.totalorder %s193, 5
      %s195 = scalar_select %p194, %s193, 5
      %s196 = smul.addr %s195, 8
      %s197 = scalar_lea.vmem %s2, %s196
      %p198 = pneg %p99
      %p199 = pneg %p96
      %p200 = pneg %p127
      %p201 = pneg %p124
      %s202 = smul.u32 6, %s19
      %p203 = scmp.lt.s32.totalorder %s18, 1
      %s204 = scalar_select %p203, %s18, 1
      %p205 = scmp.lt.s32.totalorder %s202, 5
      %s206 = scalar_select %p205, %s202, 5
      %s207 = smul.addr %s204, 150
      %s208 = sadd.s32 %s206, %s207
      %s209 = smul.addr %s208, 8
      %s210 = scalar_lea.vmem %s3, %s209
      %p211 = scmp.lt.s32.totalorder %s18, 1
      %s212 = scalar_select %p211, %s18, 1
      %s213 = smul.addr %s212, 150
      %s214 = smul.addr %s213, 8
      %s215 = scalar_lea.vmem %s0, %s214
      %s216 = smul.u32 6, %s19
      %p217 = scmp.lt.s32.totalorder %s216, 5
      %s218 = scalar_select %p217, %s216, 5
      %s219 = smul.addr %s218, 8
      %s220 = scalar_lea.vmem %s1, %s219
      %s221 = smul.u32 6, %s19
      %s222 = smul.u32 6, %s19
      %p223 = scmp.lt.s32.totalorder %s222, 5
      %s224 = scalar_select %p223, %s222, 5
      %s225 = smul.addr %s224, 8
      %s226 = scalar_lea.vmem %s2, %s225
      %s227 = smul.u32 6, %s19
      %s228 = smul.u32 6, %s19
      %p229 = scmp.lt.s32.totalorder %s18, 1
      %s230 = scalar_select %p229, %s18, 1
      %p231 = scmp.lt.s32.totalorder %s228, 5
      %s232 = scalar_select %p231, %s228, 5
      %s233 = smul.addr %s230, 150
      %s234 = sadd.s32 %s232, %s233
      %s235 = smul.addr %s234, 8
      %s236 = scalar_lea.vmem %s3, %s235
      %s237 = smul.u32 6, %s19
      %v238 = vld [vmem:[%s220] sm:$0xff]
      %v239 = vld [vmem:[%s220 + $0x8] sm:$0xff]
      %v240 = vld [vmem:[%s220 + $0x10] sm:$0xff]
      %v241 = vld [vmem:[%s220 + $0x18] sm:$0xff]
      %v242 = vld [vmem:[%s220 + $0x20] sm:$0xff]
      %v243 = vld [vmem:[%s220 + $0x28] sm:$0xff]
      %v244 = vld [vmem:[%s220 + $0x30] sm:$0xff]
      %v245 = vld [vmem:[%s220 + $0x38] sm:$0xff]
      %v246 = vld [vmem:[%s220 + $0x40] sm:$0xff]
      %v247 = vld [vmem:[%s220 + $0x48] sm:$0xff]
      %v248 = vld [vmem:[%s220 + $0x50] sm:$0xff]
      %v249 = vld [vmem:[%s220 + $0x58] sm:$0xff]
      %v250 = vld [vmem:[%s220 + $0x60] sm:$0xff]
      %v251 = vld [vmem:[%s220 + $0x68] sm:$0xff]
      %v252 = vld [vmem:[%s220 + $0x70] sm:$0xff]
      %v253 = vld [vmem:[%s220 + $0x78] sm:$0xff]
      %v254 = vld [vmem:[%s220 + $0x80] sm:$0xff]
      %v255 = vld [vmem:[%s220 + $0x88] sm:$0xff]
      %v256 = vld [vmem:[%s220 + $0x90] sm:$0xff]
      %v257 = vld [vmem:[%s220 + $0x98] sm:$0xff]
      %v258 = vld [vmem:[%s220 + $0xa0] sm:$0xff]
      %v259 = vld [vmem:[%s220 + $0xa8] sm:$0xff]
      %v260 = vld [vmem:[%s220 + $0xb0] sm:$0xff]
      %v261 = vld [vmem:[%s220 + $0xb8] sm:$0xff]
      %v262 = vld [vmem:[%s220 + $0xc0] sm:$0xff]
      %v263 = vld [vmem:[%s220 + $0xc8] sm:$0xff]
      %v264 = vld [vmem:[%s220 + $0xd0] sm:$0xff]
      %v265 = vld [vmem:[%s220 + $0xd8] sm:$0xff]
      %v266 = vld [vmem:[%s220 + $0xe0] sm:$0xff]
      %v267 = vld [vmem:[%s220 + $0xe8] sm:$0xff]
      %v268 = vld [vmem:[%s220 + $0xf0] sm:$0xff]
      %v269 = vld [vmem:[%s220 + $0xf8] sm:$0xff]
      %v270 = vld [vmem:[%s220 + $0x100] sm:$0xff]
      %v271 = vld [vmem:[%s220 + $0x108] sm:$0xff]
      %v272 = vld [vmem:[%s220 + $0x110] sm:$0xff]
      %v273 = vld [vmem:[%s220 + $0x118] sm:$0xff]
      %v274 = vld [vmem:[%s220 + $0x120] sm:$0xff]
      %v275 = vld [vmem:[%s220 + $0x128] sm:$0xff]
      %v276 = vld [vmem:[%s220 + $0x130] sm:$0xff]
      %v277 = vld [vmem:[%s220 + $0x138] sm:$0xff]
      %v278 = vld [vmem:[%s220 + $0x140] sm:$0xff]
      %v279 = vld [vmem:[%s220 + $0x148] sm:$0xff]
      %v280 = vld [vmem:[%s220 + $0x150] sm:$0xff]
      %v281 = vld [vmem:[%s220 + $0x158] sm:$0xff]
      %v282 = vld [vmem:[%s220 + $0x160] sm:$0xff]
      %v283 = vld [vmem:[%s220 + $0x168] sm:$0xff]
      %v284 = vld [vmem:[%s220 + $0x170] sm:$0xff]
      %v285 = vld [vmem:[%s220 + $0x178] sm:$0xff]
      %v286 = vld [vmem:[%s220 + $0x180] sm:$0xff]
      %v287 = vld [vmem:[%s220 + $0x188] sm:$0xff]
      %v288 = vld [vmem:[%s220 + $0x190] sm:$0xff]
      %v289 = vld [vmem:[%s220 + $0x198] sm:$0xff]
      %v290 = vld [vmem:[%s220 + $0x1a0] sm:$0xff]
      %v291 = vld [vmem:[%s220 + $0x1a8] sm:$0xff]
      %v292 = vld [vmem:[%s220 + $0x1b0] sm:$0xff]
      %v293 = vld [vmem:[%s220 + $0x1b8] sm:$0xff]
      %v294 = vld [vmem:[%s220 + $0x1c0] sm:$0xff]
      %v295 = vld [vmem:[%s220 + $0x1c8] sm:$0xff]
      %v296 = vld [vmem:[%s220 + $0x1d0] sm:$0xff]
      %v297 = vld [vmem:[%s220 + $0x1d8] sm:$0xff]
      %v298 = vld [vmem:[%s220 + $0x1e0] sm:$0xff]
      %v299 = vld [vmem:[%s220 + $0x1e8] sm:$0xff]
      %v300 = vld [vmem:[%s220 + $0x1f0] sm:$0xff]
      %v301 = vld [vmem:[%s220 + $0x1f8] sm:$0xff]
      %v302 = vld [vmem:[%s220 + $0x200] sm:$0xff]
      %v303 = vld [vmem:[%s220 + $0x208] sm:$0xff]
      %v304 = vld [vmem:[%s220 + $0x210] sm:$0xff]
      %v305 = vld [vmem:[%s220 + $0x218] sm:$0xff]
      %v306 = vld [vmem:[%s220 + $0x220] sm:$0xff]
      %v307 = vld [vmem:[%s220 + $0x228] sm:$0xff]
      %v308 = vld [vmem:[%s220 + $0x230] sm:$0xff]
      %v309 = vld [vmem:[%s220 + $0x238] sm:$0xff]
      %v310 = vld [vmem:[%s220 + $0x240] sm:$0xff]
      %v311 = vld [vmem:[%s220 + $0x248] sm:$0xff]
      %v312 = vld [vmem:[%s220 + $0x250] sm:$0xff]
      %v313 = vld [vmem:[%s220 + $0x258] sm:$0xff]
      %v314 = vld [vmem:[%s220 + $0x260] sm:$0xff]
      %v315 = vld [vmem:[%s220 + $0x268] sm:$0xff]
      %v316 = vld [vmem:[%s220 + $0x270] sm:$0xff]
      %v317 = vld [vmem:[%s220 + $0x278] sm:$0xff]
      %v318 = vld [vmem:[%s220 + $0x280] sm:$0xff]
      %v319 = vld [vmem:[%s220 + $0x288] sm:$0xff]
      %v320 = vld [vmem:[%s220 + $0x290] sm:$0xff]
      %v321 = vld [vmem:[%s220 + $0x298] sm:$0xff]
      %v322 = vld [vmem:[%s220 + $0x2a0] sm:$0xff]
      %v323 = vld [vmem:[%s220 + $0x2a8] sm:$0xff]
      %v324 = vld [vmem:[%s220 + $0x2b0] sm:$0xff]
      %v325 = vld [vmem:[%s220 + $0x2b8] sm:$0xff]
      %v326 = vld [vmem:[%s220 + $0x2c0] sm:$0xff]
      %v327 = vld [vmem:[%s220 + $0x2c8] sm:$0xff]
      %v328 = vld [vmem:[%s220 + $0x2d0] sm:$0xff]
      %v329 = vld [vmem:[%s220 + $0x2d8] sm:$0xff]
      %v330 = vld [vmem:[%s220 + $0x2e0] sm:$0xff]
      %v331 = vld [vmem:[%s220 + $0x2e8] sm:$0xff]
      %v332 = vld [vmem:[%s220 + $0x2f0] sm:$0xff]
      %v333 = vld [vmem:[%s220 + $0x2f8] sm:$0xff]
      %v334 = vld [vmem:[%s220 + $0x300] sm:$0xff]
      %v335 = vld [vmem:[%s220 + $0x308] sm:$0xff]
      %v336 = vld [vmem:[%s220 + $0x310] sm:$0xff]
      %v337 = vld [vmem:[%s220 + $0x318] sm:$0xff]
      %v338 = vld [vmem:[%s220 + $0x320] sm:$0xff]
      %v339 = vld [vmem:[%s220 + $0x328] sm:$0xff]
      %v340 = vld [vmem:[%s220 + $0x330] sm:$0xff]
      %v341 = vld [vmem:[%s220 + $0x338] sm:$0xff]
      %v342 = vld [vmem:[%s220 + $0x340] sm:$0xff]
      %v343 = vld [vmem:[%s220 + $0x348] sm:$0xff]
      %v344 = vld [vmem:[%s220 + $0x350] sm:$0xff]
      %v345 = vld [vmem:[%s220 + $0x358] sm:$0xff]
      %v346 = vld [vmem:[%s220 + $0x360] sm:$0xff]
      %v347 = vld [vmem:[%s220 + $0x368] sm:$0xff]
      %v348 = vld [vmem:[%s220 + $0x370] sm:$0xff]
      %v349 = vld [vmem:[%s220 + $0x378] sm:$0xff]
      %v350 = vld [vmem:[%s220 + $0x380] sm:$0xff]
      %v351 = vld [vmem:[%s220 + $0x388] sm:$0xff]
      %v352 = vld [vmem:[%s220 + $0x390] sm:$0xff]
      %v353 = vld [vmem:[%s220 + $0x398] sm:$0xff]
      %v354 = vld [vmem:[%s220 + $0x3a0] sm:$0xff]
      %v355 = vld [vmem:[%s220 + $0x3a8] sm:$0xff]
      %v356 = vld [vmem:[%s220 + $0x3b0] sm:$0xff]
      %v357 = vld [vmem:[%s220 + $0x3b8] sm:$0xff]
      %v358 = vld [vmem:[%s220 + $0x3c0] sm:$0xff]
      %v359 = vld [vmem:[%s220 + $0x3c8] sm:$0xff]
      %v360 = vld [vmem:[%s220 + $0x3d0] sm:$0xff]
      %v361 = vld [vmem:[%s220 + $0x3d8] sm:$0xff]
      %v362 = vld [vmem:[%s220 + $0x3e0] sm:$0xff]
      %v363 = vld [vmem:[%s220 + $0x3e8] sm:$0xff]
      %v364 = vld [vmem:[%s220 + $0x3f0] sm:$0xff]
      %v365 = vld [vmem:[%s220 + $0x3f8] sm:$0xff]
      %v366 = vld [vmem:[%s220 + $0x400] sm:$0xff]
      %v367 = vld [vmem:[%s220 + $0x408] sm:$0xff]
      %v368 = vld [vmem:[%s220 + $0x410] sm:$0xff]
      %v369 = vld [vmem:[%s220 + $0x418] sm:$0xff]
      %v370 = vld [vmem:[%s220 + $0x420] sm:$0xff]
      %v371 = vld [vmem:[%s220 + $0x428] sm:$0xff]
      %v372 = vld [vmem:[%s220 + $0x430] sm:$0xff]
      %v373 = vld [vmem:[%s220 + $0x438] sm:$0xff]
      %v374 = vld [vmem:[%s220 + $0x440] sm:$0xff]
      %v375 = vld [vmem:[%s220 + $0x448] sm:$0xff]
      %v376 = vld [vmem:[%s220 + $0x450] sm:$0xff]
      %v377 = vld [vmem:[%s220 + $0x458] sm:$0xff]
      %v378 = vld [vmem:[%s220 + $0x460] sm:$0xff]
      %v379 = vld [vmem:[%s220 + $0x468] sm:$0xff]
      %v380 = vld [vmem:[%s220 + $0x470] sm:$0xff]
      %v381 = vld [vmem:[%s220 + $0x478] sm:$0xff]
      %v382 = vld [vmem:[%s220 + $0x480] sm:$0xff]
      %v383 = vld [vmem:[%s220 + $0x488] sm:$0xff]
      %v384 = vld [vmem:[%s220 + $0x490] sm:$0xff]
      %v385 = vld [vmem:[%s220 + $0x498] sm:$0xff]
      %v386 = vld [vmem:[%s220 + $0x4a0] sm:$0xff]
      %v387 = vld [vmem:[%s220 + $0x4a8] sm:$0xff]
      %v388 = vld [vmem:[%s220 + $0x4b0] sm:$0xff]
      %v389 = vld [vmem:[%s220 + $0x4b8] sm:$0xff]
      %v390 = vld [vmem:[%s220 + $0x4c0] sm:$0xff]
      %v391 = vld [vmem:[%s220 + $0x4c8] sm:$0xff]
      %v392 = vld [vmem:[%s220 + $0x4d0] sm:$0xff]
      %v393 = vld [vmem:[%s220 + $0x4d8] sm:$0xff]
      %v394 = vld [vmem:[%s220 + $0x4e0] sm:$0xff]
      %v395 = vld [vmem:[%s220 + $0x4e8] sm:$0xff]
      %v396 = vld [vmem:[%s220 + $0x4f0] sm:$0xff]
      %v397 = vld [vmem:[%s220 + $0x4f8] sm:$0xff]
      %v398 = vld [vmem:[%s220 + $0x500] sm:$0xff]
      %v399 = vld [vmem:[%s220 + $0x508] sm:$0xff]
      %v400 = vld [vmem:[%s220 + $0x510] sm:$0xff]
      %v401 = vld [vmem:[%s220 + $0x518] sm:$0xff]
      %v402 = vld [vmem:[%s220 + $0x520] sm:$0xff]
      %v403 = vld [vmem:[%s220 + $0x528] sm:$0xff]
      %v404 = vld [vmem:[%s220 + $0x530] sm:$0xff]
      %v405 = vld [vmem:[%s220 + $0x538] sm:$0xff]
      %v406 = vld [vmem:[%s220 + $0x540] sm:$0xff]
      %v407 = vld [vmem:[%s220 + $0x548] sm:$0xff]
      %v408 = vld [vmem:[%s220 + $0x550] sm:$0xff]
      %v409 = vld [vmem:[%s220 + $0x558] sm:$0xff]
      %v410 = vld [vmem:[%s220 + $0x560] sm:$0xff]
      %v411 = vld [vmem:[%s220 + $0x568] sm:$0xff]
      %v412 = vld [vmem:[%s220 + $0x570] sm:$0xff]
      %v413 = vld [vmem:[%s220 + $0x578] sm:$0xff]
      %v414 = vld [vmem:[%s220 + $0x580] sm:$0xff]
      %v415 = vld [vmem:[%s220 + $0x588] sm:$0xff]
      %v416 = vld [vmem:[%s220 + $0x590] sm:$0xff]
      %v417 = vld [vmem:[%s220 + $0x598] sm:$0xff]
      %v418 = vld [vmem:[%s220 + $0x5a0] sm:$0xff]
      %v419 = vld [vmem:[%s220 + $0x5a8] sm:$0xff]
      %v420 = vld [vmem:[%s220 + $0x5b0] sm:$0xff]
      %v421 = vld [vmem:[%s220 + $0x5b8] sm:$0xff]
      %v422 = vld [vmem:[%s220 + $0x5c0] sm:$0xff]
      %v423 = vld [vmem:[%s220 + $0x5c8] sm:$0xff]
      %v424 = vld [vmem:[%s220 + $0x5d0] sm:$0xff]
      %v425 = vld [vmem:[%s220 + $0x5d8] sm:$0xff]
      %v426 = vld [vmem:[%s220 + $0x5e0] sm:$0xff]
      %v427 = vld [vmem:[%s220 + $0x5e8] sm:$0xff]
      %v428 = vld [vmem:[%s220 + $0x5f0] sm:$0xff]
      %v429 = vld [vmem:[%s220 + $0x5f8] sm:$0xff]
      %v430 = vld [vmem:[%s220 + $0x600] sm:$0xff]
      %v431 = vld [vmem:[%s220 + $0x608] sm:$0xff]
      %v432 = vld [vmem:[%s220 + $0x610] sm:$0xff]
      %v433 = vld [vmem:[%s220 + $0x618] sm:$0xff]
      %v434 = vld [vmem:[%s220 + $0x620] sm:$0xff]
      %v435 = vld [vmem:[%s220 + $0x628] sm:$0xff]
      %v436 = vld [vmem:[%s220 + $0x630] sm:$0xff]
      %v437 = vld [vmem:[%s220 + $0x638] sm:$0xff]
      %v438 = vld [vmem:[%s220 + $0x640] sm:$0xff]
      %v439 = vld [vmem:[%s220 + $0x648] sm:$0xff]
      %v440 = vld [vmem:[%s220 + $0x650] sm:$0xff]
      %v441 = vld [vmem:[%s220 + $0x658] sm:$0xff]
      %v442 = vld [vmem:[%s220 + $0x660] sm:$0xff]
      %v443 = vld [vmem:[%s220 + $0x668] sm:$0xff]
      %v444 = vld [vmem:[%s220 + $0x670] sm:$0xff]
      %v445 = vld [vmem:[%s220 + $0x678] sm:$0xff]
      %v446 = vld [vmem:[%s220 + $0x680] sm:$0xff]
      %v447 = vld [vmem:[%s220 + $0x688] sm:$0xff]
      %v448 = vld [vmem:[%s220 + $0x690] sm:$0xff]
      %v449 = vld [vmem:[%s220 + $0x698] sm:$0xff]
      %v450 = vld [vmem:[%s220 + $0x6a0] sm:$0xff]
      %v451 = vld [vmem:[%s220 + $0x6a8] sm:$0xff]
      %v452 = vld [vmem:[%s220 + $0x6b0] sm:$0xff]
      %v453 = vld [vmem:[%s220 + $0x6b8] sm:$0xff]
      %v454 = vld [vmem:[%s220 + $0x6c0] sm:$0xff]
      %v455 = vld [vmem:[%s220 + $0x6c8] sm:$0xff]
      %v456 = vld [vmem:[%s220 + $0x6d0] sm:$0xff]
      %v457 = vld [vmem:[%s220 + $0x6d8] sm:$0xff]
      %v458 = vld [vmem:[%s220 + $0x6e0] sm:$0xff]
      %v459 = vld [vmem:[%s220 + $0x6e8] sm:$0xff]
      %v460 = vld [vmem:[%s220 + $0x6f0] sm:$0xff]
      %v461 = vld [vmem:[%s220 + $0x6f8] sm:$0xff]
      %v462 = vld [vmem:[%s220 + $0x700] sm:$0xff]
      %v463 = vld [vmem:[%s220 + $0x708] sm:$0xff]
      %v464 = vld [vmem:[%s220 + $0x710] sm:$0xff]
      %v465 = vld [vmem:[%s220 + $0x718] sm:$0xff]
      %v466 = vld [vmem:[%s220 + $0x720] sm:$0xff]
      %v467 = vld [vmem:[%s220 + $0x728] sm:$0xff]
      %v468 = vld [vmem:[%s220 + $0x730] sm:$0xff]
      %v469 = vld [vmem:[%s220 + $0x738] sm:$0xff]
      %v470 = vld [vmem:[%s220 + $0x740] sm:$0xff]
      %v471 = vld [vmem:[%s220 + $0x748] sm:$0xff]
      %v472 = vld [vmem:[%s220 + $0x750] sm:$0xff]
      %v473 = vld [vmem:[%s220 + $0x758] sm:$0xff]
      %v474 = vld [vmem:[%s220 + $0x760] sm:$0xff]
      %v475 = vld [vmem:[%s220 + $0x768] sm:$0xff]
      %v476 = vld [vmem:[%s220 + $0x770] sm:$0xff]
      %v477 = vld [vmem:[%s220 + $0x778] sm:$0xff]
      %v478 = vld [vmem:[%s220 + $0x780] sm:$0xff]
      %v479 = vld [vmem:[%s220 + $0x788] sm:$0xff]
      %v480 = vld [vmem:[%s220 + $0x790] sm:$0xff]
      %v481 = vld [vmem:[%s220 + $0x798] sm:$0xff]
      %v482 = vld [vmem:[%s220 + $0x7a0] sm:$0xff]
      %v483 = vld [vmem:[%s220 + $0x7a8] sm:$0xff]
      %v484 = vld [vmem:[%s220 + $0x7b0] sm:$0xff]
      %v485 = vld [vmem:[%s220 + $0x7b8] sm:$0xff]
      %v486 = vld [vmem:[%s220 + $0x7c0] sm:$0xff]
      %v487 = vld [vmem:[%s220 + $0x7c8] sm:$0xff]
      %v488 = vld [vmem:[%s220 + $0x7d0] sm:$0xff]
      %v489 = vld [vmem:[%s220 + $0x7d8] sm:$0xff]
      %v490 = vld [vmem:[%s220 + $0x7e0] sm:$0xff]
      %v491 = vld [vmem:[%s220 + $0x7e8] sm:$0xff]
      %v492 = vld [vmem:[%s220 + $0x7f0] sm:$0xff]
      %v493 = vld [vmem:[%s220 + $0x7f8] sm:$0xff]
      %v494 = vld [vmem:[%s220 + $0x800] sm:$0xff]
      %v495 = vld [vmem:[%s220 + $0x808] sm:$0xff]
      %v496 = vld [vmem:[%s220 + $0x810] sm:$0xff]
      %v497 = vld [vmem:[%s220 + $0x818] sm:$0xff]
      %v498 = vld [vmem:[%s220 + $0x820] sm:$0xff]
      %v499 = vld [vmem:[%s220 + $0x828] sm:$0xff]
      %v500 = vld [vmem:[%s220 + $0x830] sm:$0xff]
      %v501 = vld [vmem:[%s220 + $0x838] sm:$0xff]
      %v502 = vld [vmem:[%s220 + $0x840] sm:$0xff]
      %v503 = vld [vmem:[%s220 + $0x848] sm:$0xff]
      %v504 = vld [vmem:[%s220 + $0x850] sm:$0xff]
      %v505 = vld [vmem:[%s220 + $0x858] sm:$0xff]
      %v506 = vld [vmem:[%s220 + $0x860] sm:$0xff]
      %v507 = vld [vmem:[%s220 + $0x868] sm:$0xff]
      %v508 = vld [vmem:[%s220 + $0x870] sm:$0xff]
      %v509 = vld [vmem:[%s220 + $0x878] sm:$0xff]
      %v510 = vld [vmem:[%s220 + $0x880] sm:$0xff]
      %v511 = vld [vmem:[%s220 + $0x888] sm:$0xff]
      %v512 = vld [vmem:[%s220 + $0x890] sm:$0xff]
      %v513 = vld [vmem:[%s220 + $0x898] sm:$0xff]
      %v514 = vld [vmem:[%s220 + $0x8a0] sm:$0xff]
      %v515 = vld [vmem:[%s220 + $0x8a8] sm:$0xff]
      %v516 = vld [vmem:[%s220 + $0x8b0] sm:$0xff]
      %v517 = vld [vmem:[%s220 + $0x8b8] sm:$0xff]
      %v518 = vld [vmem:[%s220 + $0x8c0] sm:$0xff]
      %v519 = vld [vmem:[%s220 + $0x8c8] sm:$0xff]
      %v520 = vld [vmem:[%s220 + $0x8d0] sm:$0xff]
      %v521 = vld [vmem:[%s220 + $0x8d8] sm:$0xff]
      %v522 = vld [vmem:[%s220 + $0x8e0] sm:$0xff]
      %v523 = vld [vmem:[%s220 + $0x8e8] sm:$0xff]
      %v524 = vld [vmem:[%s220 + $0x8f0] sm:$0xff]
      %v525 = vld [vmem:[%s220 + $0x8f8] sm:$0xff]
      %v526 = vld [vmem:[%s220 + $0x900] sm:$0xff]
      %v527 = vld [vmem:[%s220 + $0x908] sm:$0xff]
      %v528 = vld [vmem:[%s220 + $0x910] sm:$0xff]
      %v529 = vld [vmem:[%s220 + $0x918] sm:$0xff]
      %v530 = vld [vmem:[%s220 + $0x920] sm:$0xff]
      %v531 = vld [vmem:[%s220 + $0x928] sm:$0xff]
      %v532 = vld [vmem:[%s220 + $0x930] sm:$0xff]
      %v533 = vld [vmem:[%s220 + $0x938] sm:$0xff]
      %v534 = vld [vmem:[%s220 + $0x940] sm:$0xff]
      %v535 = vld [vmem:[%s220 + $0x948] sm:$0xff]
      %v536 = vld [vmem:[%s220 + $0x950] sm:$0xff]
      %v537 = vld [vmem:[%s220 + $0x958] sm:$0xff]
      %v538 = vld [vmem:[%s220 + $0x960] sm:$0xff]
      %v539 = vld [vmem:[%s220 + $0x968] sm:$0xff]
      %v540 = vld [vmem:[%s220 + $0x970] sm:$0xff]
      %v541 = vld [vmem:[%s220 + $0x978] sm:$0xff]
      %v542 = vld [vmem:[%s220 + $0x980] sm:$0xff]
      %v543 = vld [vmem:[%s220 + $0x988] sm:$0xff]
      %v544 = vld [vmem:[%s220 + $0x990] sm:$0xff]
      %v545 = vld [vmem:[%s220 + $0x998] sm:$0xff]
      %v546 = vld [vmem:[%s220 + $0x9a0] sm:$0xff]
      %v547 = vld [vmem:[%s220 + $0x9a8] sm:$0xff]
      %v548 = vld [vmem:[%s220 + $0x9b0] sm:$0xff]
      %v549 = vld [vmem:[%s220 + $0x9b8] sm:$0xff]
      %v550 = vld [vmem:[%s220 + $0x9c0] sm:$0xff]
      %v551 = vld [vmem:[%s220 + $0x9c8] sm:$0xff]
      %v552 = vld [vmem:[%s220 + $0x9d0] sm:$0xff]
      %v553 = vld [vmem:[%s220 + $0x9d8] sm:$0xff]
      %v554 = vld [vmem:[%s220 + $0x9e0] sm:$0xff]
      %v555 = vld [vmem:[%s220 + $0x9e8] sm:$0xff]
      %v556 = vld [vmem:[%s220 + $0x9f0] sm:$0xff]
      %v557 = vld [vmem:[%s220 + $0x9f8] sm:$0xff]
      %v558 = vld [vmem:[%s220 + $0xa00] sm:$0xff]
      %v559 = vld [vmem:[%s220 + $0xa08] sm:$0xff]
      %v560 = vld [vmem:[%s220 + $0xa10] sm:$0xff]
      %v561 = vld [vmem:[%s220 + $0xa18] sm:$0xff]
      %v562 = vld [vmem:[%s220 + $0xa20] sm:$0xff]
      %v563 = vld [vmem:[%s220 + $0xa28] sm:$0xff]
      %v564 = vld [vmem:[%s220 + $0xa30] sm:$0xff]
      %v565 = vld [vmem:[%s220 + $0xa38] sm:$0xff]
      %v566 = vld [vmem:[%s220 + $0xa40] sm:$0xff]
      %v567 = vld [vmem:[%s220 + $0xa48] sm:$0xff]
      %v568 = vld [vmem:[%s220 + $0xa50] sm:$0xff]
      %v569 = vld [vmem:[%s220 + $0xa58] sm:$0xff]
      %v570 = vld [vmem:[%s220 + $0xa60] sm:$0xff]
      %v571 = vld [vmem:[%s220 + $0xa68] sm:$0xff]
      %v572 = vld [vmem:[%s220 + $0xa70] sm:$0xff]
      %v573 = vld [vmem:[%s220 + $0xa78] sm:$0xff]
      %v574 = vld [vmem:[%s220 + $0xa80] sm:$0xff]
      %v575 = vld [vmem:[%s220 + $0xa88] sm:$0xff]
      %v576 = vld [vmem:[%s220 + $0xa90] sm:$0xff]
      %v577 = vld [vmem:[%s220 + $0xa98] sm:$0xff]
      %v578 = vld [vmem:[%s220 + $0xaa0] sm:$0xff]
      %v579 = vld [vmem:[%s220 + $0xaa8] sm:$0xff]
      %v580 = vld [vmem:[%s220 + $0xab0] sm:$0xff]
      %v581 = vld [vmem:[%s220 + $0xab8] sm:$0xff]
      %v582 = vld [vmem:[%s220 + $0xac0] sm:$0xff]
      %v583 = vld [vmem:[%s220 + $0xac8] sm:$0xff]
      %v584 = vld [vmem:[%s220 + $0xad0] sm:$0xff]
      %v585 = vld [vmem:[%s220 + $0xad8] sm:$0xff]
      %v586 = vld [vmem:[%s220 + $0xae0] sm:$0xff]
      %v587 = vld [vmem:[%s220 + $0xae8] sm:$0xff]
      %v588 = vld [vmem:[%s220 + $0xaf0] sm:$0xff]
      %v589 = vld [vmem:[%s220 + $0xaf8] sm:$0xff]
      %v590 = vld [vmem:[%s220 + $0xb00] sm:$0xff]
      %v591 = vld [vmem:[%s220 + $0xb08] sm:$0xff]
      %v592 = vld [vmem:[%s220 + $0xb10] sm:$0xff]
      %v593 = vld [vmem:[%s220 + $0xb18] sm:$0xff]
      %v594 = vld [vmem:[%s220 + $0xb20] sm:$0xff]
      %v595 = vld [vmem:[%s220 + $0xb28] sm:$0xff]
      %v596 = vld [vmem:[%s220 + $0xb30] sm:$0xff]
      %v597 = vld [vmem:[%s220 + $0xb38] sm:$0xff]
      %v598 = vld [vmem:[%s220 + $0xb40] sm:$0xff]
      %v599 = vld [vmem:[%s220 + $0xb48] sm:$0xff]
      %v600 = vld [vmem:[%s220 + $0xb50] sm:$0xff]
      %v601 = vld [vmem:[%s220 + $0xb58] sm:$0xff]
      %v602 = vld [vmem:[%s220 + $0xb60] sm:$0xff]
      %v603 = vld [vmem:[%s220 + $0xb68] sm:$0xff]
      %v604 = vld [vmem:[%s220 + $0xb70] sm:$0xff]
      %v605 = vld [vmem:[%s220 + $0xb78] sm:$0xff]
      %v606 = vld [vmem:[%s220 + $0xb80] sm:$0xff]
      %v607 = vld [vmem:[%s220 + $0xb88] sm:$0xff]
      %v608 = vld [vmem:[%s220 + $0xb90] sm:$0xff]
      %v609 = vld [vmem:[%s220 + $0xb98] sm:$0xff]
      %v610 = vld [vmem:[%s220 + $0xba0] sm:$0xff]
      %v611 = vld [vmem:[%s220 + $0xba8] sm:$0xff]
      %v612 = vld [vmem:[%s220 + $0xbb0] sm:$0xff]
      %v613 = vld [vmem:[%s220 + $0xbb8] sm:$0xff]
      %v614 = vld [vmem:[%s220 + $0xbc0] sm:$0xff]
      %v615 = vld [vmem:[%s220 + $0xbc8] sm:$0xff]
      %v616 = vld [vmem:[%s220 + $0xbd0] sm:$0xff]
      %v617 = vld [vmem:[%s220 + $0xbd8] sm:$0xff]
      %v618 = vld [vmem:[%s220 + $0xbe0] sm:$0xff]
      %v619 = vld [vmem:[%s220 + $0xbe8] sm:$0xff]
      %v620 = vld [vmem:[%s220 + $0xbf0] sm:$0xff]
      %v621 = vld [vmem:[%s220 + $0xbf8] sm:$0xff]
      %v622 = vld [vmem:[%s220 + $0xc00] sm:$0xff]
      %v623 = vld [vmem:[%s220 + $0xc08] sm:$0xff]
      %v624 = vld [vmem:[%s220 + $0xc10] sm:$0xff]
      %v625 = vld [vmem:[%s220 + $0xc18] sm:$0xff]
      %v626 = vld [vmem:[%s220 + $0xc20] sm:$0xff]
      %v627 = vld [vmem:[%s220 + $0xc28] sm:$0xff]
      %v628 = vld [vmem:[%s220 + $0xc30] sm:$0xff]
      %v629 = vld [vmem:[%s220 + $0xc38] sm:$0xff]
      %v630 = vld [vmem:[%s220 + $0xc40] sm:$0xff]
      %v631 = vld [vmem:[%s220 + $0xc48] sm:$0xff]
      %v632 = vld [vmem:[%s220 + $0xc50] sm:$0xff]
      %v633 = vld [vmem:[%s220 + $0xc58] sm:$0xff]
      %v634 = vld [vmem:[%s220 + $0xc60] sm:$0xff]
      %v635 = vld [vmem:[%s220 + $0xc68] sm:$0xff]
      %v636 = vld [vmem:[%s220 + $0xc70] sm:$0xff]
      %v637 = vld [vmem:[%s220 + $0xc78] sm:$0xff]
      %v638 = vld [vmem:[%s220 + $0xc80] sm:$0xff]
      %v639 = vld [vmem:[%s220 + $0xc88] sm:$0xff]
      %v640 = vld [vmem:[%s220 + $0xc90] sm:$0xff]
      %v641 = vld [vmem:[%s220 + $0xc98] sm:$0xff]
      %v642 = vld [vmem:[%s220 + $0xca0] sm:$0xff]
      %v643 = vld [vmem:[%s220 + $0xca8] sm:$0xff]
      %v644 = vld [vmem:[%s220 + $0xcb0] sm:$0xff]
      %v645 = vld [vmem:[%s220 + $0xcb8] sm:$0xff]
      %v646 = vld [vmem:[%s220 + $0xcc0] sm:$0xff]
      %v647 = vld [vmem:[%s220 + $0xcc8] sm:$0xff]
      %v648 = vld [vmem:[%s220 + $0xcd0] sm:$0xff]
      %v649 = vld [vmem:[%s220 + $0xcd8] sm:$0xff]
      %v650 = vld [vmem:[%s220 + $0xce0] sm:$0xff]
      %v651 = vld [vmem:[%s220 + $0xce8] sm:$0xff]
      %v652 = vld [vmem:[%s220 + $0xcf0] sm:$0xff]
      %v653 = vld [vmem:[%s220 + $0xcf8] sm:$0xff]
      %v654 = vld [vmem:[%s220 + $0xd00] sm:$0xff]
      %v655 = vld [vmem:[%s220 + $0xd08] sm:$0xff]
      %v656 = vld [vmem:[%s220 + $0xd10] sm:$0xff]
      %v657 = vld [vmem:[%s220 + $0xd18] sm:$0xff]
      %v658 = vld [vmem:[%s220 + $0xd20] sm:$0xff]
      %v659 = vld [vmem:[%s220 + $0xd28] sm:$0xff]
      %v660 = vld [vmem:[%s220 + $0xd30] sm:$0xff]
      %v661 = vld [vmem:[%s220 + $0xd38] sm:$0xff]
      %v662 = vld [vmem:[%s220 + $0xd40] sm:$0xff]
      %v663 = vld [vmem:[%s220 + $0xd48] sm:$0xff]
      %v664 = vld [vmem:[%s220 + $0xd50] sm:$0xff]
      %v665 = vld [vmem:[%s220 + $0xd58] sm:$0xff]
      %v666 = vld [vmem:[%s220 + $0xd60] sm:$0xff]
      %v667 = vld [vmem:[%s220 + $0xd68] sm:$0xff]
      %v668 = vld [vmem:[%s220 + $0xd70] sm:$0xff]
      %v669 = vld [vmem:[%s220 + $0xd78] sm:$0xff]
      %v670 = vld [vmem:[%s220 + $0xd80] sm:$0xff]
      %v671 = vld [vmem:[%s220 + $0xd88] sm:$0xff]
      %v672 = vld [vmem:[%s220 + $0xd90] sm:$0xff]
      %v673 = vld [vmem:[%s220 + $0xd98] sm:$0xff]
      %v674 = vld [vmem:[%s220 + $0xda0] sm:$0xff]
      %v675 = vld [vmem:[%s220 + $0xda8] sm:$0xff]
      %v676 = vld [vmem:[%s220 + $0xdb0] sm:$0xff]
      %v677 = vld [vmem:[%s220 + $0xdb8] sm:$0xff]
      %v678 = vld [vmem:[%s220 + $0xdc0] sm:$0xff]
      %v679 = vld [vmem:[%s220 + $0xdc8] sm:$0xff]
      %v680 = vld [vmem:[%s220 + $0xdd0] sm:$0xff]
      %v681 = vld [vmem:[%s220 + $0xdd8] sm:$0xff]
      %v682 = vld [vmem:[%s220 + $0xde0] sm:$0xff]
      %v683 = vld [vmem:[%s220 + $0xde8] sm:$0xff]
      %v684 = vld [vmem:[%s220 + $0xdf0] sm:$0xff]
      %v685 = vld [vmem:[%s220 + $0xdf8] sm:$0xff]
      %v686 = vld [vmem:[%s220 + $0xe00] sm:$0xff]
      %v687 = vld [vmem:[%s220 + $0xe08] sm:$0xff]
      %v688 = vld [vmem:[%s220 + $0xe10] sm:$0xff]
      %v689 = vld [vmem:[%s220 + $0xe18] sm:$0xff]
      %v690 = vld [vmem:[%s220 + $0xe20] sm:$0xff]
      %v691 = vld [vmem:[%s220 + $0xe28] sm:$0xff]
      %v692 = vld [vmem:[%s220 + $0xe30] sm:$0xff]
      %v693 = vld [vmem:[%s220 + $0xe38] sm:$0xff]
      %v694 = vld [vmem:[%s220 + $0xe40] sm:$0xff]
      %v695 = vld [vmem:[%s220 + $0xe48] sm:$0xff]
      %v696 = vld [vmem:[%s220 + $0xe50] sm:$0xff]
      %v697 = vld [vmem:[%s220 + $0xe58] sm:$0xff]
      %v698 = vld [vmem:[%s220 + $0xe60] sm:$0xff]
      %v699 = vld [vmem:[%s220 + $0xe68] sm:$0xff]
      %v700 = vld [vmem:[%s220 + $0xe70] sm:$0xff]
      %v701 = vld [vmem:[%s220 + $0xe78] sm:$0xff]
      %v702 = vld [vmem:[%s220 + $0xe80] sm:$0xff]
      %v703 = vld [vmem:[%s220 + $0xe88] sm:$0xff]
      %v704 = vld [vmem:[%s220 + $0xe90] sm:$0xff]
      %v705 = vld [vmem:[%s220 + $0xe98] sm:$0xff]
      %v706 = vld [vmem:[%s220 + $0xea0] sm:$0xff]
      %v707 = vld [vmem:[%s220 + $0xea8] sm:$0xff]
      %v708 = vld [vmem:[%s220 + $0xeb0] sm:$0xff]
      %v709 = vld [vmem:[%s220 + $0xeb8] sm:$0xff]
      %v710 = vld [vmem:[%s220 + $0xec0] sm:$0xff]
      %v711 = vld [vmem:[%s220 + $0xec8] sm:$0xff]
      %v712 = vld [vmem:[%s220 + $0xed0] sm:$0xff]
      %v713 = vld [vmem:[%s220 + $0xed8] sm:$0xff]
      %v714 = vld [vmem:[%s220 + $0xee0] sm:$0xff]
      %v715 = vld [vmem:[%s220 + $0xee8] sm:$0xff]
      %v716 = vld [vmem:[%s220 + $0xef0] sm:$0xff]
      %v717 = vld [vmem:[%s220 + $0xef8] sm:$0xff]
      %v718 = vld [vmem:[%s220 + $0xf00] sm:$0xff]
      %v719 = vld [vmem:[%s220 + $0xf08] sm:$0xff]
      %v720 = vld [vmem:[%s220 + $0xf10] sm:$0xff]
      %v721 = vld [vmem:[%s220 + $0xf18] sm:$0xff]
      %v722 = vld [vmem:[%s220 + $0xf20] sm:$0xff]
      %v723 = vld [vmem:[%s220 + $0xf28] sm:$0xff]
      %v724 = vld [vmem:[%s220 + $0xf30] sm:$0xff]
      %v725 = vld [vmem:[%s220 + $0xf38] sm:$0xff]
      %v726 = vld [vmem:[%s220 + $0xf40] sm:$0xff]
      %v727 = vld [vmem:[%s220 + $0xf48] sm:$0xff]
      %v728 = vld [vmem:[%s220 + $0xf50] sm:$0xff]
      %v729 = vld [vmem:[%s220 + $0xf58] sm:$0xff]
      %v730 = vld [vmem:[%s220 + $0xf60] sm:$0xff]
      %v731 = vld [vmem:[%s220 + $0xf68] sm:$0xff]
      %v732 = vld [vmem:[%s220 + $0xf70] sm:$0xff]
      %v733 = vld [vmem:[%s220 + $0xf78] sm:$0xff]
      %v734 = vld [vmem:[%s220 + $0xf80] sm:$0xff]
      %v735 = vld [vmem:[%s220 + $0xf88] sm:$0xff]
      %v736 = vld [vmem:[%s220 + $0xf90] sm:$0xff]
      %v737 = vld [vmem:[%s220 + $0xf98] sm:$0xff]
      %v738 = vld [vmem:[%s220 + $0xfa0] sm:$0xff]
      %v739 = vld [vmem:[%s220 + $0xfa8] sm:$0xff]
      %v740 = vld [vmem:[%s220 + $0xfb0] sm:$0xff]
      %v741 = vld [vmem:[%s220 + $0xfb8] sm:$0xff]
      %v742 = vld [vmem:[%s220 + $0xfc0] sm:$0xff]
      %v743 = vld [vmem:[%s220 + $0xfc8] sm:$0xff]
      %v744 = vld [vmem:[%s220 + $0xfd0] sm:$0xff]
      %v745 = vld [vmem:[%s220 + $0xfd8] sm:$0xff]
      %v746 = vld [vmem:[%s220 + $0xfe0] sm:$0xff]
      %v747 = vld [vmem:[%s220 + $0xfe8] sm:$0xff]
      %v748 = vld [vmem:[%s220 + $0xff0] sm:$0xff]
      %v749 = vld [vmem:[%s220 + $0xff8] sm:$0xff]
      %v750 = vld [vmem:[%s220 + $0x1000] sm:$0xff]
      %v751 = vld [vmem:[%s220 + $0x1008] sm:$0xff]
      %v752 = vld [vmem:[%s220 + $0x1010] sm:$0xff]
      %v753 = vld [vmem:[%s220 + $0x1018] sm:$0xff]
      %v754 = vld [vmem:[%s220 + $0x1020] sm:$0xff]
      %v755 = vld [vmem:[%s220 + $0x1028] sm:$0xff]
      %v756 = vld [vmem:[%s220 + $0x1030] sm:$0xff]
      %v757 = vld [vmem:[%s220 + $0x1038] sm:$0xff]
      %v758 = vld [vmem:[%s220 + $0x1040] sm:$0xff]
      %v759 = vld [vmem:[%s220 + $0x1048] sm:$0xff]
      %v760 = vld [vmem:[%s220 + $0x1050] sm:$0xff]
      %v761 = vld [vmem:[%s220 + $0x1058] sm:$0xff]
      %v762 = vld [vmem:[%s220 + $0x1060] sm:$0xff]
      %v763 = vld [vmem:[%s220 + $0x1068] sm:$0xff]
      %v764 = vld [vmem:[%s220 + $0x1070] sm:$0xff]
      %v765 = vld [vmem:[%s220 + $0x1078] sm:$0xff]
      %v766 = vld [vmem:[%s220 + $0x1080] sm:$0xff]
      %v767 = vld [vmem:[%s220 + $0x1088] sm:$0xff]
      %v768 = vld [vmem:[%s220 + $0x1090] sm:$0xff]
      %v769 = vld [vmem:[%s220 + $0x1098] sm:$0xff]
      %v770 = vld [vmem:[%s220 + $0x10a0] sm:$0xff]
      %v771 = vld [vmem:[%s220 + $0x10a8] sm:$0xff]
      %v772 = vld [vmem:[%s220 + $0x10b0] sm:$0xff]
      %v773 = vld [vmem:[%s220 + $0x10b8] sm:$0xff]
      %v774 = vld [vmem:[%s220 + $0x10c0] sm:$0xff]
      %v775 = vld [vmem:[%s220 + $0x10c8] sm:$0xff]
      %v776 = vld [vmem:[%s220 + $0x10d0] sm:$0xff]
      %v777 = vld [vmem:[%s220 + $0x10d8] sm:$0xff]
      %v778 = vld [vmem:[%s220 + $0x10e0] sm:$0xff]
      %v779 = vld [vmem:[%s220 + $0x10e8] sm:$0xff]
      %v780 = vld [vmem:[%s220 + $0x10f0] sm:$0xff]
      %v781 = vld [vmem:[%s220 + $0x10f8] sm:$0xff]
      %v782 = vld [vmem:[%s220 + $0x1100] sm:$0xff]
      %v783 = vld [vmem:[%s220 + $0x1108] sm:$0xff]
      %v784 = vld [vmem:[%s220 + $0x1110] sm:$0xff]
      %v785 = vld [vmem:[%s220 + $0x1118] sm:$0xff]
      %v786 = vld [vmem:[%s220 + $0x1120] sm:$0xff]
      %v787 = vld [vmem:[%s220 + $0x1128] sm:$0xff]
      %v788 = vld [vmem:[%s220 + $0x1130] sm:$0xff]
      %v789 = vld [vmem:[%s220 + $0x1138] sm:$0xff]
      %v790 = vld [vmem:[%s220 + $0x1140] sm:$0xff]
      %v791 = vld [vmem:[%s220 + $0x1148] sm:$0xff]
      %v792 = vld [vmem:[%s220 + $0x1150] sm:$0xff]
      %v793 = vld [vmem:[%s220 + $0x1158] sm:$0xff]
      %v794 = vld [vmem:[%s220 + $0x1160] sm:$0xff]
      %v795 = vld [vmem:[%s220 + $0x1168] sm:$0xff]
      %v796 = vld [vmem:[%s220 + $0x1170] sm:$0xff]
      %v797 = vld [vmem:[%s220 + $0x1178] sm:$0xff]
      %v798 = vld [vmem:[%s220 + $0x1180] sm:$0xff]
      %v799 = vld [vmem:[%s220 + $0x1188] sm:$0xff]
      %v800 = vld [vmem:[%s220 + $0x1190] sm:$0xff]
      %v801 = vld [vmem:[%s220 + $0x1198] sm:$0xff]
      %v802 = vld [vmem:[%s220 + $0x11a0] sm:$0xff]
      %v803 = vld [vmem:[%s220 + $0x11a8] sm:$0xff]
      %v804 = vld [vmem:[%s220 + $0x11b0] sm:$0xff]
      %v805 = vld [vmem:[%s220 + $0x11b8] sm:$0xff]
      %v806 = vld [vmem:[%s220 + $0x11c0] sm:$0xff]
      %v807 = vld [vmem:[%s220 + $0x11c8] sm:$0xff]
      %v808 = vld [vmem:[%s220 + $0x11d0] sm:$0xff]
      %v809 = vld [vmem:[%s220 + $0x11d8] sm:$0xff]
      %v810 = vld [vmem:[%s220 + $0x11e0] sm:$0xff]
      %v811 = vld [vmem:[%s220 + $0x11e8] sm:$0xff]
      %v812 = vld [vmem:[%s220 + $0x11f0] sm:$0xff]
      %v813 = vld [vmem:[%s220 + $0x11f8] sm:$0xff]
      %v814 = vld [vmem:[%s226] sm:$0xff]
      %v815 = vld [vmem:[%s226 + $0x8] sm:$0xff]
      %v816 = vld [vmem:[%s226 + $0x10] sm:$0xff]
      %v817 = vld [vmem:[%s226 + $0x18] sm:$0xff]
      %v818 = vld [vmem:[%s226 + $0x20] sm:$0xff]
      %v819 = vld [vmem:[%s226 + $0x28] sm:$0xff]
      %v820 = vld [vmem:[%s226 + $0x30] sm:$0xff]
      %v821 = vld [vmem:[%s226 + $0x38] sm:$0xff]
      %v822 = vld [vmem:[%s226 + $0x40] sm:$0xff]
      %v823 = vld [vmem:[%s226 + $0x48] sm:$0xff]
      %v824 = vld [vmem:[%s226 + $0x50] sm:$0xff]
      %v825 = vld [vmem:[%s226 + $0x58] sm:$0xff]
      %v826 = vld [vmem:[%s226 + $0x60] sm:$0xff]
      %v827 = vld [vmem:[%s226 + $0x68] sm:$0xff]
      %v828 = vld [vmem:[%s226 + $0x70] sm:$0xff]
      %v829 = vld [vmem:[%s226 + $0x78] sm:$0xff]
      %v830 = vld [vmem:[%s226 + $0x80] sm:$0xff]
      %v831 = vld [vmem:[%s226 + $0x88] sm:$0xff]
      %v832 = vld [vmem:[%s226 + $0x90] sm:$0xff]
      %v833 = vld [vmem:[%s226 + $0x98] sm:$0xff]
      %v834 = vld [vmem:[%s226 + $0xa0] sm:$0xff]
      %v835 = vld [vmem:[%s226 + $0xa8] sm:$0xff]
      %v836 = vld [vmem:[%s226 + $0xb0] sm:$0xff]
      %v837 = vld [vmem:[%s226 + $0xb8] sm:$0xff]
      %v838 = vld [vmem:[%s226 + $0xc0] sm:$0xff]
      %v839 = vld [vmem:[%s226 + $0xc8] sm:$0xff]
      %v840 = vld [vmem:[%s226 + $0xd0] sm:$0xff]
      %v841 = vld [vmem:[%s226 + $0xd8] sm:$0xff]
      %v842 = vld [vmem:[%s226 + $0xe0] sm:$0xff]
      %v843 = vld [vmem:[%s226 + $0xe8] sm:$0xff]
      %v844 = vld [vmem:[%s226 + $0xf0] sm:$0xff]
      %v845 = vld [vmem:[%s226 + $0xf8] sm:$0xff]
      %v846 = vld [vmem:[%s226 + $0x100] sm:$0xff]
      %v847 = vld [vmem:[%s226 + $0x108] sm:$0xff]
      %v848 = vld [vmem:[%s226 + $0x110] sm:$0xff]
      %v849 = vld [vmem:[%s226 + $0x118] sm:$0xff]
      %v850 = vld [vmem:[%s226 + $0x120] sm:$0xff]
      %v851 = vld [vmem:[%s226 + $0x128] sm:$0xff]
      %v852 = vld [vmem:[%s226 + $0x130] sm:$0xff]
      %v853 = vld [vmem:[%s226 + $0x138] sm:$0xff]
      %v854 = vld [vmem:[%s226 + $0x140] sm:$0xff]
      %v855 = vld [vmem:[%s226 + $0x148] sm:$0xff]
      %v856 = vld [vmem:[%s226 + $0x150] sm:$0xff]
      %v857 = vld [vmem:[%s226 + $0x158] sm:$0xff]
      %v858 = vld [vmem:[%s226 + $0x160] sm:$0xff]
      %v859 = vld [vmem:[%s226 + $0x168] sm:$0xff]
      %v860 = vld [vmem:[%s226 + $0x170] sm:$0xff]
      %v861 = vld [vmem:[%s226 + $0x178] sm:$0xff]
      %v862 = vld [vmem:[%s226 + $0x180] sm:$0xff]
      %v863 = vld [vmem:[%s226 + $0x188] sm:$0xff]
      %v864 = vld [vmem:[%s226 + $0x190] sm:$0xff]
      %v865 = vld [vmem:[%s226 + $0x198] sm:$0xff]
      %v866 = vld [vmem:[%s226 + $0x1a0] sm:$0xff]
      %v867 = vld [vmem:[%s226 + $0x1a8] sm:$0xff]
      %v868 = vld [vmem:[%s226 + $0x1b0] sm:$0xff]
      %v869 = vld [vmem:[%s226 + $0x1b8] sm:$0xff]
      %v870 = vld [vmem:[%s226 + $0x1c0] sm:$0xff]
      %v871 = vld [vmem:[%s226 + $0x1c8] sm:$0xff]
      %v872 = vld [vmem:[%s226 + $0x1d0] sm:$0xff]
      %v873 = vld [vmem:[%s226 + $0x1d8] sm:$0xff]
      %v874 = vld [vmem:[%s226 + $0x1e0] sm:$0xff]
      %v875 = vld [vmem:[%s226 + $0x1e8] sm:$0xff]
      %v876 = vld [vmem:[%s226 + $0x1f0] sm:$0xff]
      %v877 = vld [vmem:[%s226 + $0x1f8] sm:$0xff]
      %v878 = vld [vmem:[%s226 + $0x200] sm:$0xff]
      %v879 = vld [vmem:[%s226 + $0x208] sm:$0xff]
      %v880 = vld [vmem:[%s226 + $0x210] sm:$0xff]
      %v881 = vld [vmem:[%s226 + $0x218] sm:$0xff]
      %v882 = vld [vmem:[%s226 + $0x220] sm:$0xff]
      %v883 = vld [vmem:[%s226 + $0x228] sm:$0xff]
      %v884 = vld [vmem:[%s226 + $0x230] sm:$0xff]
      %v885 = vld [vmem:[%s226 + $0x238] sm:$0xff]
      %v886 = vld [vmem:[%s226 + $0x240] sm:$0xff]
      %v887 = vld [vmem:[%s226 + $0x248] sm:$0xff]
      %v888 = vld [vmem:[%s226 + $0x250] sm:$0xff]
      %v889 = vld [vmem:[%s226 + $0x258] sm:$0xff]
      %v890 = vld [vmem:[%s226 + $0x260] sm:$0xff]
      %v891 = vld [vmem:[%s226 + $0x268] sm:$0xff]
      %v892 = vld [vmem:[%s226 + $0x270] sm:$0xff]
      %v893 = vld [vmem:[%s226 + $0x278] sm:$0xff]
      %v894 = vld [vmem:[%s226 + $0x280] sm:$0xff]
      %v895 = vld [vmem:[%s226 + $0x288] sm:$0xff]
      %v896 = vld [vmem:[%s226 + $0x290] sm:$0xff]
      %v897 = vld [vmem:[%s226 + $0x298] sm:$0xff]
      %v898 = vld [vmem:[%s226 + $0x2a0] sm:$0xff]
      %v899 = vld [vmem:[%s226 + $0x2a8] sm:$0xff]
      %v900 = vld [vmem:[%s226 + $0x2b0] sm:$0xff]
      %v901 = vld [vmem:[%s226 + $0x2b8] sm:$0xff]
      %v902 = vld [vmem:[%s226 + $0x2c0] sm:$0xff]
      %v903 = vld [vmem:[%s226 + $0x2c8] sm:$0xff]
      %v904 = vld [vmem:[%s226 + $0x2d0] sm:$0xff]
      %v905 = vld [vmem:[%s226 + $0x2d8] sm:$0xff]
      %v906 = vld [vmem:[%s226 + $0x2e0] sm:$0xff]
      %v907 = vld [vmem:[%s226 + $0x2e8] sm:$0xff]
      %v908 = vld [vmem:[%s226 + $0x2f0] sm:$0xff]
      %v909 = vld [vmem:[%s226 + $0x2f8] sm:$0xff]
      %v910 = vld [vmem:[%s226 + $0x300] sm:$0xff]
      %v911 = vld [vmem:[%s226 + $0x308] sm:$0xff]
      %v912 = vld [vmem:[%s226 + $0x310] sm:$0xff]
      %v913 = vld [vmem:[%s226 + $0x318] sm:$0xff]
      %v914 = vld [vmem:[%s226 + $0x320] sm:$0xff]
      %v915 = vld [vmem:[%s226 + $0x328] sm:$0xff]
      %v916 = vld [vmem:[%s226 + $0x330] sm:$0xff]
      %v917 = vld [vmem:[%s226 + $0x338] sm:$0xff]
      %v918 = vld [vmem:[%s226 + $0x340] sm:$0xff]
      %v919 = vld [vmem:[%s226 + $0x348] sm:$0xff]
      %v920 = vld [vmem:[%s226 + $0x350] sm:$0xff]
      %v921 = vld [vmem:[%s226 + $0x358] sm:$0xff]
      %v922 = vld [vmem:[%s226 + $0x360] sm:$0xff]
      %v923 = vld [vmem:[%s226 + $0x368] sm:$0xff]
      %v924 = vld [vmem:[%s226 + $0x370] sm:$0xff]
      %v925 = vld [vmem:[%s226 + $0x378] sm:$0xff]
      %v926 = vld [vmem:[%s226 + $0x380] sm:$0xff]
      %v927 = vld [vmem:[%s226 + $0x388] sm:$0xff]
      %v928 = vld [vmem:[%s226 + $0x390] sm:$0xff]
      %v929 = vld [vmem:[%s226 + $0x398] sm:$0xff]
      %v930 = vld [vmem:[%s226 + $0x3a0] sm:$0xff]
      %v931 = vld [vmem:[%s226 + $0x3a8] sm:$0xff]
      %v932 = vld [vmem:[%s226 + $0x3b0] sm:$0xff]
      %v933 = vld [vmem:[%s226 + $0x3b8] sm:$0xff]
      %v934 = vld [vmem:[%s226 + $0x3c0] sm:$0xff]
      %v935 = vld [vmem:[%s226 + $0x3c8] sm:$0xff]
      %v936 = vld [vmem:[%s226 + $0x3d0] sm:$0xff]
      %v937 = vld [vmem:[%s226 + $0x3d8] sm:$0xff]
      %v938 = vld [vmem:[%s226 + $0x3e0] sm:$0xff]
      %v939 = vld [vmem:[%s226 + $0x3e8] sm:$0xff]
      %v940 = vld [vmem:[%s226 + $0x3f0] sm:$0xff]
      %v941 = vld [vmem:[%s226 + $0x3f8] sm:$0xff]
      %v942 = vld [vmem:[%s226 + $0x400] sm:$0xff]
      %v943 = vld [vmem:[%s226 + $0x408] sm:$0xff]
      %v944 = vld [vmem:[%s226 + $0x410] sm:$0xff]
      %v945 = vld [vmem:[%s226 + $0x418] sm:$0xff]
      %v946 = vld [vmem:[%s226 + $0x420] sm:$0xff]
      %v947 = vld [vmem:[%s226 + $0x428] sm:$0xff]
      %v948 = vld [vmem:[%s226 + $0x430] sm:$0xff]
      %v949 = vld [vmem:[%s226 + $0x438] sm:$0xff]
      %v950 = vld [vmem:[%s226 + $0x440] sm:$0xff]
      %v951 = vld [vmem:[%s226 + $0x448] sm:$0xff]
      %v952 = vld [vmem:[%s226 + $0x450] sm:$0xff]
      %v953 = vld [vmem:[%s226 + $0x458] sm:$0xff]
      %v954 = vld [vmem:[%s226 + $0x460] sm:$0xff]
      %v955 = vld [vmem:[%s226 + $0x468] sm:$0xff]
      %v956 = vld [vmem:[%s226 + $0x470] sm:$0xff]
      %v957 = vld [vmem:[%s226 + $0x478] sm:$0xff]
      %v958 = vld [vmem:[%s226 + $0x480] sm:$0xf]
      %v959 = vld [vmem:[%s226 + $0x488] sm:$0xf]
      %v960 = vld [vmem:[%s226 + $0x490] sm:$0xf]
      %v961 = vld [vmem:[%s226 + $0x498] sm:$0xf]
      %v962 = vld [vmem:[%s226 + $0x4a0] sm:$0xf]
      %v963 = vld [vmem:[%s226 + $0x4a8] sm:$0xf]
      %s964 = scalar_lea.vmem %s226, 1156
      %v965 = vld [vmem:[%s964] ss:$8 sm:$0xf]
      %v966 = vld [vmem:[%s964] ss:$8 sm:$0x30]
      %v967 = vor.u32 %v965, %v966
      %v968 = vld [vmem:[%s215] sm:$0xff]
      %v969 = vld [vmem:[%s215 + $0x8] sm:$0xff]
      %v970 = vld [vmem:[%s215 + $0x10] sm:$0xff]
      %v971 = vld [vmem:[%s215 + $0x18] sm:$0xff]
      %v972 = vld [vmem:[%s215 + $0x20] sm:$0xff]
      %v973 = vld [vmem:[%s215 + $0x28] sm:$0xff]
      %v974 = vld [vmem:[%s215 + $0x30] sm:$0xff]
      %v975 = vld [vmem:[%s215 + $0x38] sm:$0xff]
      %v976 = vld [vmem:[%s215 + $0x40] sm:$0xff]
      %v977 = vld [vmem:[%s215 + $0x48] sm:$0xff]
      %v978 = vld [vmem:[%s215 + $0x50] sm:$0xff]
      %v979 = vld [vmem:[%s215 + $0x58] sm:$0xff]
      %v980 = vld [vmem:[%s215 + $0x60] sm:$0xff]
      %v981 = vld [vmem:[%s215 + $0x68] sm:$0xff]
      %v982 = vld [vmem:[%s215 + $0x70] sm:$0xff]
      %v983 = vld [vmem:[%s215 + $0x78] sm:$0xff]
      %v984 = vld [vmem:[%s215 + $0x80] sm:$0xff]
      %v985 = vld [vmem:[%s215 + $0x88] sm:$0xff]
      %v986 = vld [vmem:[%s215 + $0x90] sm:$0xff]
      %v987 = vld [vmem:[%s215 + $0x98] sm:$0xff]
      %v988 = vld [vmem:[%s215 + $0xa0] sm:$0xff]
      %v989 = vld [vmem:[%s215 + $0xa8] sm:$0xff]
      %v990 = vld [vmem:[%s215 + $0xb0] sm:$0xff]
      %v991 = vld [vmem:[%s215 + $0xb8] sm:$0xff]
      %v992 = vld [vmem:[%s215 + $0xc0] sm:$0xff]
      %v993 = vld [vmem:[%s215 + $0xc8] sm:$0xff]
      %v994 = vld [vmem:[%s215 + $0xd0] sm:$0xff]
      %v995 = vld [vmem:[%s215 + $0xd8] sm:$0xff]
      %v996 = vld [vmem:[%s215 + $0xe0] sm:$0xff]
      %v997 = vld [vmem:[%s215 + $0xe8] sm:$0xff]
      %v998 = vld [vmem:[%s215 + $0xf0] sm:$0xff]
      %v999 = vld [vmem:[%s215 + $0xf8] sm:$0xff]
      %v1000 = vld [vmem:[%s215 + $0x100] sm:$0xff]
      %v1001 = vld [vmem:[%s215 + $0x108] sm:$0xff]
      %v1002 = vld [vmem:[%s215 + $0x110] sm:$0xff]
      %v1003 = vld [vmem:[%s215 + $0x118] sm:$0xff]
      %v1004 = vld [vmem:[%s215 + $0x120] sm:$0xff]
      %v1005 = vld [vmem:[%s215 + $0x128] sm:$0xff]
      %v1006 = vld [vmem:[%s215 + $0x130] sm:$0xff]
      %v1007 = vld [vmem:[%s215 + $0x138] sm:$0xff]
      %v1008 = vld [vmem:[%s215 + $0x140] sm:$0xff]
      %v1009 = vld [vmem:[%s215 + $0x148] sm:$0xff]
      %v1010 = vld [vmem:[%s215 + $0x150] sm:$0xff]
      %v1011 = vld [vmem:[%s215 + $0x158] sm:$0xff]
      %v1012 = vld [vmem:[%s215 + $0x160] sm:$0xff]
      %v1013 = vld [vmem:[%s215 + $0x168] sm:$0xff]
      %v1014 = vld [vmem:[%s215 + $0x170] sm:$0xff]
      %v1015 = vld [vmem:[%s215 + $0x178] sm:$0xff]
      %v1016 = vld [vmem:[%s215 + $0x180] sm:$0xff]
      %v1017 = vld [vmem:[%s215 + $0x188] sm:$0xff]
      %v1018 = vld [vmem:[%s215 + $0x190] sm:$0xff]
      %v1019 = vld [vmem:[%s215 + $0x198] sm:$0xff]
      %v1020 = vld [vmem:[%s215 + $0x1a0] sm:$0xff]
      %v1021 = vld [vmem:[%s215 + $0x1a8] sm:$0xff]
      %v1022 = vld [vmem:[%s215 + $0x1b0] sm:$0xff]
      %v1023 = vld [vmem:[%s215 + $0x1b8] sm:$0xff]
      %v1024 = vld [vmem:[%s215 + $0x1c0] sm:$0xff]
      %v1025 = vld [vmem:[%s215 + $0x1c8] sm:$0xff]
      %v1026 = vld [vmem:[%s215 + $0x1d0] sm:$0xff]
      %v1027 = vld [vmem:[%s215 + $0x1d8] sm:$0xff]
      %v1028 = vld [vmem:[%s215 + $0x1e0] sm:$0xff]
      %v1029 = vld [vmem:[%s215 + $0x1e8] sm:$0xff]
      %v1030 = vld [vmem:[%s215 + $0x1f0] sm:$0xff]
      %v1031 = vld [vmem:[%s215 + $0x1f8] sm:$0xff]
      %v1032 = vld [vmem:[%s215 + $0x200] sm:$0xff]
      %v1033 = vld [vmem:[%s215 + $0x208] sm:$0xff]
      %v1034 = vld [vmem:[%s215 + $0x210] sm:$0xff]
      %v1035 = vld [vmem:[%s215 + $0x218] sm:$0xff]
      %v1036 = vld [vmem:[%s215 + $0x220] sm:$0xff]
      %v1037 = vld [vmem:[%s215 + $0x228] sm:$0xff]
      %v1038 = vld [vmem:[%s215 + $0x230] sm:$0xff]
      %v1039 = vld [vmem:[%s215 + $0x238] sm:$0xff]
      %v1040 = vld [vmem:[%s215 + $0x240] sm:$0xff]
      %v1041 = vld [vmem:[%s215 + $0x248] sm:$0xff]
      %v1042 = vld [vmem:[%s215 + $0x250] sm:$0xff]
      %v1043 = vld [vmem:[%s215 + $0x258] sm:$0xff]
      %v1044 = vld [vmem:[%s215 + $0x260] sm:$0xff]
      %v1045 = vld [vmem:[%s215 + $0x268] sm:$0xff]
      %v1046 = vld [vmem:[%s215 + $0x270] sm:$0xff]
      %v1047 = vld [vmem:[%s215 + $0x278] sm:$0xff]
      %v1048 = vld [vmem:[%s215 + $0x280] sm:$0xff]
      %v1049 = vld [vmem:[%s215 + $0x288] sm:$0xff]
      %v1050 = vld [vmem:[%s215 + $0x290] sm:$0xff]
      %v1051 = vld [vmem:[%s215 + $0x298] sm:$0xff]
      %v1052 = vld [vmem:[%s215 + $0x2a0] sm:$0xff]
      %v1053 = vld [vmem:[%s215 + $0x2a8] sm:$0xff]
      %v1054 = vld [vmem:[%s215 + $0x2b0] sm:$0xff]
      %v1055 = vld [vmem:[%s215 + $0x2b8] sm:$0xff]
      %v1056 = vld [vmem:[%s215 + $0x2c0] sm:$0xff]
      %v1057 = vld [vmem:[%s215 + $0x2c8] sm:$0xff]
      %v1058 = vld [vmem:[%s215 + $0x2d0] sm:$0xff]
      %v1059 = vld [vmem:[%s215 + $0x2d8] sm:$0xff]
      %v1060 = vld [vmem:[%s215 + $0x2e0] sm:$0xff]
      %v1061 = vld [vmem:[%s215 + $0x2e8] sm:$0xff]
      %v1062 = vld [vmem:[%s215 + $0x2f0] sm:$0xff]
      %v1063 = vld [vmem:[%s215 + $0x2f8] sm:$0xff]
      %v1064 = vld [vmem:[%s215 + $0x300] sm:$0xff]
      %v1065 = vld [vmem:[%s215 + $0x308] sm:$0xff]
      %v1066 = vld [vmem:[%s215 + $0x310] sm:$0xff]
      %v1067 = vld [vmem:[%s215 + $0x318] sm:$0xff]
      %v1068 = vld [vmem:[%s215 + $0x320] sm:$0xff]
      %v1069 = vld [vmem:[%s215 + $0x328] sm:$0xff]
      %v1070 = vld [vmem:[%s215 + $0x330] sm:$0xff]
      %v1071 = vld [vmem:[%s215 + $0x338] sm:$0xff]
      %v1072 = vld [vmem:[%s215 + $0x340] sm:$0xff]
      %v1073 = vld [vmem:[%s215 + $0x348] sm:$0xff]
      %v1074 = vld [vmem:[%s215 + $0x350] sm:$0xff]
      %v1075 = vld [vmem:[%s215 + $0x358] sm:$0xff]
      %v1076 = vld [vmem:[%s215 + $0x360] sm:$0xff]
      %v1077 = vld [vmem:[%s215 + $0x368] sm:$0xff]
      %v1078 = vld [vmem:[%s215 + $0x370] sm:$0xff]
      %v1079 = vld [vmem:[%s215 + $0x378] sm:$0xff]
      %v1080 = vld [vmem:[%s215 + $0x380] sm:$0xff]
      %v1081 = vld [vmem:[%s215 + $0x388] sm:$0xff]
      %v1082 = vld [vmem:[%s215 + $0x390] sm:$0xff]
      %v1083 = vld [vmem:[%s215 + $0x398] sm:$0xff]
      %v1084 = vld [vmem:[%s215 + $0x3a0] sm:$0xff]
      %v1085 = vld [vmem:[%s215 + $0x3a8] sm:$0xff]
      %v1086 = vld [vmem:[%s215 + $0x3b0] sm:$0xff]
      %v1087 = vld [vmem:[%s215 + $0x3b8] sm:$0xff]
      %v1088 = vld [vmem:[%s215 + $0x3c0] sm:$0xff]
      %v1089 = vld [vmem:[%s215 + $0x3c8] sm:$0xff]
      %v1090 = vld [vmem:[%s215 + $0x3d0] sm:$0xff]
      %v1091 = vld [vmem:[%s215 + $0x3d8] sm:$0xff]
      %v1092 = vld [vmem:[%s215 + $0x3e0] sm:$0xff]
      %v1093 = vld [vmem:[%s215 + $0x3e8] sm:$0xff]
      %v1094 = vld [vmem:[%s215 + $0x3f0] sm:$0xff]
      %v1095 = vld [vmem:[%s215 + $0x3f8] sm:$0xff]
      %v1096 = vld [vmem:[%s215 + $0x400] sm:$0xff]
      %v1097 = vld [vmem:[%s215 + $0x408] sm:$0xff]
      %v1098 = vld [vmem:[%s215 + $0x410] sm:$0xff]
      %v1099 = vld [vmem:[%s215 + $0x418] sm:$0xff]
      %v1100 = vld [vmem:[%s215 + $0x420] sm:$0xff]
      %v1101 = vld [vmem:[%s215 + $0x428] sm:$0xff]
      %v1102 = vld [vmem:[%s215 + $0x430] sm:$0xff]
      %v1103 = vld [vmem:[%s215 + $0x438] sm:$0xff]
      %v1104 = vld [vmem:[%s215 + $0x440] sm:$0xff]
      %v1105 = vld [vmem:[%s215 + $0x448] sm:$0xff]
      %v1106 = vld [vmem:[%s215 + $0x450] sm:$0xff]
      %v1107 = vld [vmem:[%s215 + $0x458] sm:$0xff]
      %v1108 = vld [vmem:[%s215 + $0x460] sm:$0xff]
      %v1109 = vld [vmem:[%s215 + $0x468] sm:$0xff]
      %v1110 = vld [vmem:[%s215 + $0x470] sm:$0xff]
      %v1111 = vld [vmem:[%s215 + $0x478] sm:$0xff]
      %v1112 = vld [vmem:[%s215 + $0x480] sm:$0xf]
      %v1113 = vld [vmem:[%s215 + $0x488] sm:$0xf]
      %v1114 = vld [vmem:[%s215 + $0x490] sm:$0xf]
      %v1115 = vld [vmem:[%s215 + $0x498] sm:$0xf]
      %v1116 = vld [vmem:[%s215 + $0x4a0] sm:$0xf]
      %v1117 = vld [vmem:[%s215 + $0x4a8] sm:$0xf]
      %1118 = vmatprep.subr.mxu0 %v239
      %1119 = vmatpush1.msra.mxu0 %v238
      %1120 = vmatprep.subr.mxu0 %v245
      %1121 = vmatpush1.msra.mxu0 %v244
      %1122 = vmatprep.subr.mxu0 %v251
      %1123 = vmatpush1.msra.mxu0 %v250
      %1124 = vmatprep.subr.mxu0 %v257
      %1125 = vmatpush1.msra.mxu0 %v256
      %1126 = vmatprep.subr.mxu0 %v263
      %1127 = vmatpush1.msra.mxu0 %v262
      %1128 = vmatprep.subr.mxu0 %v269
      %1129 = vmatpush1.msra.mxu0 %v268
      %1130 = vmatprep.subr.mxu0 %v275
      %1131 = vmatpush1.msra.mxu0 %v274
      %1132 = vmatprep.subr.mxu0 %v281
      %1133 = vmatpush1.msra.mxu0 %v280
      %1134 = vmatprep.subr.mxu0 %v287
      %1135 = vmatpush1.msra.mxu0 %v286
      %1136 = vmatprep.subr.mxu0 %v293
      %1137 = vmatpush1.msra.mxu0 %v292
      %1138 = vmatprep.subr.mxu0 %v299
      %1139 = vmatpush1.msra.mxu0 %v298
      %1140 = vmatprep.subr.mxu0 %v305
      %1141 = vmatpush1.msra.mxu0 %v304
      %1142 = vmatprep.subr.mxu0 %v311
      %1143 = vmatpush1.msra.mxu0 %v310
      %1144 = vmatprep.subr.mxu0 %v317
      %1145 = vmatpush1.msra.mxu0 %v316
      %1146 = vmatprep.subr.mxu0 %v323
      %1147 = vmatpush1.msra.mxu0 %v322
      %1148 = vmatprep.subr.mxu0 %v329
      %1149 = vmatpush1.msra.mxu0 %v328
      %1150 = vmatprep.subr.mxu0 %v335
      %1151 = vmatpush1.msra.mxu0 %v334
      %1152 = vmatprep.subr.mxu0 %v341
      %1153 = vmatpush1.msra.mxu0 %v340
      %1154 = vmatprep.subr.mxu0 %v347
      %1155 = vmatpush1.msra.mxu0 %v346
      %1156 = vmatprep.subr.mxu0 %v353
      %1157 = vmatpush1.msra.mxu0 %v352
      %1158 = vmatprep.subr.mxu0 %v359
      %1159 = vmatpush1.msra.mxu0 %v358
      %1160 = vmatprep.subr.mxu0 %v365
      %1161 = vmatpush1.msra.mxu0 %v364
      %1162 = vmatprep.subr.mxu0 %v371
      %1163 = vmatpush1.msra.mxu0 %v370
      %1164 = vmatprep.subr.mxu0 %v377
      %1165 = vmatpush1.msra.mxu0 %v376
      %1166 = vmatprep.subr.mxu0 %v383
      %1167 = vmatpush1.msra.mxu0 %v382
      %1168 = vmatprep.subr.mxu0 %v389
      %1169 = vmatpush1.msra.mxu0 %v388
      %1170 = vmatprep.subr.mxu0 %v395
      %1171 = vmatpush1.msra.mxu0 %v394
      %1172 = vmatprep.subr.mxu0 %v401
      %1173 = vmatpush1.msra.mxu0 %v400
      %1174 = vmatprep.subr.mxu0 %v407
      %1175 = vmatpush1.msra.mxu0 %v406
      %1176 = vmatprep.subr.mxu0 %v413
      %1177 = vmatpush1.msra.mxu0 %v412
      %1178 = vmatprep.subr.mxu0 %v419
      %1179 = vmatpush1.msra.mxu0 %v418
      %1180 = vmatprep.subr.mxu0 %v425
      %1181 = vmatpush1.msra.mxu0 %v424
      %1182 = vmatprep.mubr.f32.mxu0 %v969
      %1183 = vmatmul.mubr.f32.gmra.mrb[0].mxu0 %v968
      %v1184 = vpop.f32.mrb[0].mxu0
      %v1185 = vadd.f32 %v814, %v1184
      %v1186 = vpop.f32.mrb[0].mxu0
      %v1187 = vadd.f32 %v815, %v1186
      %1188 = vmatprep.mubr.f32.mxu0 %v975
      %1189 = vmatmul.mubr.f32.gmra.mrb[0].mxu0 %v974
      %v1190 = vpop.f32.mrb[0].mxu0
      %v1191 = vadd.f32 %v820, %v1190
      %v1192 = vpop.f32.mrb[0].mxu0
      %v1193 = vadd.f32 %v821, %v1192
      %1194 = vmatprep.mubr.f32.mxu0 %v981
      %1195 = vmatmul.mubr.f32.gmra.mrb[0].mxu0 %v980
      %v1196 = vpop.f32.mrb[0].mxu0
      %v1197 = vadd.f32 %v826, %v1196
      %v1198 = vpop.f32.mrb[0].mxu0
      %v1199 = vadd.f32 %v827, %v1198
      %1200 = vmatprep.mubr.f32.mxu0 %v987
      %1201 = vmatmul.mubr.f32.gmra.mrb[0].mxu0 %v986
      %v1202 = vpop.f32.mrb[0].mxu0
      %v1203 = vadd.f32 %v832, %v1202
      %v1204 = vpop.f32.mrb[0].mxu0
      %v1205 = vadd.f32 %v833, %v1204
      %1206 = vmatprep.mubr.f32.mxu0 %v993
      %1207 = vmatmul.mubr.f32.gmra.mrb[0].mxu0 %v992
      %v1208 = vpop.f32.mrb[0].mxu0
      %v1209 = vadd.f32 %v838, %v1208
      %v1210 = vpop.f32.mrb[0].mxu0
      %v1211 = vadd.f32 %v839, %v1210
      %1212 = vmatprep.mubr.f32.mxu0 %v999
      %1213 = vmatmul.mubr.f32.gmra.mrb[0].mxu0 %v998
      %v1214 = vpop.f32.mrb[0].mxu0
      %v1215 = vadd.f32 %v844, %v1214
      %v1216 = vpop.f32.mrb[0].mxu0
      %v1217 = vadd.f32 %v845, %v1216
      %1218 = vmatprep.mubr.f32.mxu0 %v1005
      %1219 = vmatmul.mubr.f32.gmra.mrb[0].mxu0 %v1004
      %v1220 = vpop.f32.mrb[0].mxu0
      %v1221 = vadd.f32 %v850, %v1220
      %v1222 = vpop.f32.mrb[0].mxu0
      %v1223 = vadd.f32 %v851, %v1222
      %1224 = vmatprep.mubr.f32.mxu0 %v1011
      %1225 = vmatmul.mubr.f32.gmra.mrb[0].mxu0 %v1010
      %v1226 = vpop.f32.mrb[0].mxu0
      %v1227 = vadd.f32 %v856, %v1226
      %v1228 = vpop.f32.mrb[0].mxu0
      %v1229 = vadd.f32 %v857, %v1228
      %1230 = vmatprep.mubr.f32.mxu0 %v1017
      %1231 = vmatmul.mubr.f32.gmra.mrb[0].mxu0 %v1016
      %v1232 = vpop.f32.mrb[0].mxu0
      %v1233 = vadd.f32 %v862, %v1232
      %v1234 = vpop.f32.mrb[0].mxu0
      %v1235 = vadd.f32 %v863, %v1234
      %1236 = vmatprep.mubr.f32.mxu0 %v1023
      %1237 = vmatmul.mubr.f32.gmra.mrb[0].mxu0 %v1022
      %v1238 = vpop.f32.mrb[0].mxu0
      %v1239 = vadd.f32 %v868, %v1238
      %v1240 = vpop.f32.mrb[0].mxu0
      %v1241 = vadd.f32 %v869, %v1240
      %1242 = vmatprep.mubr.f32.mxu0 %v1029
      %1243 = vmatmul.mubr.f32.gmra.mrb[0].mxu0 %v1028
      %v1244 = vpop.f32.mrb[0].mxu0
      %v1245 = vadd.f32 %v874, %v1244
      %v1246 = vpop.f32.mrb[0].mxu0
      %v1247 = vadd.f32 %v875, %v1246
      %1248 = vmatprep.mubr.f32.mxu0 %v1035
      %1249 = vmatmul.mubr.f32.gmra.mrb[0].mxu0 %v1034
      %v1250 = vpop.f32.mrb[0].mxu0
      %v1251 = vadd.f32 %v880, %v1250
      %v1252 = vpop.f32.mrb[0].mxu0
      %v1253 = vadd.f32 %v881, %v1252
      %1254 = vmatprep.mubr.f32.mxu0 %v1041
      %1255 = vmatmul.mubr.f32.gmra.mrb[0].mxu0 %v1040
      %v1256 = vpop.f32.mrb[0].mxu0
      %v1257 = vadd.f32 %v886, %v1256
      %v1258 = vpop.f32.mrb[0].mxu0
      %v1259 = vadd.f32 %v887, %v1258
      %1260 = vmatprep.mubr.f32.mxu0 %v1047
      %1261 = vmatmul.mubr.f32.gmra.mrb[0].mxu0 %v1046
      %v1262 = vpop.f32.mrb[0].mxu0
      %v1263 = vadd.f32 %v892, %v1262
      %v1264 = vpop.f32.mrb[0].mxu0
      %v1265 = vadd.f32 %v893, %v1264
      %1266 = vmatprep.mubr.f32.mxu0 %v1053
      %1267 = vmatmul.mubr.f32.gmra.mrb[0].mxu0 %v1052
      %v1268 = vpop.f32.mrb[0].mxu0
      %v1269 = vadd.f32 %v898, %v1268
      %v1270 = vpop.f32.mrb[0].mxu0
      %v1271 = vadd.f32 %v899, %v1270
      %1272 = vmatprep.mubr.f32.mxu0 %v1059
      %1273 = vmatmul.mubr.f32.gmra.mrb[0].mxu0 %v1058
      %v1274 = vpop.f32.mrb[0].mxu0
      %v1275 = vadd.f32 %v904, %v1274
      %v1276 = vpop.f32.mrb[0].mxu0
      %v1277 = vadd.f32 %v905, %v1276
      %1278 = vmatprep.mubr.f32.mxu0 %v1065
      %1279 = vmatmul.mubr.f32.gmra.mrb[0].mxu0 %v1064
      %v1280 = vpop.f32.mrb[0].mxu0
      %v1281 = vadd.f32 %v910, %v1280
      %v1282 = vpop.f32.mrb[0].mxu0
      %v1283 = vadd.f32 %v911, %v1282
      %1284 = vmatprep.mubr.f32.mxu0 %v1071
      %1285 = vmatmul.mubr.f32.gmra.mrb[0].mxu0 %v1070
      %v1286 = vpop.f32.mrb[0].mxu0
      %v1287 = vadd.f32 %v916, %v1286
      %v1288 = vpop.f32.mrb[0].mxu0
      %v1289 = vadd.f32 %v917, %v1288
      %1290 = vmatprep.mubr.f32.mxu0 %v1077
      %1291 = vmatmul.mubr.f32.gmra.mrb[0].mxu0 %v1076
      %v1292 = vpop.f32.mrb[0].mxu0
      %v1293 = vadd.f32 %v922, %v1292
      %v1294 = vpop.f32.mrb[0].mxu0
      %v1295 = vadd.f32 %v923, %v1294
      %1296 = vmatprep.mubr.f32.mxu0 %v1083
      %1297 = vmatmul.mubr.f32.gmra.mrb[0].mxu0 %v1082
      %v1298 = vpop.f32.mrb[0].mxu0
      %v1299 = vadd.f32 %v928, %v1298
      %v1300 = vpop.f32.mrb[0].mxu0
      %v1301 = vadd.f32 %v929, %v1300
      %1302 = vmatprep.mubr.f32.mxu0 %v1089
      %1303 = vmatmul.mubr.f32.gmra.mrb[0].mxu0 %v1088
      %v1304 = vpop.f32.mrb[0].mxu0
      %v1305 = vadd.f32 %v934, %v1304
      %v1306 = vpop.f32.mrb[0].mxu0
      %v1307 = vadd.f32 %v935, %v1306
      %1308 = vmatprep.mubr.f32.mxu0 %v1095
      %1309 = vmatmul.mubr.f32.gmra.mrb[0].mxu0 %v1094
      %v1310 = vpop.f32.mrb[0].mxu0
      %v1311 = vadd.f32 %v940, %v1310
      %v1312 = vpop.f32.mrb[0].mxu0
      %v1313 = vadd.f32 %v941, %v1312
      %1314 = vmatprep.mubr.f32.mxu0 %v1101
      %1315 = vmatmul.mubr.f32.gmra.mrb[0].mxu0 %v1100
      %v1316 = vpop.f32.mrb[0].mxu0
      %v1317 = vadd.f32 %v946, %v1316
      %v1318 = vpop.f32.mrb[0].mxu0
      %v1319 = vadd.f32 %v947, %v1318
      %1320 = vmatprep.mubr.f32.mxu0 %v1107
      %1321 = vmatmul.mubr.f32.gmra.mrb[0].mxu0 %v1106
      %v1322 = vpop.f32.mrb[0].mxu0
      %v1323 = vadd.f32 %v952, %v1322
      %v1324 = vpop.f32.mrb[0].mxu0
      %v1325 = vadd.f32 %v953, %v1324
      %1326 = vmatprep.mubr.f32.mxu0 %v1113
      %1327 = vmatmul.mubr.f32.gmra.mrb[0].mxu0 %v1112
      %v1328 = vpop.f32.mrb[0].mxu0
      %v1329 = vadd.f32 %v958, %v1328
      %v1330 = vpop.f32.mrb[0].mxu0
      %v1331 = vadd.f32 %v959, %v1330
      %1332 = vdwg.mxu0
      %1333 = vmatprep.subr.mxu0 %v431
      %1334 = vmatpush1.msra.mxu0 %v430
      %1335 = vmatprep.subr.mxu0 %v437
      %1336 = vmatpush1.msra.mxu0 %v436
      %1337 = vmatprep.subr.mxu0 %v443
      %1338 = vmatpush1.msra.mxu0 %v442
      %1339 = vmatprep.subr.mxu0 %v449
      %1340 = vmatpush1.msra.mxu0 %v448
      %1341 = vmatprep.subr.mxu0 %v455
      %1342 = vmatpush1.msra.mxu0 %v454
      %1343 = vmatprep.subr.mxu0 %v461
      %1344 = vmatpush1.msra.mxu0 %v460
      %1345 = vmatprep.subr.mxu0 %v467
      %1346 = vmatpush1.msra.mxu0 %v466
      %1347 = vmatprep.subr.mxu0 %v473
      %1348 = vmatpush1.msra.mxu0 %v472
      %1349 = vmatprep.subr.mxu0 %v479
      %1350 = vmatpush1.msra.mxu0 %v478
      %1351 = vmatprep.subr.mxu0 %v485
      %1352 = vmatpush1.msra.mxu0 %v484
      %1353 = vmatprep.subr.mxu0 %v491
      %1354 = vmatpush1.msra.mxu0 %v490
      %1355 = vmatprep.subr.mxu0 %v497
      %1356 = vmatpush1.msra.mxu0 %v496
      %1357 = vmatprep.subr.mxu0 %v503
      %1358 = vmatpush1.msra.mxu0 %v502
      %1359 = vmatprep.subr.mxu0 %v509
      %1360 = vmatpush1.msra.mxu0 %v508
      %1361 = vmatprep.subr.mxu0 %v515
      %1362 = vmatpush1.msra.mxu0 %v514
      %1363 = vmatprep.subr.mxu0 %v521
      %1364 = vmatpush1.msra.mxu0 %v520
      %1365 = vmatprep.subr.mxu0 %v527
      %1366 = vmatpush1.msra.mxu0 %v526
      %1367 = vmatprep.subr.mxu0 %v533
      %1368 = vmatpush1.msra.mxu0 %v532
      %1369 = vmatprep.subr.mxu0 %v539
      %1370 = vmatpush1.msra.mxu0 %v538
      %1371 = vmatprep.subr.mxu0 %v545
      %1372 = vmatpush1.msra.mxu0 %v544
      %1373 = vmatprep.subr.mxu0 %v551
      %1374 = vmatpush1.msra.mxu0 %v550
      %1375 = vmatprep.subr.mxu0 %v557
      %1376 = vmatpush1.msra.mxu0 %v556
      %1377 = vmatprep.subr.mxu0 %v563
      %1378 = vmatpush1.msra.mxu0 %v562
      %1379 = vmatprep.subr.mxu0 %v569
      %1380 = vmatpush1.msra.mxu0 %v568
      %1381 = vmatprep.subr.mxu0 %v575
      %1382 = vmatpush1.msra.mxu0 %v574
      %1383 = vmatprep.subr.mxu0 %v581
      %1384 = vmatpush1.msra.mxu0 %v580
      %1385 = vmatprep.subr.mxu0 %v587
      %1386 = vmatpush1.msra.mxu0 %v586
      %1387 = vmatprep.subr.mxu0 %v593
      %1388 = vmatpush1.msra.mxu0 %v592
      %1389 = vmatprep.subr.mxu0 %v599
      %1390 = vmatpush1.msra.mxu0 %v598
      %1391 = vmatprep.subr.mxu0 %v605
      %1392 = vmatpush1.msra.mxu0 %v604
      %1393 = vmatprep.subr.mxu0 %v611
      %1394 = vmatpush1.msra.mxu0 %v610
      %1395 = vmatprep.subr.mxu0 %v617
      %1396 = vmatpush1.msra.mxu0 %v616
      %1397 = vmatprep.mubr.f32.mxu0 %v971
      %1398 = vmatmul.mubr.f32.gmra.mrb[0].mxu0 %v970
      %v1399 = vpop.f32.mrb[0].mxu0
      %v1400 = vadd.f32 %v1185, %v1399
      %v1401 = vpop.f32.mrb[0].mxu0
      %v1402 = vadd.f32 %v1187, %v1401
      %1403 = vmatprep.mubr.f32.mxu0 %v977
      %1404 = vmatmul.mubr.f32.gmra.mrb[0].mxu0 %v976
      %v1405 = vpop.f32.mrb[0].mxu0
      %v1406 = vadd.f32 %v1191, %v1405
      %v1407 = vpop.f32.mrb[0].mxu0
      %v1408 = vadd.f32 %v1193, %v1407
      %1409 = vmatprep.mubr.f32.mxu0 %v983
      %1410 = vmatmul.mubr.f32.gmra.mrb[0].mxu0 %v982
      %v1411 = vpop.f32.mrb[0].mxu0
      %v1412 = vadd.f32 %v1197, %v1411
      %v1413 = vpop.f32.mrb[0].mxu0
      %v1414 = vadd.f32 %v1199, %v1413
      %1415 = vmatprep.mubr.f32.mxu0 %v989
      %1416 = vmatmul.mubr.f32.gmra.mrb[0].mxu0 %v988
      %v1417 = vpop.f32.mrb[0].mxu0
      %v1418 = vadd.f32 %v1203, %v1417
      %v1419 = vpop.f32.mrb[0].mxu0
      %v1420 = vadd.f32 %v1205, %v1419
      %1421 = vmatprep.mubr.f32.mxu0 %v995
      %1422 = vmatmul.mubr.f32.gmra.mrb[0].mxu0 %v994
      %v1423 = vpop.f32.mrb[0].mxu0
      %v1424 = vadd.f32 %v1209, %v1423
      %v1425 = vpop.f32.mrb[0].mxu0
      %v1426 = vadd.f32 %v1211, %v1425
      %1427 = vmatprep.mubr.f32.mxu0 %v1001
      %1428 = vmatmul.mubr.f32.gmra.mrb[0].mxu0 %v1000
      %v1429 = vpop.f32.mrb[0].mxu0
      %v1430 = vadd.f32 %v1215, %v1429
      %v1431 = vpop.f32.mrb[0].mxu0
      %v1432 = vadd.f32 %v1217, %v1431
      %1433 = vmatprep.mubr.f32.mxu0 %v1007
      %1434 = vmatmul.mubr.f32.gmra.mrb[0].mxu0 %v1006
      %v1435 = vpop.f32.mrb[0].mxu0
      %v1436 = vadd.f32 %v1221, %v1435
      %v1437 = vpop.f32.mrb[0].mxu0
      %v1438 = vadd.f32 %v1223, %v1437
      %1439 = vmatprep.mubr.f32.mxu0 %v1013
      %1440 = vmatmul.mubr.f32.gmra.mrb[0].mxu0 %v1012
      %v1441 = vpop.f32.mrb[0].mxu0
      %v1442 = vadd.f32 %v1227, %v1441
      %v1443 = vpop.f32.mrb[0].mxu0
      %v1444 = vadd.f32 %v1229, %v1443
      %1445 = vmatprep.mubr.f32.mxu0 %v1019
      %1446 = vmatmul.mubr.f32.gmra.mrb[0].mxu0 %v1018
      %v1447 = vpop.f32.mrb[0].mxu0
      %v1448 = vadd.f32 %v1233, %v1447
      %v1449 = vpop.f32.mrb[0].mxu0
      %v1450 = vadd.f32 %v1235, %v1449
      %1451 = vmatprep.mubr.f32.mxu0 %v1025
      %1452 = vmatmul.mubr.f32.gmra.mrb[0].mxu0 %v1024
      %v1453 = vpop.f32.mrb[0].mxu0
      %v1454 = vadd.f32 %v1239, %v1453
      %v1455 = vpop.f32.mrb[0].mxu0
      %v1456 = vadd.f32 %v1241, %v1455
      %1457 = vmatprep.mubr.f32.mxu0 %v1031
      %1458 = vmatmul.mubr.f32.gmra.mrb[0].mxu0 %v1030
      %v1459 = vpop.f32.mrb[0].mxu0
      %v1460 = vadd.f32 %v1245, %v1459
      %v1461 = vpop.f32.mrb[0].mxu0
      %v1462 = vadd.f32 %v1247, %v1461
      %1463 = vmatprep.mubr.f32.mxu0 %v1037
      %1464 = vmatmul.mubr.f32.gmra.mrb[0].mxu0 %v1036
      %v1465 = vpop.f32.mrb[0].mxu0
      %v1466 = vadd.f32 %v1251, %v1465
      %v1467 = vpop.f32.mrb[0].mxu0
      %v1468 = vadd.f32 %v1253, %v1467
      %1469 = vmatprep.mubr.f32.mxu0 %v1043
      %1470 = vmatmul.mubr.f32.gmra.mrb[0].mxu0 %v1042
      %v1471 = vpop.f32.mrb[0].mxu0
      %v1472 = vadd.f32 %v1257, %v1471
      %v1473 = vpop.f32.mrb[0].mxu0
      %v1474 = vadd.f32 %v1259, %v1473
      %1475 = vmatprep.mubr.f32.mxu0 %v1049
      %1476 = vmatmul.mubr.f32.gmra.mrb[0].mxu0 %v1048
      %v1477 = vpop.f32.mrb[0].mxu0
      %v1478 = vadd.f32 %v1263, %v1477
      %v1479 = vpop.f32.mrb[0].mxu0
      %v1480 = vadd.f32 %v1265, %v1479
      %1481 = vmatprep.mubr.f32.mxu0 %v1055
      %1482 = vmatmul.mubr.f32.gmra.mrb[0].mxu0 %v1054
      %v1483 = vpop.f32.mrb[0].mxu0
      %v1484 = vadd.f32 %v1269, %v1483
      %v1485 = vpop.f32.mrb[0].mxu0
      %v1486 = vadd.f32 %v1271, %v1485
      %1487 = vmatprep.mubr.f32.mxu0 %v1061
      %1488 = vmatmul.mubr.f32.gmra.mrb[0].mxu0 %v1060
      %v1489 = vpop.f32.mrb[0].mxu0
      %v1490 = vadd.f32 %v1275, %v1489
      %v1491 = vpop.f32.mrb[0].mxu0
      %v1492 = vadd.f32 %v1277, %v1491
      %1493 = vmatprep.mubr.f32.mxu0 %v1067
      %1494 = vmatmul.mubr.f32.gmra.mrb[0].mxu0 %v1066
      %v1495 = vpop.f32.mrb[0].mxu0
      %v1496 = vadd.f32 %v1281, %v1495
      %v1497 = vpop.f32.mrb[0].mxu0
      %v1498 = vadd.f32 %v1283, %v1497
      %1499 = vmatprep.mubr.f32.mxu0 %v1073
      %1500 = vmatmul.mubr.f32.gmra.mrb[0].mxu0 %v1072
      %v1501 = vpop.f32.mrb[0].mxu0
      %v1502 = vadd.f32 %v1287, %v1501
      %v1503 = vpop.f32.mrb[0].mxu0
      %v1504 = vadd.f32 %v1289, %v1503
      %1505 = vmatprep.mubr.f32.mxu0 %v1079
      %1506 = vmatmul.mubr.f32.gmra.mrb[0].mxu0 %v1078
      %v1507 = vpop.f32.mrb[0].mxu0
      %v1508 = vadd.f32 %v1293, %v1507
      %v1509 = vpop.f32.mrb[0].mxu0
      %v1510 = vadd.f32 %v1295, %v1509
      %1511 = vmatprep.mubr.f32.mxu0 %v1085
      %1512 = vmatmul.mubr.f32.gmra.mrb[0].mxu0 %v1084
      %v1513 = vpop.f32.mrb[0].mxu0
      %v1514 = vadd.f32 %v1299, %v1513
      %v1515 = vpop.f32.mrb[0].mxu0
      %v1516 = vadd.f32 %v1301, %v1515
      %1517 = vmatprep.mubr.f32.mxu0 %v1091
      %1518 = vmatmul.mubr.f32.gmra.mrb[0].mxu0 %v1090
      %v1519 = vpop.f32.mrb[0].mxu0
      %v1520 = vadd.f32 %v1305, %v1519
      %v1521 = vpop.f32.mrb[0].mxu0
      %v1522 = vadd.f32 %v1307, %v1521
      %1523 = vmatprep.mubr.f32.mxu0 %v1097
      %1524 = vmatmul.mubr.f32.gmra.mrb[0].mxu0 %v1096
      %v1525 = vpop.f32.mrb[0].mxu0
      %v1526 = vadd.f32 %v1311, %v1525
      %v1527 = vpop.f32.mrb[0].mxu0
      %v1528 = vadd.f32 %v1313, %v1527
      %1529 = vmatprep.mubr.f32.mxu0 %v1103
      %1530 = vmatmul.mubr.f32.gmra.mrb[0].mxu0 %v1102
      %v1531 = vpop.f32.mrb[0].mxu0
      %v1532 = vadd.f32 %v1317, %v1531
      %v1533 = vpop.f32.mrb[0].mxu0
      %v1534 = vadd.f32 %v1319, %v1533
      %1535 = vmatprep.mubr.f32.mxu0 %v1109
      %1536 = vmatmul.mubr.f32.gmra.mrb[0].mxu0 %v1108
      %v1537 = vpop.f32.mrb[0].mxu0
      %v1538 = vadd.f32 %v1323, %v1537
      %v1539 = vpop.f32.mrb[0].mxu0
      %v1540 = vadd.f32 %v1325, %v1539
      %1541 = vmatprep.mubr.f32.mxu0 %v1115
      %1542 = vmatmul.mubr.f32.gmra.mrb[0].mxu0 %v1114
      %v1543 = vpop.f32.mrb[0].mxu0
      %v1544 = vadd.f32 %v1329, %v1543
      %v1545 = vpop.f32.mrb[0].mxu0
      %v1546 = vadd.f32 %v1331, %v1545
      %1547 = vdwg.mxu0
      %1548 = vmatprep.subr.mxu0 %v623
      %1549 = vmatpush1.msra.mxu0 %v622
      %1550 = vmatprep.subr.mxu0 %v629
      %1551 = vmatpush1.msra.mxu0 %v628
      %1552 = vmatprep.subr.mxu0 %v635
      %1553 = vmatpush1.msra.mxu0 %v634
      %1554 = vmatprep.subr.mxu0 %v641
      %1555 = vmatpush1.msra.mxu0 %v640
      %1556 = vmatprep.subr.mxu0 %v647
      %1557 = vmatpush1.msra.mxu0 %v646
      %1558 = vmatprep.subr.mxu0 %v653
      %1559 = vmatpush1.msra.mxu0 %v652
      %1560 = vmatprep.subr.mxu0 %v659
      %1561 = vmatpush1.msra.mxu0 %v658
      %1562 = vmatprep.subr.mxu0 %v665
      %1563 = vmatpush1.msra.mxu0 %v664
      %1564 = vmatprep.subr.mxu0 %v671
      %1565 = vmatpush1.msra.mxu0 %v670
      %1566 = vmatprep.subr.mxu0 %v677
      %1567 = vmatpush1.msra.mxu0 %v676
      %1568 = vmatprep.subr.mxu0 %v683
      %1569 = vmatpush1.msra.mxu0 %v682
      %1570 = vmatprep.subr.mxu0 %v689
      %1571 = vmatpush1.msra.mxu0 %v688
      %1572 = vmatprep.subr.mxu0 %v695
      %1573 = vmatpush1.msra.mxu0 %v694
      %1574 = vmatprep.subr.mxu0 %v701
      %1575 = vmatpush1.msra.mxu0 %v700
      %1576 = vmatprep.subr.mxu0 %v707
      %1577 = vmatpush1.msra.mxu0 %v706
      %1578 = vmatprep.subr.mxu0 %v713
      %1579 = vmatpush1.msra.mxu0 %v712
      %1580 = vmatprep.subr.mxu0 %v719
      %1581 = vmatpush1.msra.mxu0 %v718
      %1582 = vmatprep.subr.mxu0 %v725
      %1583 = vmatpush1.msra.mxu0 %v724
      %1584 = vmatprep.subr.mxu0 %v731
      %1585 = vmatpush1.msra.mxu0 %v730
      %1586 = vmatprep.subr.mxu0 %v737
      %1587 = vmatpush1.msra.mxu0 %v736
      %1588 = vmatprep.subr.mxu0 %v743
      %1589 = vmatpush1.msra.mxu0 %v742
      %1590 = vmatprep.subr.mxu0 %v749
      %1591 = vmatpush1.msra.mxu0 %v748
      %1592 = vmatprep.subr.mxu0 %v755
      %1593 = vmatpush1.msra.mxu0 %v754
      %1594 = vmatprep.subr.mxu0 %v761
      %1595 = vmatpush1.msra.mxu0 %v760
      %1596 = vmatprep.subr.mxu0 %v767
      %1597 = vmatpush1.msra.mxu0 %v766
      %1598 = vmatprep.subr.mxu0 %v773
      %1599 = vmatpush1.msra.mxu0 %v772
      %1600 = vmatprep.subr.mxu0 %v779
      %1601 = vmatpush1.msra.mxu0 %v778
      %1602 = vmatprep.subr.mxu0 %v785
      %1603 = vmatpush1.msra.mxu0 %v784
      %1604 = vmatprep.subr.mxu0 %v791
      %1605 = vmatpush1.msra.mxu0 %v790
      %1606 = vmatprep.subr.mxu0 %v797
      %1607 = vmatpush1.msra.mxu0 %v796
      %1608 = vmatprep.subr.mxu0 %v803
      %1609 = vmatpush1.msra.mxu0 %v802
      %1610 = vmatprep.subr.mxu0 %v809
      %1611 = vmatpush1.msra.mxu0 %v808
      %1612 = vmatprep.mubr.f32.mxu0 %v973
      %1613 = vmatmul.mubr.f32.gmra.mrb[0].mxu0 %v972
      %v1614 = vpop.f32.mrb[0].mxu0
      %v1615 = vadd.f32 %v1400, %v1614
      %v1616 = vpop.f32.mrb[0].mxu0
      %v1617 = vadd.f32 %v1402, %v1616
      %1618 = vmatprep.mubr.f32.mxu0 %v979
      %1619 = vmatmul.mubr.f32.gmra.mrb[0].mxu0 %v978
      %v1620 = vpop.f32.mrb[0].mxu0
      %v1621 = vadd.f32 %v1406, %v1620
      %v1622 = vpop.f32.mrb[0].mxu0
      %v1623 = vadd.f32 %v1408, %v1622
      %1624 = vmatprep.mubr.f32.mxu0 %v985
      %1625 = vmatmul.mubr.f32.gmra.mrb[0].mxu0 %v984
      %v1626 = vpop.f32.mrb[0].mxu0
      %v1627 = vadd.f32 %v1412, %v1626
      %v1628 = vpop.f32.mrb[0].mxu0
      %v1629 = vadd.f32 %v1414, %v1628
      %1630 = vmatprep.mubr.f32.mxu0 %v991
      %1631 = vmatmul.mubr.f32.gmra.mrb[0].mxu0 %v990
      %v1632 = vpop.f32.mrb[0].mxu0
      %v1633 = vadd.f32 %v1418, %v1632
      %v1634 = vpop.f32.mrb[0].mxu0
      %v1635 = vadd.f32 %v1420, %v1634
      %1636 = vmatprep.mubr.f32.mxu0 %v997
      %1637 = vmatmul.mubr.f32.gmra.mrb[0].mxu0 %v996
      %v1638 = vpop.f32.mrb[0].mxu0
      %v1639 = vadd.f32 %v1424, %v1638
      %v1640 = vpop.f32.mrb[0].mxu0
      %v1641 = vadd.f32 %v1426, %v1640
      %1642 = vmatprep.mubr.f32.mxu0 %v1003
      %1643 = vmatmul.mubr.f32.gmra.mrb[0].mxu0 %v1002
      %v1644 = vpop.f32.mrb[0].mxu0
      %v1645 = vadd.f32 %v1430, %v1644
      %v1646 = vpop.f32.mrb[0].mxu0
      %v1647 = vadd.f32 %v1432, %v1646
      %1648 = vmatprep.mubr.f32.mxu0 %v1009
      %1649 = vmatmul.mubr.f32.gmra.mrb[0].mxu0 %v1008
      %v1650 = vpop.f32.mrb[0].mxu0
      %v1651 = vadd.f32 %v1436, %v1650
      %v1652 = vpop.f32.mrb[0].mxu0
      %v1653 = vadd.f32 %v1438, %v1652
      %1654 = vmatprep.mubr.f32.mxu0 %v1015
      %1655 = vmatmul.mubr.f32.gmra.mrb[0].mxu0 %v1014
      %v1656 = vpop.f32.mrb[0].mxu0
      %v1657 = vadd.f32 %v1442, %v1656
      %v1658 = vpop.f32.mrb[0].mxu0
      %v1659 = vadd.f32 %v1444, %v1658
      %1660 = vmatprep.mubr.f32.mxu0 %v1021
      %1661 = vmatmul.mubr.f32.gmra.mrb[0].mxu0 %v1020
      %v1662 = vpop.f32.mrb[0].mxu0
      %v1663 = vadd.f32 %v1448, %v1662
      %v1664 = vpop.f32.mrb[0].mxu0
      %v1665 = vadd.f32 %v1450, %v1664
      %1666 = vmatprep.mubr.f32.mxu0 %v1027
      %1667 = vmatmul.mubr.f32.gmra.mrb[0].mxu0 %v1026
      %v1668 = vpop.f32.mrb[0].mxu0
      %v1669 = vadd.f32 %v1454, %v1668
      %v1670 = vpop.f32.mrb[0].mxu0
      %v1671 = vadd.f32 %v1456, %v1670
      %1672 = vmatprep.mubr.f32.mxu0 %v1033
      %1673 = vmatmul.mubr.f32.gmra.mrb[0].mxu0 %v1032
      %v1674 = vpop.f32.mrb[0].mxu0
      %v1675 = vadd.f32 %v1460, %v1674
      %v1676 = vpop.f32.mrb[0].mxu0
      %v1677 = vadd.f32 %v1462, %v1676
      %1678 = vmatprep.mubr.f32.mxu0 %v1039
      %1679 = vmatmul.mubr.f32.gmra.mrb[0].mxu0 %v1038
      %v1680 = vpop.f32.mrb[0].mxu0
      %v1681 = vadd.f32 %v1466, %v1680
      %v1682 = vpop.f32.mrb[0].mxu0
      %v1683 = vadd.f32 %v1468, %v1682
      %1684 = vmatprep.mubr.f32.mxu0 %v1045
      %1685 = vmatmul.mubr.f32.gmra.mrb[0].mxu0 %v1044
      %v1686 = vpop.f32.mrb[0].mxu0
      %v1687 = vadd.f32 %v1472, %v1686
      %v1688 = vpop.f32.mrb[0].mxu0
      %v1689 = vadd.f32 %v1474, %v1688
      %1690 = vmatprep.mubr.f32.mxu0 %v1051
      %1691 = vmatmul.mubr.f32.gmra.mrb[0].mxu0 %v1050
      %v1692 = vpop.f32.mrb[0].mxu0
      %v1693 = vadd.f32 %v1478, %v1692
      %v1694 = vpop.f32.mrb[0].mxu0
      %v1695 = vadd.f32 %v1480, %v1694
      %1696 = vmatprep.mubr.f32.mxu0 %v1057
      %1697 = vmatmul.mubr.f32.gmra.mrb[0].mxu0 %v1056
      %v1698 = vpop.f32.mrb[0].mxu0
      %v1699 = vadd.f32 %v1484, %v1698
      %v1700 = vpop.f32.mrb[0].mxu0
      %v1701 = vadd.f32 %v1486, %v1700
      %1702 = vmatprep.mubr.f32.mxu0 %v1063
      %1703 = vmatmul.mubr.f32.gmra.mrb[0].mxu0 %v1062
      %v1704 = vpop.f32.mrb[0].mxu0
      %v1705 = vadd.f32 %v1490, %v1704
      %v1706 = vpop.f32.mrb[0].mxu0
      %v1707 = vadd.f32 %v1492, %v1706
      %1708 = vmatprep.mubr.f32.mxu0 %v1069
      %1709 = vmatmul.mubr.f32.gmra.mrb[0].mxu0 %v1068
      %v1710 = vpop.f32.mrb[0].mxu0
      %v1711 = vadd.f32 %v1496, %v1710
      %v1712 = vpop.f32.mrb[0].mxu0
      %v1713 = vadd.f32 %v1498, %v1712
      %1714 = vmatprep.mubr.f32.mxu0 %v1075
      %1715 = vmatmul.mubr.f32.gmra.mrb[0].mxu0 %v1074
      %v1716 = vpop.f32.mrb[0].mxu0
      %v1717 = vadd.f32 %v1502, %v1716
      %v1718 = vpop.f32.mrb[0].mxu0
      %v1719 = vadd.f32 %v1504, %v1718
      %1720 = vmatprep.mubr.f32.mxu0 %v1081
      %1721 = vmatmul.mubr.f32.gmra.mrb[0].mxu0 %v1080
      %v1722 = vpop.f32.mrb[0].mxu0
      %v1723 = vadd.f32 %v1508, %v1722
      %v1724 = vpop.f32.mrb[0].mxu0
      %v1725 = vadd.f32 %v1510, %v1724
      %1726 = vmatprep.mubr.f32.mxu0 %v1087
      %1727 = vmatmul.mubr.f32.gmra.mrb[0].mxu0 %v1086
      %v1728 = vpop.f32.mrb[0].mxu0
      %v1729 = vadd.f32 %v1514, %v1728
      %v1730 = vpop.f32.mrb[0].mxu0
      %v1731 = vadd.f32 %v1516, %v1730
      %1732 = vmatprep.mubr.f32.mxu0 %v1093
      %1733 = vmatmul.mubr.f32.gmra.mrb[0].mxu0 %v1092
      %v1734 = vpop.f32.mrb[0].mxu0
      %v1735 = vadd.f32 %v1520, %v1734
      %v1736 = vpop.f32.mrb[0].mxu0
      %v1737 = vadd.f32 %v1522, %v1736
      %1738 = vmatprep.mubr.f32.mxu0 %v1099
      %1739 = vmatmul.mubr.f32.gmra.mrb[0].mxu0 %v1098
      %v1740 = vpop.f32.mrb[0].mxu0
      %v1741 = vadd.f32 %v1526, %v1740
      %v1742 = vpop.f32.mrb[0].mxu0
      %v1743 = vadd.f32 %v1528, %v1742
      %1744 = vmatprep.mubr.f32.mxu0 %v1105
      %1745 = vmatmul.mubr.f32.gmra.mrb[0].mxu0 %v1104
      %v1746 = vpop.f32.mrb[0].mxu0
      %v1747 = vadd.f32 %v1532, %v1746
      %v1748 = vpop.f32.mrb[0].mxu0
      %v1749 = vadd.f32 %v1534, %v1748
      %1750 = vmatprep.mubr.f32.mxu0 %v1111
      %1751 = vmatmul.mubr.f32.gmra.mrb[0].mxu0 %v1110
      %v1752 = vpop.f32.mrb[0].mxu0
      %v1753 = vadd.f32 %v1538, %v1752
      %v1754 = vpop.f32.mrb[0].mxu0
      %v1755 = vadd.f32 %v1540, %v1754
      %1756 = vmatprep.mubr.f32.mxu0 %v1117
      %1757 = vmatmul.mubr.f32.gmra.mrb[0].mxu0 %v1116
      %v1758 = vpop.f32.mrb[0].mxu0
      %v1759 = vadd.f32 %v1544, %v1758
      %v1760 = vpop.f32.mrb[0].mxu0
      %v1761 = vadd.f32 %v1546, %v1760
      %1762 = vdwg.mxu0
      %1763 = vmatprep.subr.mxu0 %v241
      %1764 = vmatpush1.msra.mxu0 %v240
      %1765 = vmatprep.subr.mxu0 %v247
      %1766 = vmatpush1.msra.mxu0 %v246
      %1767 = vmatprep.subr.mxu0 %v253
      %1768 = vmatpush1.msra.mxu0 %v252
      %1769 = vmatprep.subr.mxu0 %v259
      %1770 = vmatpush1.msra.mxu0 %v258
      %1771 = vmatprep.subr.mxu0 %v265
      %1772 = vmatpush1.msra.mxu0 %v264
      %1773 = vmatprep.subr.mxu0 %v271
      %1774 = vmatpush1.msra.mxu0 %v270
      %1775 = vmatprep.subr.mxu0 %v277
      %1776 = vmatpush1.msra.mxu0 %v276
      %1777 = vmatprep.subr.mxu0 %v283
      %1778 = vmatpush1.msra.mxu0 %v282
      %1779 = vmatprep.subr.mxu0 %v289
      %1780 = vmatpush1.msra.mxu0 %v288
      %1781 = vmatprep.subr.mxu0 %v295
      %1782 = vmatpush1.msra.mxu0 %v294
      %1783 = vmatprep.subr.mxu0 %v301
      %1784 = vmatpush1.msra.mxu0 %v300
      %1785 = vmatprep.subr.mxu0 %v307
      %1786 = vmatpush1.msra.mxu0 %v306
      %1787 = vmatprep.subr.mxu0 %v313
      %1788 = vmatpush1.msra.mxu0 %v312
      %1789 = vmatprep.subr.mxu0 %v319
      %1790 = vmatpush1.msra.mxu0 %v318
      %1791 = vmatprep.subr.mxu0 %v325
      %1792 = vmatpush1.msra.mxu0 %v324
      %1793 = vmatprep.subr.mxu0 %v331
      %1794 = vmatpush1.msra.mxu0 %v330
      %1795 = vmatprep.subr.mxu0 %v337
      %1796 = vmatpush1.msra.mxu0 %v336
      %1797 = vmatprep.subr.mxu0 %v343
      %1798 = vmatpush1.msra.mxu0 %v342
      %1799 = vmatprep.subr.mxu0 %v349
      %1800 = vmatpush1.msra.mxu0 %v348
      %1801 = vmatprep.subr.mxu0 %v355
      %1802 = vmatpush1.msra.mxu0 %v354
      %1803 = vmatprep.subr.mxu0 %v361
      %1804 = vmatpush1.msra.mxu0 %v360
      %1805 = vmatprep.subr.mxu0 %v367
      %1806 = vmatpush1.msra.mxu0 %v366
      %1807 = vmatprep.subr.mxu0 %v373
      %1808 = vmatpush1.msra.mxu0 %v372
      %1809 = vmatprep.subr.mxu0 %v379
      %1810 = vmatpush1.msra.mxu0 %v378
      %1811 = vmatprep.subr.mxu0 %v385
      %1812 = vmatpush1.msra.mxu0 %v384
      %1813 = vmatprep.subr.mxu0 %v391
      %1814 = vmatpush1.msra.mxu0 %v390
      %1815 = vmatprep.subr.mxu0 %v397
      %1816 = vmatpush1.msra.mxu0 %v396
      %1817 = vmatprep.subr.mxu0 %v403
      %1818 = vmatpush1.msra.mxu0 %v402
      %1819 = vmatprep.subr.mxu0 %v409
      %1820 = vmatpush1.msra.mxu0 %v408
      %1821 = vmatprep.subr.mxu0 %v415
      %1822 = vmatpush1.msra.mxu0 %v414
      %1823 = vmatprep.subr.mxu0 %v421
      %1824 = vmatpush1.msra.mxu0 %v420
      %1825 = vmatprep.subr.mxu0 %v427
      %1826 = vmatpush1.msra.mxu0 %v426
      %1827 = vmatprep.mubr.f32.mxu0 %v969
      %1828 = vmatmul.mubr.f32.gmra.mrb[0].mxu0 %v968
      %v1829 = vpop.f32.mrb[0].mxu0
      %v1830 = vadd.f32 %v816, %v1829
      %v1831 = vpop.f32.mrb[0].mxu0
      %v1832 = vadd.f32 %v817, %v1831
      %1833 = vmatprep.mubr.f32.mxu0 %v975
      %1834 = vmatmul.mubr.f32.gmra.mrb[0].mxu0 %v974
      %v1835 = vpop.f32.mrb[0].mxu0
      %v1836 = vadd.f32 %v822, %v1835
      %v1837 = vpop.f32.mrb[0].mxu0
      %v1838 = vadd.f32 %v823, %v1837
      %1839 = vmatprep.mubr.f32.mxu0 %v981
      %1840 = vmatmul.mubr.f32.gmra.mrb[0].mxu0 %v980
      %v1841 = vpop.f32.mrb[0].mxu0
      %v1842 = vadd.f32 %v828, %v1841
      %v1843 = vpop.f32.mrb[0].mxu0
      %v1844 = vadd.f32 %v829, %v1843
      %1845 = vmatprep.mubr.f32.mxu0 %v987
      %1846 = vmatmul.mubr.f32.gmra.mrb[0].mxu0 %v986
      %v1847 = vpop.f32.mrb[0].mxu0
      %v1848 = vadd.f32 %v834, %v1847
      %v1849 = vpop.f32.mrb[0].mxu0
      %v1850 = vadd.f32 %v835, %v1849
      %1851 = vmatprep.mubr.f32.mxu0 %v993
      %1852 = vmatmul.mubr.f32.gmra.mrb[0].mxu0 %v992
      %v1853 = vpop.f32.mrb[0].mxu0
      %v1854 = vadd.f32 %v840, %v1853
      %v1855 = vpop.f32.mrb[0].mxu0
      %v1856 = vadd.f32 %v841, %v1855
      %1857 = vmatprep.mubr.f32.mxu0 %v999
      %1858 = vmatmul.mubr.f32.gmra.mrb[0].mxu0 %v998
      %v1859 = vpop.f32.mrb[0].mxu0
      %v1860 = vadd.f32 %v846, %v1859
      %v1861 = vpop.f32.mrb[0].mxu0
      %v1862 = vadd.f32 %v847, %v1861
      %1863 = vmatprep.mubr.f32.mxu0 %v1005
      %1864 = vmatmul.mubr.f32.gmra.mrb[0].mxu0 %v1004
      %v1865 = vpop.f32.mrb[0].mxu0
      %v1866 = vadd.f32 %v852, %v1865
      %v1867 = vpop.f32.mrb[0].mxu0
      %v1868 = vadd.f32 %v853, %v1867
      %1869 = vmatprep.mubr.f32.mxu0 %v1011
      %1870 = vmatmul.mubr.f32.gmra.mrb[0].mxu0 %v1010
      %v1871 = vpop.f32.mrb[0].mxu0
      %v1872 = vadd.f32 %v858, %v1871
      %v1873 = vpop.f32.mrb[0].mxu0
      %v1874 = vadd.f32 %v859, %v1873
      %1875 = vmatprep.mubr.f32.mxu0 %v1017
      %1876 = vmatmul.mubr.f32.gmra.mrb[0].mxu0 %v1016
      %v1877 = vpop.f32.mrb[0].mxu0
      %v1878 = vadd.f32 %v864, %v1877
      %v1879 = vpop.f32.mrb[0].mxu0
      %v1880 = vadd.f32 %v865, %v1879
      %1881 = vmatprep.mubr.f32.mxu0 %v1023
      %1882 = vmatmul.mubr.f32.gmra.mrb[0].mxu0 %v1022
      %v1883 = vpop.f32.mrb[0].mxu0
      %v1884 = vadd.f32 %v870, %v1883
      %v1885 = vpop.f32.mrb[0].mxu0
      %v1886 = vadd.f32 %v871, %v1885
      %1887 = vmatprep.mubr.f32.mxu0 %v1029
      %1888 = vmatmul.mubr.f32.gmra.mrb[0].mxu0 %v1028
      %v1889 = vpop.f32.mrb[0].mxu0
      %v1890 = vadd.f32 %v876, %v1889
      %v1891 = vpop.f32.mrb[0].mxu0
      %v1892 = vadd.f32 %v877, %v1891
      %1893 = vmatprep.mubr.f32.mxu0 %v1035
      %1894 = vmatmul.mubr.f32.gmra.mrb[0].mxu0 %v1034
      %v1895 = vpop.f32.mrb[0].mxu0
      %v1896 = vadd.f32 %v882, %v1895
      %v1897 = vpop.f32.mrb[0].mxu0
      %v1898 = vadd.f32 %v883, %v1897
      %1899 = vmatprep.mubr.f32.mxu0 %v1041
      %1900 = vmatmul.mubr.f32.gmra.mrb[0].mxu0 %v1040
      %v1901 = vpop.f32.mrb[0].mxu0
      %v1902 = vadd.f32 %v888, %v1901
      %v1903 = vpop.f32.mrb[0].mxu0
      %v1904 = vadd.f32 %v889, %v1903
      %1905 = vmatprep.mubr.f32.mxu0 %v1047
      %1906 = vmatmul.mubr.f32.gmra.mrb[0].mxu0 %v1046
      %v1907 = vpop.f32.mrb[0].mxu0
      %v1908 = vadd.f32 %v894, %v1907
      %v1909 = vpop.f32.mrb[0].mxu0
      %v1910 = vadd.f32 %v895, %v1909
      %1911 = vmatprep.mubr.f32.mxu0 %v1053
      %1912 = vmatmul.mubr.f32.gmra.mrb[0].mxu0 %v1052
      %v1913 = vpop.f32.mrb[0].mxu0
      %v1914 = vadd.f32 %v900, %v1913
      %v1915 = vpop.f32.mrb[0].mxu0
      %v1916 = vadd.f32 %v901, %v1915
      %1917 = vmatprep.mubr.f32.mxu0 %v1059
      %1918 = vmatmul.mubr.f32.gmra.mrb[0].mxu0 %v1058
      %v1919 = vpop.f32.mrb[0].mxu0
      %v1920 = vadd.f32 %v906, %v1919
      %v1921 = vpop.f32.mrb[0].mxu0
      %v1922 = vadd.f32 %v907, %v1921
      %1923 = vmatprep.mubr.f32.mxu0 %v1065
      %1924 = vmatmul.mubr.f32.gmra.mrb[0].mxu0 %v1064
      %v1925 = vpop.f32.mrb[0].mxu0
      %v1926 = vadd.f32 %v912, %v1925
      %v1927 = vpop.f32.mrb[0].mxu0
      %v1928 = vadd.f32 %v913, %v1927
      %1929 = vmatprep.mubr.f32.mxu0 %v1071
      %1930 = vmatmul.mubr.f32.gmra.mrb[0].mxu0 %v1070
      %v1931 = vpop.f32.mrb[0].mxu0
      %v1932 = vadd.f32 %v918, %v1931
      %v1933 = vpop.f32.mrb[0].mxu0
      %v1934 = vadd.f32 %v919, %v1933
      %1935 = vmatprep.mubr.f32.mxu0 %v1077
      %1936 = vmatmul.mubr.f32.gmra.mrb[0].mxu0 %v1076
      %v1937 = vpop.f32.mrb[0].mxu0
      %v1938 = vadd.f32 %v924, %v1937
      %v1939 = vpop.f32.mrb[0].mxu0
      %v1940 = vadd.f32 %v925, %v1939
      %1941 = vmatprep.mubr.f32.mxu0 %v1083
      %1942 = vmatmul.mubr.f32.gmra.mrb[0].mxu0 %v1082
      %v1943 = vpop.f32.mrb[0].mxu0
      %v1944 = vadd.f32 %v930, %v1943
      %v1945 = vpop.f32.mrb[0].mxu0
      %v1946 = vadd.f32 %v931, %v1945
      %1947 = vmatprep.mubr.f32.mxu0 %v1089
      %1948 = vmatmul.mubr.f32.gmra.mrb[0].mxu0 %v1088
      %v1949 = vpop.f32.mrb[0].mxu0
      %v1950 = vadd.f32 %v936, %v1949
      %v1951 = vpop.f32.mrb[0].mxu0
      %v1952 = vadd.f32 %v937, %v1951
      %1953 = vmatprep.mubr.f32.mxu0 %v1095
      %1954 = vmatmul.mubr.f32.gmra.mrb[0].mxu0 %v1094
      %v1955 = vpop.f32.mrb[0].mxu0
      %v1956 = vadd.f32 %v942, %v1955
      %v1957 = vpop.f32.mrb[0].mxu0
      %v1958 = vadd.f32 %v943, %v1957
      %1959 = vmatprep.mubr.f32.mxu0 %v1101
      %1960 = vmatmul.mubr.f32.gmra.mrb[0].mxu0 %v1100
      %v1961 = vpop.f32.mrb[0].mxu0
      %v1962 = vadd.f32 %v948, %v1961
      %v1963 = vpop.f32.mrb[0].mxu0
      %v1964 = vadd.f32 %v949, %v1963
      %1965 = vmatprep.mubr.f32.mxu0 %v1107
      %1966 = vmatmul.mubr.f32.gmra.mrb[0].mxu0 %v1106
      %v1967 = vpop.f32.mrb[0].mxu0
      %v1968 = vadd.f32 %v954, %v1967
      %v1969 = vpop.f32.mrb[0].mxu0
      %v1970 = vadd.f32 %v955, %v1969
      %1971 = vmatprep.mubr.f32.mxu0 %v1113
      %1972 = vmatmul.mubr.f32.gmra.mrb[0].mxu0 %v1112
      %v1973 = vpop.f32.mrb[0].mxu0
      %v1974 = vadd.f32 %v960, %v1973
      %v1975 = vpop.f32.mrb[0].mxu0
      %v1976 = vadd.f32 %v961, %v1975
      %1977 = vdwg.mxu0
      %1978 = vmatprep.subr.mxu0 %v433
      %1979 = vmatpush1.msra.mxu0 %v432
      %1980 = vmatprep.subr.mxu0 %v439
      %1981 = vmatpush1.msra.mxu0 %v438
      %1982 = vmatprep.subr.mxu0 %v445
      %1983 = vmatpush1.msra.mxu0 %v444
      %1984 = vmatprep.subr.mxu0 %v451
      %1985 = vmatpush1.msra.mxu0 %v450
      %1986 = vmatprep.subr.mxu0 %v457
      %1987 = vmatpush1.msra.mxu0 %v456
      %1988 = vmatprep.subr.mxu0 %v463
      %1989 = vmatpush1.msra.mxu0 %v462
      %1990 = vmatprep.subr.mxu0 %v469
      %1991 = vmatpush1.msra.mxu0 %v468
      %1992 = vmatprep.subr.mxu0 %v475
      %1993 = vmatpush1.msra.mxu0 %v474
      %1994 = vmatprep.subr.mxu0 %v481
      %1995 = vmatpush1.msra.mxu0 %v480
      %1996 = vmatprep.subr.mxu0 %v487
      %1997 = vmatpush1.msra.mxu0 %v486
      %1998 = vmatprep.subr.mxu0 %v493
      %1999 = vmatpush1.msra.mxu0 %v492
      %2000 = vmatprep.subr.mxu0 %v499
      %2001 = vmatpush1.msra.mxu0 %v498
      %2002 = vmatprep.subr.mxu0 %v505
      %2003 = vmatpush1.msra.mxu0 %v504
      %2004 = vmatprep.subr.mxu0 %v511
      %2005 = vmatpush1.msra.mxu0 %v510
      %2006 = vmatprep.subr.mxu0 %v517
      %2007 = vmatpush1.msra.mxu0 %v516
      %2008 = vmatprep.subr.mxu0 %v523
      %2009 = vmatpush1.msra.mxu0 %v522
      %2010 = vmatprep.subr.mxu0 %v529
      %2011 = vmatpush1.msra.mxu0 %v528
      %2012 = vmatprep.subr.mxu0 %v535
      %2013 = vmatpush1.msra.mxu0 %v534
      %2014 = vmatprep.subr.mxu0 %v541
      %2015 = vmatpush1.msra.mxu0 %v540
      %2016 = vmatprep.subr.mxu0 %v547
      %2017 = vmatpush1.msra.mxu0 %v546
      %2018 = vmatprep.subr.mxu0 %v553
      %2019 = vmatpush1.msra.mxu0 %v552
      %2020 = vmatprep.subr.mxu0 %v559
      %2021 = vmatpush1.msra.mxu0 %v558
      %2022 = vmatprep.subr.mxu0 %v565
      %2023 = vmatpush1.msra.mxu0 %v564
      %2024 = vmatprep.subr.mxu0 %v571
      %2025 = vmatpush1.msra.mxu0 %v570
      %2026 = vmatprep.subr.mxu0 %v577
      %2027 = vmatpush1.msra.mxu0 %v576
      %2028 = vmatprep.subr.mxu0 %v583
      %2029 = vmatpush1.msra.mxu0 %v582
      %2030 = vmatprep.subr.mxu0 %v589
      %2031 = vmatpush1.msra.mxu0 %v588
      %2032 = vmatprep.subr.mxu0 %v595
      %2033 = vmatpush1.msra.mxu0 %v594
      %2034 = vmatprep.subr.mxu0 %v601
      %2035 = vmatpush1.msra.mxu0 %v600
      %2036 = vmatprep.subr.mxu0 %v607
      %2037 = vmatpush1.msra.mxu0 %v606
      %2038 = vmatprep.subr.mxu0 %v613
      %2039 = vmatpush1.msra.mxu0 %v612
      %2040 = vmatprep.subr.mxu0 %v619
      %2041 = vmatpush1.msra.mxu0 %v618
      %2042 = vmatprep.mubr.f32.mxu0 %v971
      %2043 = vmatmul.mubr.f32.gmra.mrb[0].mxu0 %v970
      %v2044 = vpop.f32.mrb[0].mxu0
      %v2045 = vadd.f32 %v1830, %v2044
      %v2046 = vpop.f32.mrb[0].mxu0
      %v2047 = vadd.f32 %v1832, %v2046
      %2048 = vmatprep.mubr.f32.mxu0 %v977
      %2049 = vmatmul.mubr.f32.gmra.mrb[0].mxu0 %v976
      %v2050 = vpop.f32.mrb[0].mxu0
      %v2051 = vadd.f32 %v1836, %v2050
      %v2052 = vpop.f32.mrb[0].mxu0
      %v2053 = vadd.f32 %v1838, %v2052
      %2054 = vmatprep.mubr.f32.mxu0 %v983
      %2055 = vmatmul.mubr.f32.gmra.mrb[0].mxu0 %v982
      %v2056 = vpop.f32.mrb[0].mxu0
      %v2057 = vadd.f32 %v1842, %v2056
      %v2058 = vpop.f32.mrb[0].mxu0
      %v2059 = vadd.f32 %v1844, %v2058
      %2060 = vmatprep.mubr.f32.mxu0 %v989
      %2061 = vmatmul.mubr.f32.gmra.mrb[0].mxu0 %v988
      %v2062 = vpop.f32.mrb[0].mxu0
      %v2063 = vadd.f32 %v1848, %v2062
      %v2064 = vpop.f32.mrb[0].mxu0
      %v2065 = vadd.f32 %v1850, %v2064
      %2066 = vmatprep.mubr.f32.mxu0 %v995
      %2067 = vmatmul.mubr.f32.gmra.mrb[0].mxu0 %v994
      %v2068 = vpop.f32.mrb[0].mxu0
      %v2069 = vadd.f32 %v1854, %v2068
      %v2070 = vpop.f32.mrb[0].mxu0
      %v2071 = vadd.f32 %v1856, %v2070
      %2072 = vmatprep.mubr.f32.mxu0 %v1001
      %2073 = vmatmul.mubr.f32.gmra.mrb[0].mxu0 %v1000
      %v2074 = vpop.f32.mrb[0].mxu0
      %v2075 = vadd.f32 %v1860, %v2074
      %v2076 = vpop.f32.mrb[0].mxu0
      %v2077 = vadd.f32 %v1862, %v2076
      %2078 = vmatprep.mubr.f32.mxu0 %v1007
      %2079 = vmatmul.mubr.f32.gmra.mrb[0].mxu0 %v1006
      %v2080 = vpop.f32.mrb[0].mxu0
      %v2081 = vadd.f32 %v1866, %v2080
      %v2082 = vpop.f32.mrb[0].mxu0
      %v2083 = vadd.f32 %v1868, %v2082
      %2084 = vmatprep.mubr.f32.mxu0 %v1013
      %2085 = vmatmul.mubr.f32.gmra.mrb[0].mxu0 %v1012
      %v2086 = vpop.f32.mrb[0].mxu0
      %v2087 = vadd.f32 %v1872, %v2086
      %v2088 = vpop.f32.mrb[0].mxu0
      %v2089 = vadd.f32 %v1874, %v2088
      %2090 = vmatprep.mubr.f32.mxu0 %v1019
      %2091 = vmatmul.mubr.f32.gmra.mrb[0].mxu0 %v1018
      %v2092 = vpop.f32.mrb[0].mxu0
      %v2093 = vadd.f32 %v1878, %v2092
      %v2094 = vpop.f32.mrb[0].mxu0
      %v2095 = vadd.f32 %v1880, %v2094
      %2096 = vmatprep.mubr.f32.mxu0 %v1025
      %2097 = vmatmul.mubr.f32.gmra.mrb[0].mxu0 %v1024
      %v2098 = vpop.f32.mrb[0].mxu0
      %v2099 = vadd.f32 %v1884, %v2098
      %v2100 = vpop.f32.mrb[0].mxu0
      %v2101 = vadd.f32 %v1886, %v2100
      %2102 = vmatprep.mubr.f32.mxu0 %v1031
      %2103 = vmatmul.mubr.f32.gmra.mrb[0].mxu0 %v1030
      %v2104 = vpop.f32.mrb[0].mxu0
      %v2105 = vadd.f32 %v1890, %v2104
      %v2106 = vpop.f32.mrb[0].mxu0
      %v2107 = vadd.f32 %v1892, %v2106
      %2108 = vmatprep.mubr.f32.mxu0 %v1037
      %2109 = vmatmul.mubr.f32.gmra.mrb[0].mxu0 %v1036
      %v2110 = vpop.f32.mrb[0].mxu0
      %v2111 = vadd.f32 %v1896, %v2110
      %v2112 = vpop.f32.mrb[0].mxu0
      %v2113 = vadd.f32 %v1898, %v2112
      %2114 = vmatprep.mubr.f32.mxu0 %v1043
      %2115 = vmatmul.mubr.f32.gmra.mrb[0].mxu0 %v1042
      %v2116 = vpop.f32.mrb[0].mxu0
      %v2117 = vadd.f32 %v1902, %v2116
      %v2118 = vpop.f32.mrb[0].mxu0
      %v2119 = vadd.f32 %v1904, %v2118
      %2120 = vmatprep.mubr.f32.mxu0 %v1049
      %2121 = vmatmul.mubr.f32.gmra.mrb[0].mxu0 %v1048
      %v2122 = vpop.f32.mrb[0].mxu0
      %v2123 = vadd.f32 %v1908, %v2122
      %v2124 = vpop.f32.mrb[0].mxu0
      %v2125 = vadd.f32 %v1910, %v2124
      %2126 = vmatprep.mubr.f32.mxu0 %v1055
      %2127 = vmatmul.mubr.f32.gmra.mrb[0].mxu0 %v1054
      %v2128 = vpop.f32.mrb[0].mxu0
      %v2129 = vadd.f32 %v1914, %v2128
      %v2130 = vpop.f32.mrb[0].mxu0
      %v2131 = vadd.f32 %v1916, %v2130
      %2132 = vmatprep.mubr.f32.mxu0 %v1061
      %2133 = vmatmul.mubr.f32.gmra.mrb[0].mxu0 %v1060
      %v2134 = vpop.f32.mrb[0].mxu0
      %v2135 = vadd.f32 %v1920, %v2134
      %v2136 = vpop.f32.mrb[0].mxu0
      %v2137 = vadd.f32 %v1922, %v2136
      %2138 = vmatprep.mubr.f32.mxu0 %v1067
      %2139 = vmatmul.mubr.f32.gmra.mrb[0].mxu0 %v1066
      %v2140 = vpop.f32.mrb[0].mxu0
      %v2141 = vadd.f32 %v1926, %v2140
      %v2142 = vpop.f32.mrb[0].mxu0
      %v2143 = vadd.f32 %v1928, %v2142
      %2144 = vmatprep.mubr.f32.mxu0 %v1073
      %2145 = vmatmul.mubr.f32.gmra.mrb[0].mxu0 %v1072
      %v2146 = vpop.f32.mrb[0].mxu0
      %v2147 = vadd.f32 %v1932, %v2146
      %v2148 = vpop.f32.mrb[0].mxu0
      %v2149 = vadd.f32 %v1934, %v2148
      %2150 = vmatprep.mubr.f32.mxu0 %v1079
      %2151 = vmatmul.mubr.f32.gmra.mrb[0].mxu0 %v1078
      %v2152 = vpop.f32.mrb[0].mxu0
      %v2153 = vadd.f32 %v1938, %v2152
      %v2154 = vpop.f32.mrb[0].mxu0
      %v2155 = vadd.f32 %v1940, %v2154
      %2156 = vmatprep.mubr.f32.mxu0 %v1085
      %2157 = vmatmul.mubr.f32.gmra.mrb[0].mxu0 %v1084
      %v2158 = vpop.f32.mrb[0].mxu0
      %v2159 = vadd.f32 %v1944, %v2158
      %v2160 = vpop.f32.mrb[0].mxu0
      %v2161 = vadd.f32 %v1946, %v2160
      %2162 = vmatprep.mubr.f32.mxu0 %v1091
      %2163 = vmatmul.mubr.f32.gmra.mrb[0].mxu0 %v1090
      %v2164 = vpop.f32.mrb[0].mxu0
      %v2165 = vadd.f32 %v1950, %v2164
      %v2166 = vpop.f32.mrb[0].mxu0
      %v2167 = vadd.f32 %v1952, %v2166
      %2168 = vmatprep.mubr.f32.mxu0 %v1097
      %2169 = vmatmul.mubr.f32.gmra.mrb[0].mxu0 %v1096
      %v2170 = vpop.f32.mrb[0].mxu0
      %v2171 = vadd.f32 %v1956, %v2170
      %v2172 = vpop.f32.mrb[0].mxu0
      %v2173 = vadd.f32 %v1958, %v2172
      %2174 = vmatprep.mubr.f32.mxu0 %v1103
      %2175 = vmatmul.mubr.f32.gmra.mrb[0].mxu0 %v1102
      %v2176 = vpop.f32.mrb[0].mxu0
      %v2177 = vadd.f32 %v1962, %v2176
      %v2178 = vpop.f32.mrb[0].mxu0
      %v2179 = vadd.f32 %v1964, %v2178
      %2180 = vmatprep.mubr.f32.mxu0 %v1109
      %2181 = vmatmul.mubr.f32.gmra.mrb[0].mxu0 %v1108
      %v2182 = vpop.f32.mrb[0].mxu0
      %v2183 = vadd.f32 %v1968, %v2182
      %v2184 = vpop.f32.mrb[0].mxu0
      %v2185 = vadd.f32 %v1970, %v2184
      %2186 = vmatprep.mubr.f32.mxu0 %v1115
      %2187 = vmatmul.mubr.f32.gmra.mrb[0].mxu0 %v1114
      %v2188 = vpop.f32.mrb[0].mxu0
      %v2189 = vadd.f32 %v1974, %v2188
      %v2190 = vpop.f32.mrb[0].mxu0
      %v2191 = vadd.f32 %v1976, %v2190
      %2192 = vdwg.mxu0
      %2193 = vmatprep.subr.mxu0 %v625
      %2194 = vmatpush1.msra.mxu0 %v624
      %2195 = vmatprep.subr.mxu0 %v631
      %2196 = vmatpush1.msra.mxu0 %v630
      %2197 = vmatprep.subr.mxu0 %v637
      %2198 = vmatpush1.msra.mxu0 %v636
      %2199 = vmatprep.subr.mxu0 %v643
      %2200 = vmatpush1.msra.mxu0 %v642
      %2201 = vmatprep.subr.mxu0 %v649
      %2202 = vmatpush1.msra.mxu0 %v648
      %2203 = vmatprep.subr.mxu0 %v655
      %2204 = vmatpush1.msra.mxu0 %v654
      %2205 = vmatprep.subr.mxu0 %v661
      %2206 = vmatpush1.msra.mxu0 %v660
      %2207 = vmatprep.subr.mxu0 %v667
      %2208 = vmatpush1.msra.mxu0 %v666
      %2209 = vmatprep.subr.mxu0 %v673
      %2210 = vmatpush1.msra.mxu0 %v672
      %2211 = vmatprep.subr.mxu0 %v679
      %2212 = vmatpush1.msra.mxu0 %v678
      %2213 = vmatprep.subr.mxu0 %v685
      %2214 = vmatpush1.msra.mxu0 %v684
      %2215 = vmatprep.subr.mxu0 %v691
      %2216 = vmatpush1.msra.mxu0 %v690
      %2217 = vmatprep.subr.mxu0 %v697
      %2218 = vmatpush1.msra.mxu0 %v696
      %2219 = vmatprep.subr.mxu0 %v703
      %2220 = vmatpush1.msra.mxu0 %v702
      %2221 = vmatprep.subr.mxu0 %v709
      %2222 = vmatpush1.msra.mxu0 %v708
      %2223 = vmatprep.subr.mxu0 %v715
      %2224 = vmatpush1.msra.mxu0 %v714
      %2225 = vmatprep.subr.mxu0 %v721
      %2226 = vmatpush1.msra.mxu0 %v720
      %2227 = vmatprep.subr.mxu0 %v727
      %2228 = vmatpush1.msra.mxu0 %v726
      %2229 = vmatprep.subr.mxu0 %v733
      %2230 = vmatpush1.msra.mxu0 %v732
      %2231 = vmatprep.subr.mxu0 %v739
      %2232 = vmatpush1.msra.mxu0 %v738
      %2233 = vmatprep.subr.mxu0 %v745
      %2234 = vmatpush1.msra.mxu0 %v744
      %2235 = vmatprep.subr.mxu0 %v751
      %2236 = vmatpush1.msra.mxu0 %v750
      %2237 = vmatprep.subr.mxu0 %v757
      %2238 = vmatpush1.msra.mxu0 %v756
      %2239 = vmatprep.subr.mxu0 %v763
      %2240 = vmatpush1.msra.mxu0 %v762
      %2241 = vmatprep.subr.mxu0 %v769
      %2242 = vmatpush1.msra.mxu0 %v768
      %2243 = vmatprep.subr.mxu0 %v775
      %2244 = vmatpush1.msra.mxu0 %v774
      %2245 = vmatprep.subr.mxu0 %v781
      %2246 = vmatpush1.msra.mxu0 %v780
      %2247 = vmatprep.subr.mxu0 %v787
      %2248 = vmatpush1.msra.mxu0 %v786
      %2249 = vmatprep.subr.mxu0 %v793
      %2250 = vmatpush1.msra.mxu0 %v792
      %2251 = vmatprep.subr.mxu0 %v799
      %2252 = vmatpush1.msra.mxu0 %v798
      %2253 = vmatprep.subr.mxu0 %v805
      %2254 = vmatpush1.msra.mxu0 %v804
      %2255 = vmatprep.subr.mxu0 %v811
      %2256 = vmatpush1.msra.mxu0 %v810
      %2257 = vmatprep.mubr.f32.mxu0 %v973
      %2258 = vmatmul.mubr.f32.gmra.mrb[0].mxu0 %v972
      %v2259 = vpop.f32.mrb[0].mxu0
      %v2260 = vadd.f32 %v2045, %v2259
      %v2261 = vpop.f32.mrb[0].mxu0
      %v2262 = vadd.f32 %v2047, %v2261
      %2263 = vmatprep.mubr.f32.mxu0 %v979
      %2264 = vmatmul.mubr.f32.gmra.mrb[0].mxu0 %v978
      %v2265 = vpop.f32.mrb[0].mxu0
      %v2266 = vadd.f32 %v2051, %v2265
      %v2267 = vpop.f32.mrb[0].mxu0
      %v2268 = vadd.f32 %v2053, %v2267
      %2269 = vmatprep.mubr.f32.mxu0 %v985
      %2270 = vmatmul.mubr.f32.gmra.mrb[0].mxu0 %v984
      %v2271 = vpop.f32.mrb[0].mxu0
      %v2272 = vadd.f32 %v2057, %v2271
      %v2273 = vpop.f32.mrb[0].mxu0
      %v2274 = vadd.f32 %v2059, %v2273
      %2275 = vmatprep.mubr.f32.mxu0 %v991
      %2276 = vmatmul.mubr.f32.gmra.mrb[0].mxu0 %v990
      %v2277 = vpop.f32.mrb[0].mxu0
      %v2278 = vadd.f32 %v2063, %v2277
      %v2279 = vpop.f32.mrb[0].mxu0
      %v2280 = vadd.f32 %v2065, %v2279
      %2281 = vmatprep.mubr.f32.mxu0 %v997
      %2282 = vmatmul.mubr.f32.gmra.mrb[0].mxu0 %v996
      %v2283 = vpop.f32.mrb[0].mxu0
      %v2284 = vadd.f32 %v2069, %v2283
      %v2285 = vpop.f32.mrb[0].mxu0
      %v2286 = vadd.f32 %v2071, %v2285
      %2287 = vmatprep.mubr.f32.mxu0 %v1003
      %2288 = vmatmul.mubr.f32.gmra.mrb[0].mxu0 %v1002
      %v2289 = vpop.f32.mrb[0].mxu0
      %v2290 = vadd.f32 %v2075, %v2289
      %v2291 = vpop.f32.mrb[0].mxu0
      %v2292 = vadd.f32 %v2077, %v2291
      %2293 = vmatprep.mubr.f32.mxu0 %v1009
      %2294 = vmatmul.mubr.f32.gmra.mrb[0].mxu0 %v1008
      %v2295 = vpop.f32.mrb[0].mxu0
      %v2296 = vadd.f32 %v2081, %v2295
      %v2297 = vpop.f32.mrb[0].mxu0
      %v2298 = vadd.f32 %v2083, %v2297
      %2299 = vmatprep.mubr.f32.mxu0 %v1015
      %2300 = vmatmul.mubr.f32.gmra.mrb[0].mxu0 %v1014
      %v2301 = vpop.f32.mrb[0].mxu0
      %v2302 = vadd.f32 %v2087, %v2301
      %v2303 = vpop.f32.mrb[0].mxu0
      %v2304 = vadd.f32 %v2089, %v2303
      %2305 = vmatprep.mubr.f32.mxu0 %v1021
      %2306 = vmatmul.mubr.f32.gmra.mrb[0].mxu0 %v1020
      %v2307 = vpop.f32.mrb[0].mxu0
      %v2308 = vadd.f32 %v2093, %v2307
      %v2309 = vpop.f32.mrb[0].mxu0
      %v2310 = vadd.f32 %v2095, %v2309
      %2311 = vmatprep.mubr.f32.mxu0 %v1027
      %2312 = vmatmul.mubr.f32.gmra.mrb[0].mxu0 %v1026
      %v2313 = vpop.f32.mrb[0].mxu0
      %v2314 = vadd.f32 %v2099, %v2313
      %v2315 = vpop.f32.mrb[0].mxu0
      %v2316 = vadd.f32 %v2101, %v2315
      %2317 = vmatprep.mubr.f32.mxu0 %v1033
      %2318 = vmatmul.mubr.f32.gmra.mrb[0].mxu0 %v1032
      %v2319 = vpop.f32.mrb[0].mxu0
      %v2320 = vadd.f32 %v2105, %v2319
      %v2321 = vpop.f32.mrb[0].mxu0
      %v2322 = vadd.f32 %v2107, %v2321
      %2323 = vmatprep.mubr.f32.mxu0 %v1039
      %2324 = vmatmul.mubr.f32.gmra.mrb[0].mxu0 %v1038
      %v2325 = vpop.f32.mrb[0].mxu0
      %v2326 = vadd.f32 %v2111, %v2325
      %v2327 = vpop.f32.mrb[0].mxu0
      %v2328 = vadd.f32 %v2113, %v2327
      %2329 = vmatprep.mubr.f32.mxu0 %v1045
      %2330 = vmatmul.mubr.f32.gmra.mrb[0].mxu0 %v1044
      %v2331 = vpop.f32.mrb[0].mxu0
      %v2332 = vadd.f32 %v2117, %v2331
      %v2333 = vpop.f32.mrb[0].mxu0
      %v2334 = vadd.f32 %v2119, %v2333
      %2335 = vmatprep.mubr.f32.mxu0 %v1051
      %2336 = vmatmul.mubr.f32.gmra.mrb[0].mxu0 %v1050
      %v2337 = vpop.f32.mrb[0].mxu0
      %v2338 = vadd.f32 %v2123, %v2337
      %v2339 = vpop.f32.mrb[0].mxu0
      %v2340 = vadd.f32 %v2125, %v2339
      %2341 = vmatprep.mubr.f32.mxu0 %v1057
      %2342 = vmatmul.mubr.f32.gmra.mrb[0].mxu0 %v1056
      %v2343 = vpop.f32.mrb[0].mxu0
      %v2344 = vadd.f32 %v2129, %v2343
      %v2345 = vpop.f32.mrb[0].mxu0
      %v2346 = vadd.f32 %v2131, %v2345
      %2347 = vmatprep.mubr.f32.mxu0 %v1063
      %2348 = vmatmul.mubr.f32.gmra.mrb[0].mxu0 %v1062
      %v2349 = vpop.f32.mrb[0].mxu0
      %v2350 = vadd.f32 %v2135, %v2349
      %v2351 = vpop.f32.mrb[0].mxu0
      %v2352 = vadd.f32 %v2137, %v2351
      %2353 = vmatprep.mubr.f32.mxu0 %v1069
      %2354 = vmatmul.mubr.f32.gmra.mrb[0].mxu0 %v1068
      %v2355 = vpop.f32.mrb[0].mxu0
      %v2356 = vadd.f32 %v2141, %v2355
      %v2357 = vpop.f32.mrb[0].mxu0
      %v2358 = vadd.f32 %v2143, %v2357
      %2359 = vmatprep.mubr.f32.mxu0 %v1075
      %2360 = vmatmul.mubr.f32.gmra.mrb[0].mxu0 %v1074
      %v2361 = vpop.f32.mrb[0].mxu0
      %v2362 = vadd.f32 %v2147, %v2361
      %v2363 = vpop.f32.mrb[0].mxu0
      %v2364 = vadd.f32 %v2149, %v2363
      %2365 = vmatprep.mubr.f32.mxu0 %v1081
      %2366 = vmatmul.mubr.f32.gmra.mrb[0].mxu0 %v1080
      %v2367 = vpop.f32.mrb[0].mxu0
      %v2368 = vadd.f32 %v2153, %v2367
      %v2369 = vpop.f32.mrb[0].mxu0
      %v2370 = vadd.f32 %v2155, %v2369
      %2371 = vmatprep.mubr.f32.mxu0 %v1087
      %2372 = vmatmul.mubr.f32.gmra.mrb[0].mxu0 %v1086
      %v2373 = vpop.f32.mrb[0].mxu0
      %v2374 = vadd.f32 %v2159, %v2373
      %v2375 = vpop.f32.mrb[0].mxu0
      %v2376 = vadd.f32 %v2161, %v2375
      %2377 = vmatprep.mubr.f32.mxu0 %v1093
      %2378 = vmatmul.mubr.f32.gmra.mrb[0].mxu0 %v1092
      %v2379 = vpop.f32.mrb[0].mxu0
      %v2380 = vadd.f32 %v2165, %v2379
      %v2381 = vpop.f32.mrb[0].mxu0
      %v2382 = vadd.f32 %v2167, %v2381
      %2383 = vmatprep.mubr.f32.mxu0 %v1099
      %2384 = vmatmul.mubr.f32.gmra.mrb[0].mxu0 %v1098
      %v2385 = vpop.f32.mrb[0].mxu0
      %v2386 = vadd.f32 %v2171, %v2385
      %v2387 = vpop.f32.mrb[0].mxu0
      %v2388 = vadd.f32 %v2173, %v2387
      %2389 = vmatprep.mubr.f32.mxu0 %v1105
      %2390 = vmatmul.mubr.f32.gmra.mrb[0].mxu0 %v1104
      %v2391 = vpop.f32.mrb[0].mxu0
      %v2392 = vadd.f32 %v2177, %v2391
      %v2393 = vpop.f32.mrb[0].mxu0
      %v2394 = vadd.f32 %v2179, %v2393
      %2395 = vmatprep.mubr.f32.mxu0 %v1111
      %2396 = vmatmul.mubr.f32.gmra.mrb[0].mxu0 %v1110
      %v2397 = vpop.f32.mrb[0].mxu0
      %v2398 = vadd.f32 %v2183, %v2397
      %v2399 = vpop.f32.mrb[0].mxu0
      %v2400 = vadd.f32 %v2185, %v2399
      %2401 = vmatprep.mubr.f32.mxu0 %v1117
      %2402 = vmatmul.mubr.f32.gmra.mrb[0].mxu0 %v1116
      %v2403 = vpop.f32.mrb[0].mxu0
      %v2404 = vadd.f32 %v2189, %v2403
      %v2405 = vpop.f32.mrb[0].mxu0
      %v2406 = vadd.f32 %v2191, %v2405
      %2407 = vdwg.mxu0
      %2408 = vmatprep.subr.mxu0 %v243
      %2409 = vmatpush1.msra.mxu0 %v242
      %2410 = vmatprep.subr.mxu0 %v249
      %2411 = vmatpush1.msra.mxu0 %v248
      %2412 = vmatprep.subr.mxu0 %v255
      %2413 = vmatpush1.msra.mxu0 %v254
      %2414 = vmatprep.subr.mxu0 %v261
      %2415 = vmatpush1.msra.mxu0 %v260
      %2416 = vmatprep.subr.mxu0 %v267
      %2417 = vmatpush1.msra.mxu0 %v266
      %2418 = vmatprep.subr.mxu0 %v273
      %2419 = vmatpush1.msra.mxu0 %v272
      %2420 = vmatprep.subr.mxu0 %v279
      %2421 = vmatpush1.msra.mxu0 %v278
      %2422 = vmatprep.subr.mxu0 %v285
      %2423 = vmatpush1.msra.mxu0 %v284
      %2424 = vmatprep.subr.mxu0 %v291
      %2425 = vmatpush1.msra.mxu0 %v290
      %2426 = vmatprep.subr.mxu0 %v297
      %2427 = vmatpush1.msra.mxu0 %v296
      %2428 = vmatprep.subr.mxu0 %v303
      %2429 = vmatpush1.msra.mxu0 %v302
      %2430 = vmatprep.subr.mxu0 %v309
      %2431 = vmatpush1.msra.mxu0 %v308
      %2432 = vmatprep.subr.mxu0 %v315
      %2433 = vmatpush1.msra.mxu0 %v314
      %2434 = vmatprep.subr.mxu0 %v321
      %2435 = vmatpush1.msra.mxu0 %v320
      %2436 = vmatprep.subr.mxu0 %v327
      %2437 = vmatpush1.msra.mxu0 %v326
      %2438 = vmatprep.subr.mxu0 %v333
      %2439 = vmatpush1.msra.mxu0 %v332
      %2440 = vmatprep.subr.mxu0 %v339
      %2441 = vmatpush1.msra.mxu0 %v338
      %2442 = vmatprep.subr.mxu0 %v345
      %2443 = vmatpush1.msra.mxu0 %v344
      %2444 = vmatprep.subr.mxu0 %v351
      %2445 = vmatpush1.msra.mxu0 %v350
      %2446 = vmatprep.subr.mxu0 %v357
      %2447 = vmatpush1.msra.mxu0 %v356
      %2448 = vmatprep.subr.mxu0 %v363
      %2449 = vmatpush1.msra.mxu0 %v362
      %2450 = vmatprep.subr.mxu0 %v369
      %2451 = vmatpush1.msra.mxu0 %v368
      %2452 = vmatprep.subr.mxu0 %v375
      %2453 = vmatpush1.msra.mxu0 %v374
      %2454 = vmatprep.subr.mxu0 %v381
      %2455 = vmatpush1.msra.mxu0 %v380
      %2456 = vmatprep.subr.mxu0 %v387
      %2457 = vmatpush1.msra.mxu0 %v386
      %2458 = vmatprep.subr.mxu0 %v393
      %2459 = vmatpush1.msra.mxu0 %v392
      %2460 = vmatprep.subr.mxu0 %v399
      %2461 = vmatpush1.msra.mxu0 %v398
      %2462 = vmatprep.subr.mxu0 %v405
      %2463 = vmatpush1.msra.mxu0 %v404
      %2464 = vmatprep.subr.mxu0 %v411
      %2465 = vmatpush1.msra.mxu0 %v410
      %2466 = vmatprep.subr.mxu0 %v417
      %2467 = vmatpush1.msra.mxu0 %v416
      %2468 = vmatprep.subr.mxu0 %v423
      %2469 = vmatpush1.msra.mxu0 %v422
      %2470 = vmatprep.subr.mxu0 %v429
      %2471 = vmatpush1.msra.mxu0 %v428
      %2472 = vmatprep.mubr.f32.mxu0 %v969
      %2473 = vmatmul.mubr.f32.gmra.mrb[0].mxu0 %v968
      %v2474 = vpop.f32.mrb[0].mxu0
      %v2475 = vadd.f32 %v818, %v2474
      %v2476 = vpop.f32.mrb[0].mxu0
      %v2477 = vadd.f32 %v819, %v2476
      %2478 = vmatprep.mubr.f32.mxu0 %v975
      %2479 = vmatmul.mubr.f32.gmra.mrb[0].mxu0 %v974
      %v2480 = vpop.f32.mrb[0].mxu0
      %v2481 = vadd.f32 %v824, %v2480
      %v2482 = vpop.f32.mrb[0].mxu0
      %v2483 = vadd.f32 %v825, %v2482
      %2484 = vmatprep.mubr.f32.mxu0 %v981
      %2485 = vmatmul.mubr.f32.gmra.mrb[0].mxu0 %v980
      %v2486 = vpop.f32.mrb[0].mxu0
      %v2487 = vadd.f32 %v830, %v2486
      %v2488 = vpop.f32.mrb[0].mxu0
      %v2489 = vadd.f32 %v831, %v2488
      %2490 = vmatprep.mubr.f32.mxu0 %v987
      %2491 = vmatmul.mubr.f32.gmra.mrb[0].mxu0 %v986
      %v2492 = vpop.f32.mrb[0].mxu0
      %v2493 = vadd.f32 %v836, %v2492
      %v2494 = vpop.f32.mrb[0].mxu0
      %v2495 = vadd.f32 %v837, %v2494
      %2496 = vmatprep.mubr.f32.mxu0 %v993
      %2497 = vmatmul.mubr.f32.gmra.mrb[0].mxu0 %v992
      %v2498 = vpop.f32.mrb[0].mxu0
      %v2499 = vadd.f32 %v842, %v2498
      %v2500 = vpop.f32.mrb[0].mxu0
      %v2501 = vadd.f32 %v843, %v2500
      %2502 = vmatprep.mubr.f32.mxu0 %v999
      %2503 = vmatmul.mubr.f32.gmra.mrb[0].mxu0 %v998
      %v2504 = vpop.f32.mrb[0].mxu0
      %v2505 = vadd.f32 %v848, %v2504
      %v2506 = vpop.f32.mrb[0].mxu0
      %v2507 = vadd.f32 %v849, %v2506
      %2508 = vmatprep.mubr.f32.mxu0 %v1005
      %2509 = vmatmul.mubr.f32.gmra.mrb[0].mxu0 %v1004
      %v2510 = vpop.f32.mrb[0].mxu0
      %v2511 = vadd.f32 %v854, %v2510
      %v2512 = vpop.f32.mrb[0].mxu0
      %v2513 = vadd.f32 %v855, %v2512
      %2514 = vmatprep.mubr.f32.mxu0 %v1011
      %2515 = vmatmul.mubr.f32.gmra.mrb[0].mxu0 %v1010
      %v2516 = vpop.f32.mrb[0].mxu0
      %v2517 = vadd.f32 %v860, %v2516
      %v2518 = vpop.f32.mrb[0].mxu0
      %v2519 = vadd.f32 %v861, %v2518
      %2520 = vmatprep.mubr.f32.mxu0 %v1017
      %2521 = vmatmul.mubr.f32.gmra.mrb[0].mxu0 %v1016
      %v2522 = vpop.f32.mrb[0].mxu0
      %v2523 = vadd.f32 %v866, %v2522
      %v2524 = vpop.f32.mrb[0].mxu0
      %v2525 = vadd.f32 %v867, %v2524
      %2526 = vmatprep.mubr.f32.mxu0 %v1023
      %2527 = vmatmul.mubr.f32.gmra.mrb[0].mxu0 %v1022
      %v2528 = vpop.f32.mrb[0].mxu0
      %v2529 = vadd.f32 %v872, %v2528
      %v2530 = vpop.f32.mrb[0].mxu0
      %v2531 = vadd.f32 %v873, %v2530
      %2532 = vmatprep.mubr.f32.mxu0 %v1029
      %2533 = vmatmul.mubr.f32.gmra.mrb[0].mxu0 %v1028
      %v2534 = vpop.f32.mrb[0].mxu0
      %v2535 = vadd.f32 %v878, %v2534
      %v2536 = vpop.f32.mrb[0].mxu0
      %v2537 = vadd.f32 %v879, %v2536
      %2538 = vmatprep.mubr.f32.mxu0 %v1035
      %2539 = vmatmul.mubr.f32.gmra.mrb[0].mxu0 %v1034
      %v2540 = vpop.f32.mrb[0].mxu0
      %v2541 = vadd.f32 %v884, %v2540
      %v2542 = vpop.f32.mrb[0].mxu0
      %v2543 = vadd.f32 %v885, %v2542
      %2544 = vmatprep.mubr.f32.mxu0 %v1041
      %2545 = vmatmul.mubr.f32.gmra.mrb[0].mxu0 %v1040
      %v2546 = vpop.f32.mrb[0].mxu0
      %v2547 = vadd.f32 %v890, %v2546
      %v2548 = vpop.f32.mrb[0].mxu0
      %v2549 = vadd.f32 %v891, %v2548
      %2550 = vmatprep.mubr.f32.mxu0 %v1047
      %2551 = vmatmul.mubr.f32.gmra.mrb[0].mxu0 %v1046
      %v2552 = vpop.f32.mrb[0].mxu0
      %v2553 = vadd.f32 %v896, %v2552
      %v2554 = vpop.f32.mrb[0].mxu0
      %v2555 = vadd.f32 %v897, %v2554
      %2556 = vmatprep.mubr.f32.mxu0 %v1053
      %2557 = vmatmul.mubr.f32.gmra.mrb[0].mxu0 %v1052
      %v2558 = vpop.f32.mrb[0].mxu0
      %v2559 = vadd.f32 %v902, %v2558
      %v2560 = vpop.f32.mrb[0].mxu0
      %v2561 = vadd.f32 %v903, %v2560
      %2562 = vmatprep.mubr.f32.mxu0 %v1059
      %2563 = vmatmul.mubr.f32.gmra.mrb[0].mxu0 %v1058
      %v2564 = vpop.f32.mrb[0].mxu0
      %v2565 = vadd.f32 %v908, %v2564
      %v2566 = vpop.f32.mrb[0].mxu0
      %v2567 = vadd.f32 %v909, %v2566
      %2568 = vmatprep.mubr.f32.mxu0 %v1065
      %2569 = vmatmul.mubr.f32.gmra.mrb[0].mxu0 %v1064
      %v2570 = vpop.f32.mrb[0].mxu0
      %v2571 = vadd.f32 %v914, %v2570
      %v2572 = vpop.f32.mrb[0].mxu0
      %v2573 = vadd.f32 %v915, %v2572
      %2574 = vmatprep.mubr.f32.mxu0 %v1071
      %2575 = vmatmul.mubr.f32.gmra.mrb[0].mxu0 %v1070
      %v2576 = vpop.f32.mrb[0].mxu0
      %v2577 = vadd.f32 %v920, %v2576
      %v2578 = vpop.f32.mrb[0].mxu0
      %v2579 = vadd.f32 %v921, %v2578
      %2580 = vmatprep.mubr.f32.mxu0 %v1077
      %2581 = vmatmul.mubr.f32.gmra.mrb[0].mxu0 %v1076
      %v2582 = vpop.f32.mrb[0].mxu0
      %v2583 = vadd.f32 %v926, %v2582
      %v2584 = vpop.f32.mrb[0].mxu0
      %v2585 = vadd.f32 %v927, %v2584
      %2586 = vmatprep.mubr.f32.mxu0 %v1083
      %2587 = vmatmul.mubr.f32.gmra.mrb[0].mxu0 %v1082
      %v2588 = vpop.f32.mrb[0].mxu0
      %v2589 = vadd.f32 %v932, %v2588
      %v2590 = vpop.f32.mrb[0].mxu0
      %v2591 = vadd.f32 %v933, %v2590
      %2592 = vmatprep.mubr.f32.mxu0 %v1089
      %2593 = vmatmul.mubr.f32.gmra.mrb[0].mxu0 %v1088
      %v2594 = vpop.f32.mrb[0].mxu0
      %v2595 = vadd.f32 %v938, %v2594
      %v2596 = vpop.f32.mrb[0].mxu0
      %v2597 = vadd.f32 %v939, %v2596
      %2598 = vmatprep.mubr.f32.mxu0 %v1095
      %2599 = vmatmul.mubr.f32.gmra.mrb[0].mxu0 %v1094
      %v2600 = vpop.f32.mrb[0].mxu0
      %v2601 = vadd.f32 %v944, %v2600
      %v2602 = vpop.f32.mrb[0].mxu0
      %v2603 = vadd.f32 %v945, %v2602
      %2604 = vmatprep.mubr.f32.mxu0 %v1101
      %2605 = vmatmul.mubr.f32.gmra.mrb[0].mxu0 %v1100
      %v2606 = vpop.f32.mrb[0].mxu0
      %v2607 = vadd.f32 %v950, %v2606
      %v2608 = vpop.f32.mrb[0].mxu0
      %v2609 = vadd.f32 %v951, %v2608
      %2610 = vmatprep.mubr.f32.mxu0 %v1107
      %2611 = vmatmul.mubr.f32.gmra.mrb[0].mxu0 %v1106
      %v2612 = vpop.f32.mrb[0].mxu0
      %v2613 = vadd.f32 %v956, %v2612
      %v2614 = vpop.f32.mrb[0].mxu0
      %v2615 = vadd.f32 %v957, %v2614
      %2616 = vmatprep.mubr.f32.mxu0 %v1113
      %2617 = vmatmul.mubr.f32.gmra.mrb[0].mxu0 %v1112
      %v2618 = vpop.f32.mrb[0].mxu0
      %v2619 = vadd.f32 %v962, %v2618
      %v2620 = vpop.f32.mrb[0].mxu0
      %v2621 = vadd.f32 %v963, %v2620
      %2622 = vdwg.mxu0
      %2623 = vmatprep.subr.mxu0 %v435
      %2624 = vmatpush1.msra.mxu0 %v434
      %2625 = vmatprep.subr.mxu0 %v441
      %2626 = vmatpush1.msra.mxu0 %v440
      %2627 = vmatprep.subr.mxu0 %v447
      %2628 = vmatpush1.msra.mxu0 %v446
      %2629 = vmatprep.subr.mxu0 %v453
      %2630 = vmatpush1.msra.mxu0 %v452
      %2631 = vmatprep.subr.mxu0 %v459
      %2632 = vmatpush1.msra.mxu0 %v458
      %2633 = vmatprep.subr.mxu0 %v465
      %2634 = vmatpush1.msra.mxu0 %v464
      %2635 = vmatprep.subr.mxu0 %v471
      %2636 = vmatpush1.msra.mxu0 %v470
      %2637 = vmatprep.subr.mxu0 %v477
      %2638 = vmatpush1.msra.mxu0 %v476
      %2639 = vmatprep.subr.mxu0 %v483
      %2640 = vmatpush1.msra.mxu0 %v482
      %2641 = vmatprep.subr.mxu0 %v489
      %2642 = vmatpush1.msra.mxu0 %v488
      %2643 = vmatprep.subr.mxu0 %v495
      %2644 = vmatpush1.msra.mxu0 %v494
      %2645 = vmatprep.subr.mxu0 %v501
      %2646 = vmatpush1.msra.mxu0 %v500
      %2647 = vmatprep.subr.mxu0 %v507
      %2648 = vmatpush1.msra.mxu0 %v506
      %2649 = vmatprep.subr.mxu0 %v513
      %2650 = vmatpush1.msra.mxu0 %v512
      %2651 = vmatprep.subr.mxu0 %v519
      %2652 = vmatpush1.msra.mxu0 %v518
      %2653 = vmatprep.subr.mxu0 %v525
      %2654 = vmatpush1.msra.mxu0 %v524
      %2655 = vmatprep.subr.mxu0 %v531
      %2656 = vmatpush1.msra.mxu0 %v530
      %2657 = vmatprep.subr.mxu0 %v537
      %2658 = vmatpush1.msra.mxu0 %v536
      %2659 = vmatprep.subr.mxu0 %v543
      %2660 = vmatpush1.msra.mxu0 %v542
      %2661 = vmatprep.subr.mxu0 %v549
      %2662 = vmatpush1.msra.mxu0 %v548
      %2663 = vmatprep.subr.mxu0 %v555
      %2664 = vmatpush1.msra.mxu0 %v554
      %2665 = vmatprep.subr.mxu0 %v561
      %2666 = vmatpush1.msra.mxu0 %v560
      %2667 = vmatprep.subr.mxu0 %v567
      %2668 = vmatpush1.msra.mxu0 %v566
      %2669 = vmatprep.subr.mxu0 %v573
      %2670 = vmatpush1.msra.mxu0 %v572
      %2671 = vmatprep.subr.mxu0 %v579
      %2672 = vmatpush1.msra.mxu0 %v578
      %2673 = vmatprep.subr.mxu0 %v585
      %2674 = vmatpush1.msra.mxu0 %v584
      %2675 = vmatprep.subr.mxu0 %v591
      %2676 = vmatpush1.msra.mxu0 %v590
      %2677 = vmatprep.subr.mxu0 %v597
      %2678 = vmatpush1.msra.mxu0 %v596
      %2679 = vmatprep.subr.mxu0 %v603
      %2680 = vmatpush1.msra.mxu0 %v602
      %2681 = vmatprep.subr.mxu0 %v609
      %2682 = vmatpush1.msra.mxu0 %v608
      %2683 = vmatprep.subr.mxu0 %v615
      %2684 = vmatpush1.msra.mxu0 %v614
      %2685 = vmatprep.subr.mxu0 %v621
      %2686 = vmatpush1.msra.mxu0 %v620
      %2687 = vmatprep.mubr.f32.mxu0 %v971
      %2688 = vmatmul.mubr.f32.gmra.mrb[0].mxu0 %v970
      %v2689 = vpop.f32.mrb[0].mxu0
      %v2690 = vadd.f32 %v2475, %v2689
      %v2691 = vpop.f32.mrb[0].mxu0
      %v2692 = vadd.f32 %v2477, %v2691
      %2693 = vmatprep.mubr.f32.mxu0 %v977
      %2694 = vmatmul.mubr.f32.gmra.mrb[0].mxu0 %v976
      %v2695 = vpop.f32.mrb[0].mxu0
      %v2696 = vadd.f32 %v2481, %v2695
      %v2697 = vpop.f32.mrb[0].mxu0
      %v2698 = vadd.f32 %v2483, %v2697
      %2699 = vmatprep.mubr.f32.mxu0 %v983
      %2700 = vmatmul.mubr.f32.gmra.mrb[0].mxu0 %v982
      %v2701 = vpop.f32.mrb[0].mxu0
      %v2702 = vadd.f32 %v2487, %v2701
      %v2703 = vpop.f32.mrb[0].mxu0
      %v2704 = vadd.f32 %v2489, %v2703
      %2705 = vmatprep.mubr.f32.mxu0 %v989
      %2706 = vmatmul.mubr.f32.gmra.mrb[0].mxu0 %v988
      %v2707 = vpop.f32.mrb[0].mxu0
      %v2708 = vadd.f32 %v2493, %v2707
      %v2709 = vpop.f32.mrb[0].mxu0
      %v2710 = vadd.f32 %v2495, %v2709
      %2711 = vmatprep.mubr.f32.mxu0 %v995
      %2712 = vmatmul.mubr.f32.gmra.mrb[0].mxu0 %v994
      %v2713 = vpop.f32.mrb[0].mxu0
      %v2714 = vadd.f32 %v2499, %v2713
      %v2715 = vpop.f32.mrb[0].mxu0
      %v2716 = vadd.f32 %v2501, %v2715
      %2717 = vmatprep.mubr.f32.mxu0 %v1001
      %2718 = vmatmul.mubr.f32.gmra.mrb[0].mxu0 %v1000
      %v2719 = vpop.f32.mrb[0].mxu0
      %v2720 = vadd.f32 %v2505, %v2719
      %v2721 = vpop.f32.mrb[0].mxu0
      %v2722 = vadd.f32 %v2507, %v2721
      %2723 = vmatprep.mubr.f32.mxu0 %v1007
      %2724 = vmatmul.mubr.f32.gmra.mrb[0].mxu0 %v1006
      %v2725 = vpop.f32.mrb[0].mxu0
      %v2726 = vadd.f32 %v2511, %v2725
      %v2727 = vpop.f32.mrb[0].mxu0
      %v2728 = vadd.f32 %v2513, %v2727
      %2729 = vmatprep.mubr.f32.mxu0 %v1013
      %2730 = vmatmul.mubr.f32.gmra.mrb[0].mxu0 %v1012
      %v2731 = vpop.f32.mrb[0].mxu0
      %v2732 = vadd.f32 %v2517, %v2731
      %v2733 = vpop.f32.mrb[0].mxu0
      %v2734 = vadd.f32 %v2519, %v2733
      %2735 = vmatprep.mubr.f32.mxu0 %v1019
      %2736 = vmatmul.mubr.f32.gmra.mrb[0].mxu0 %v1018
      %v2737 = vpop.f32.mrb[0].mxu0
      %v2738 = vadd.f32 %v2523, %v2737
      %v2739 = vpop.f32.mrb[0].mxu0
      %v2740 = vadd.f32 %v2525, %v2739
      %2741 = vmatprep.mubr.f32.mxu0 %v1025
      %2742 = vmatmul.mubr.f32.gmra.mrb[0].mxu0 %v1024
      %v2743 = vpop.f32.mrb[0].mxu0
      %v2744 = vadd.f32 %v2529, %v2743
      %v2745 = vpop.f32.mrb[0].mxu0
      %v2746 = vadd.f32 %v2531, %v2745
      %2747 = vmatprep.mubr.f32.mxu0 %v1031
      %2748 = vmatmul.mubr.f32.gmra.mrb[0].mxu0 %v1030
      %v2749 = vpop.f32.mrb[0].mxu0
      %v2750 = vadd.f32 %v2535, %v2749
      %v2751 = vpop.f32.mrb[0].mxu0
      %v2752 = vadd.f32 %v2537, %v2751
      %2753 = vmatprep.mubr.f32.mxu0 %v1037
      %2754 = vmatmul.mubr.f32.gmra.mrb[0].mxu0 %v1036
      %v2755 = vpop.f32.mrb[0].mxu0
      %v2756 = vadd.f32 %v2541, %v2755
      %v2757 = vpop.f32.mrb[0].mxu0
      %v2758 = vadd.f32 %v2543, %v2757
      %2759 = vmatprep.mubr.f32.mxu0 %v1043
      %2760 = vmatmul.mubr.f32.gmra.mrb[0].mxu0 %v1042
      %v2761 = vpop.f32.mrb[0].mxu0
      %v2762 = vadd.f32 %v2547, %v2761
      %v2763 = vpop.f32.mrb[0].mxu0
      %v2764 = vadd.f32 %v2549, %v2763
      %2765 = vmatprep.mubr.f32.mxu0 %v1049
      %2766 = vmatmul.mubr.f32.gmra.mrb[0].mxu0 %v1048
      %v2767 = vpop.f32.mrb[0].mxu0
      %v2768 = vadd.f32 %v2553, %v2767
      %v2769 = vpop.f32.mrb[0].mxu0
      %v2770 = vadd.f32 %v2555, %v2769
      %2771 = vmatprep.mubr.f32.mxu0 %v1055
      %2772 = vmatmul.mubr.f32.gmra.mrb[0].mxu0 %v1054
      %v2773 = vpop.f32.mrb[0].mxu0
      %v2774 = vadd.f32 %v2559, %v2773
      %v2775 = vpop.f32.mrb[0].mxu0
      %v2776 = vadd.f32 %v2561, %v2775
      %2777 = vmatprep.mubr.f32.mxu0 %v1061
      %2778 = vmatmul.mubr.f32.gmra.mrb[0].mxu0 %v1060
      %v2779 = vpop.f32.mrb[0].mxu0
      %v2780 = vadd.f32 %v2565, %v2779
      %v2781 = vpop.f32.mrb[0].mxu0
      %v2782 = vadd.f32 %v2567, %v2781
      %2783 = vmatprep.mubr.f32.mxu0 %v1067
      %2784 = vmatmul.mubr.f32.gmra.mrb[0].mxu0 %v1066
      %v2785 = vpop.f32.mrb[0].mxu0
      %v2786 = vadd.f32 %v2571, %v2785
      %v2787 = vpop.f32.mrb[0].mxu0
      %v2788 = vadd.f32 %v2573, %v2787
      %2789 = vmatprep.mubr.f32.mxu0 %v1073
      %2790 = vmatmul.mubr.f32.gmra.mrb[0].mxu0 %v1072
      %v2791 = vpop.f32.mrb[0].mxu0
      %v2792 = vadd.f32 %v2577, %v2791
      %v2793 = vpop.f32.mrb[0].mxu0
      %v2794 = vadd.f32 %v2579, %v2793
      %2795 = vmatprep.mubr.f32.mxu0 %v1079
      %2796 = vmatmul.mubr.f32.gmra.mrb[0].mxu0 %v1078
      %v2797 = vpop.f32.mrb[0].mxu0
      %v2798 = vadd.f32 %v2583, %v2797
      %v2799 = vpop.f32.mrb[0].mxu0
      %v2800 = vadd.f32 %v2585, %v2799
      %2801 = vmatprep.mubr.f32.mxu0 %v1085
      %2802 = vmatmul.mubr.f32.gmra.mrb[0].mxu0 %v1084
      %v2803 = vpop.f32.mrb[0].mxu0
      %v2804 = vadd.f32 %v2589, %v2803
      %v2805 = vpop.f32.mrb[0].mxu0
      %v2806 = vadd.f32 %v2591, %v2805
      %2807 = vmatprep.mubr.f32.mxu0 %v1091
      %2808 = vmatmul.mubr.f32.gmra.mrb[0].mxu0 %v1090
      %v2809 = vpop.f32.mrb[0].mxu0
      %v2810 = vadd.f32 %v2595, %v2809
      %v2811 = vpop.f32.mrb[0].mxu0
      %v2812 = vadd.f32 %v2597, %v2811
      %2813 = vmatprep.mubr.f32.mxu0 %v1097
      %2814 = vmatmul.mubr.f32.gmra.mrb[0].mxu0 %v1096
      %v2815 = vpop.f32.mrb[0].mxu0
      %v2816 = vadd.f32 %v2601, %v2815
      %v2817 = vpop.f32.mrb[0].mxu0
      %v2818 = vadd.f32 %v2603, %v2817
      %2819 = vmatprep.mubr.f32.mxu0 %v1103
      %2820 = vmatmul.mubr.f32.gmra.mrb[0].mxu0 %v1102
      %v2821 = vpop.f32.mrb[0].mxu0
      %v2822 = vadd.f32 %v2607, %v2821
      %v2823 = vpop.f32.mrb[0].mxu0
      %v2824 = vadd.f32 %v2609, %v2823
      %2825 = vmatprep.mubr.f32.mxu0 %v1109
      %2826 = vmatmul.mubr.f32.gmra.mrb[0].mxu0 %v1108
      %v2827 = vpop.f32.mrb[0].mxu0
      %v2828 = vadd.f32 %v2613, %v2827
      %v2829 = vpop.f32.mrb[0].mxu0
      %v2830 = vadd.f32 %v2615, %v2829
      %2831 = vmatprep.mubr.f32.mxu0 %v1115
      %2832 = vmatmul.mubr.f32.gmra.mrb[0].mxu0 %v1114
      %v2833 = vpop.f32.mrb[0].mxu0
      %v2834 = vadd.f32 %v2619, %v2833
      %v2835 = vpop.f32.mrb[0].mxu0
      %v2836 = vadd.f32 %v2621, %v2835
      %2837 = vdwg.mxu0
      %2838 = vmatprep.subr.mxu0 %v627
      %2839 = vmatpush1.msra.mxu0 %v626
      %2840 = vmatprep.subr.mxu0 %v633
      %2841 = vmatpush1.msra.mxu0 %v632
      %2842 = vmatprep.subr.mxu0 %v639
      %2843 = vmatpush1.msra.mxu0 %v638
      %2844 = vmatprep.subr.mxu0 %v645
      %2845 = vmatpush1.msra.mxu0 %v644
      %2846 = vmatprep.subr.mxu0 %v651
      %2847 = vmatpush1.msra.mxu0 %v650
      %2848 = vmatprep.subr.mxu0 %v657
      %2849 = vmatpush1.msra.mxu0 %v656
      %2850 = vmatprep.subr.mxu0 %v663
      %2851 = vmatpush1.msra.mxu0 %v662
      %2852 = vmatprep.subr.mxu0 %v669
      %2853 = vmatpush1.msra.mxu0 %v668
      %2854 = vmatprep.subr.mxu0 %v675
      %2855 = vmatpush1.msra.mxu0 %v674
      %2856 = vmatprep.subr.mxu0 %v681
      %2857 = vmatpush1.msra.mxu0 %v680
      %2858 = vmatprep.subr.mxu0 %v687
      %2859 = vmatpush1.msra.mxu0 %v686
      %2860 = vmatprep.subr.mxu0 %v693
      %2861 = vmatpush1.msra.mxu0 %v692
      %2862 = vmatprep.subr.mxu0 %v699
      %2863 = vmatpush1.msra.mxu0 %v698
      %2864 = vmatprep.subr.mxu0 %v705
      %2865 = vmatpush1.msra.mxu0 %v704
      %2866 = vmatprep.subr.mxu0 %v711
      %2867 = vmatpush1.msra.mxu0 %v710
      %2868 = vmatprep.subr.mxu0 %v717
      %2869 = vmatpush1.msra.mxu0 %v716
      %2870 = vmatprep.subr.mxu0 %v723
      %2871 = vmatpush1.msra.mxu0 %v722
      %2872 = vmatprep.subr.mxu0 %v729
      %2873 = vmatpush1.msra.mxu0 %v728
      %2874 = vmatprep.subr.mxu0 %v735
      %2875 = vmatpush1.msra.mxu0 %v734
      %2876 = vmatprep.subr.mxu0 %v741
      %2877 = vmatpush1.msra.mxu0 %v740
      %2878 = vmatprep.subr.mxu0 %v747
      %2879 = vmatpush1.msra.mxu0 %v746
      %2880 = vmatprep.subr.mxu0 %v753
      %2881 = vmatpush1.msra.mxu0 %v752
      %2882 = vmatprep.subr.mxu0 %v759
      %2883 = vmatpush1.msra.mxu0 %v758
      %2884 = vmatprep.subr.mxu0 %v765
      %2885 = vmatpush1.msra.mxu0 %v764
      %2886 = vmatprep.subr.mxu0 %v771
      %2887 = vmatpush1.msra.mxu0 %v770
      %2888 = vmatprep.subr.mxu0 %v777
      %2889 = vmatpush1.msra.mxu0 %v776
      %2890 = vmatprep.subr.mxu0 %v783
      %2891 = vmatpush1.msra.mxu0 %v782
      %2892 = vmatprep.subr.mxu0 %v789
      %2893 = vmatpush1.msra.mxu0 %v788
      %2894 = vmatprep.subr.mxu0 %v795
      %2895 = vmatpush1.msra.mxu0 %v794
      %2896 = vmatprep.subr.mxu0 %v801
      %2897 = vmatpush1.msra.mxu0 %v800
      %2898 = vmatprep.subr.mxu0 %v807
      %2899 = vmatpush1.msra.mxu0 %v806
      %2900 = vmatprep.subr.mxu0 %v813
      %2901 = vmatpush1.msra.mxu0 %v812
      %2902 = vmatprep.mubr.f32.mxu0 %v973
      %2903 = vmatmul.mubr.f32.gmra.mrb[0].mxu0 %v972
      %v2904 = vpop.f32.mrb[0].mxu0
      %v2905 = vadd.f32 %v2690, %v2904
      %v2906 = vpop.f32.mrb[0].mxu0
      %v2907 = vadd.f32 %v2692, %v2906
      %2908 = vmatprep.mubr.f32.mxu0 %v979
      %2909 = vmatmul.mubr.f32.gmra.mrb[0].mxu0 %v978
      %v2910 = vpop.f32.mrb[0].mxu0
      %v2911 = vadd.f32 %v2696, %v2910
      %v2912 = vpop.f32.mrb[0].mxu0
      %v2913 = vadd.f32 %v2698, %v2912
      %2914 = vmatprep.mubr.f32.mxu0 %v985
      %2915 = vmatmul.mubr.f32.gmra.mrb[0].mxu0 %v984
      %v2916 = vpop.f32.mrb[0].mxu0
      %v2917 = vadd.f32 %v2702, %v2916
      %v2918 = vpop.f32.mrb[0].mxu0
      %v2919 = vadd.f32 %v2704, %v2918
      %2920 = vmatprep.mubr.f32.mxu0 %v991
      %2921 = vmatmul.mubr.f32.gmra.mrb[0].mxu0 %v990
      %v2922 = vpop.f32.mrb[0].mxu0
      %v2923 = vadd.f32 %v2708, %v2922
      %v2924 = vpop.f32.mrb[0].mxu0
      %v2925 = vadd.f32 %v2710, %v2924
      %2926 = vmatprep.mubr.f32.mxu0 %v997
      %2927 = vmatmul.mubr.f32.gmra.mrb[0].mxu0 %v996
      %v2928 = vpop.f32.mrb[0].mxu0
      %v2929 = vadd.f32 %v2714, %v2928
      %v2930 = vpop.f32.mrb[0].mxu0
      %v2931 = vadd.f32 %v2716, %v2930
      %2932 = vmatprep.mubr.f32.mxu0 %v1003
      %2933 = vmatmul.mubr.f32.gmra.mrb[0].mxu0 %v1002
      %v2934 = vpop.f32.mrb[0].mxu0
      %v2935 = vadd.f32 %v2720, %v2934
      %v2936 = vpop.f32.mrb[0].mxu0
      %v2937 = vadd.f32 %v2722, %v2936
      %2938 = vmatprep.mubr.f32.mxu0 %v1009
      %2939 = vmatmul.mubr.f32.gmra.mrb[0].mxu0 %v1008
      %v2940 = vpop.f32.mrb[0].mxu0
      %v2941 = vadd.f32 %v2726, %v2940
      %v2942 = vpop.f32.mrb[0].mxu0
      %v2943 = vadd.f32 %v2728, %v2942
      %2944 = vmatprep.mubr.f32.mxu0 %v1015
      %2945 = vmatmul.mubr.f32.gmra.mrb[0].mxu0 %v1014
      %v2946 = vpop.f32.mrb[0].mxu0
      %v2947 = vadd.f32 %v2732, %v2946
      %v2948 = vpop.f32.mrb[0].mxu0
      %v2949 = vadd.f32 %v2734, %v2948
      %2950 = vmatprep.mubr.f32.mxu0 %v1021
      %2951 = vmatmul.mubr.f32.gmra.mrb[0].mxu0 %v1020
      %v2952 = vpop.f32.mrb[0].mxu0
      %v2953 = vadd.f32 %v2738, %v2952
      %v2954 = vpop.f32.mrb[0].mxu0
      %v2955 = vadd.f32 %v2740, %v2954
      %2956 = vmatprep.mubr.f32.mxu0 %v1027
      %2957 = vmatmul.mubr.f32.gmra.mrb[0].mxu0 %v1026
      %v2958 = vpop.f32.mrb[0].mxu0
      %v2959 = vadd.f32 %v2744, %v2958
      %v2960 = vpop.f32.mrb[0].mxu0
      %v2961 = vadd.f32 %v2746, %v2960
      %2962 = vmatprep.mubr.f32.mxu0 %v1033
      %2963 = vmatmul.mubr.f32.gmra.mrb[0].mxu0 %v1032
      %v2964 = vpop.f32.mrb[0].mxu0
      %v2965 = vadd.f32 %v2750, %v2964
      %v2966 = vpop.f32.mrb[0].mxu0
      %v2967 = vadd.f32 %v2752, %v2966
      %2968 = vmatprep.mubr.f32.mxu0 %v1039
      %2969 = vmatmul.mubr.f32.gmra.mrb[0].mxu0 %v1038
      %v2970 = vpop.f32.mrb[0].mxu0
      %v2971 = vadd.f32 %v2756, %v2970
      %v2972 = vpop.f32.mrb[0].mxu0
      %v2973 = vadd.f32 %v2758, %v2972
      %2974 = vmatprep.mubr.f32.mxu0 %v1045
      %2975 = vmatmul.mubr.f32.gmra.mrb[0].mxu0 %v1044
      %v2976 = vpop.f32.mrb[0].mxu0
      %v2977 = vadd.f32 %v2762, %v2976
      %v2978 = vpop.f32.mrb[0].mxu0
      %v2979 = vadd.f32 %v2764, %v2978
      %2980 = vmatprep.mubr.f32.mxu0 %v1051
      %2981 = vmatmul.mubr.f32.gmra.mrb[0].mxu0 %v1050
      %v2982 = vpop.f32.mrb[0].mxu0
      %v2983 = vadd.f32 %v2768, %v2982
      %v2984 = vpop.f32.mrb[0].mxu0
      %v2985 = vadd.f32 %v2770, %v2984
      %2986 = vmatprep.mubr.f32.mxu0 %v1057
      %2987 = vmatmul.mubr.f32.gmra.mrb[0].mxu0 %v1056
      %v2988 = vpop.f32.mrb[0].mxu0
      %v2989 = vadd.f32 %v2774, %v2988
      %v2990 = vpop.f32.mrb[0].mxu0
      %v2991 = vadd.f32 %v2776, %v2990
      %2992 = vmatprep.mubr.f32.mxu0 %v1063
      %2993 = vmatmul.mubr.f32.gmra.mrb[0].mxu0 %v1062
      %v2994 = vpop.f32.mrb[0].mxu0
      %v2995 = vadd.f32 %v2780, %v2994
      %v2996 = vpop.f32.mrb[0].mxu0
      %v2997 = vadd.f32 %v2782, %v2996
      %2998 = vmatprep.mubr.f32.mxu0 %v1069
      %2999 = vmatmul.mubr.f32.gmra.mrb[0].mxu0 %v1068
      %v3000 = vpop.f32.mrb[0].mxu0
      %v3001 = vadd.f32 %v2786, %v3000
      %v3002 = vpop.f32.mrb[0].mxu0
      %v3003 = vadd.f32 %v2788, %v3002
      %3004 = vmatprep.mubr.f32.mxu0 %v1075
      %3005 = vmatmul.mubr.f32.gmra.mrb[0].mxu0 %v1074
      %v3006 = vpop.f32.mrb[0].mxu0
      %v3007 = vadd.f32 %v2792, %v3006
      %v3008 = vpop.f32.mrb[0].mxu0
      %v3009 = vadd.f32 %v2794, %v3008
      %3010 = vmatprep.mubr.f32.mxu0 %v1081
      %3011 = vmatmul.mubr.f32.gmra.mrb[0].mxu0 %v1080
      %v3012 = vpop.f32.mrb[0].mxu0
      %v3013 = vadd.f32 %v2798, %v3012
      %v3014 = vpop.f32.mrb[0].mxu0
      %v3015 = vadd.f32 %v2800, %v3014
      %3016 = vmatprep.mubr.f32.mxu0 %v1087
      %3017 = vmatmul.mubr.f32.gmra.mrb[0].mxu0 %v1086
      %v3018 = vpop.f32.mrb[0].mxu0
      %v3019 = vadd.f32 %v2804, %v3018
      %v3020 = vpop.f32.mrb[0].mxu0
      %v3021 = vadd.f32 %v2806, %v3020
      %3022 = vmatprep.mubr.f32.mxu0 %v1093
      %3023 = vmatmul.mubr.f32.gmra.mrb[0].mxu0 %v1092
      %v3024 = vpop.f32.mrb[0].mxu0
      %v3025 = vadd.f32 %v2810, %v3024
      %v3026 = vpop.f32.mrb[0].mxu0
      %v3027 = vadd.f32 %v2812, %v3026
      %3028 = vmatprep.mubr.f32.mxu0 %v1099
      %3029 = vmatmul.mubr.f32.gmra.mrb[0].mxu0 %v1098
      %v3030 = vpop.f32.mrb[0].mxu0
      %v3031 = vadd.f32 %v2816, %v3030
      %v3032 = vpop.f32.mrb[0].mxu0
      %v3033 = vadd.f32 %v2818, %v3032
      %3034 = vmatprep.mubr.f32.mxu0 %v1105
      %3035 = vmatmul.mubr.f32.gmra.mrb[0].mxu0 %v1104
      %v3036 = vpop.f32.mrb[0].mxu0
      %v3037 = vadd.f32 %v2822, %v3036
      %v3038 = vpop.f32.mrb[0].mxu0
      %v3039 = vadd.f32 %v2824, %v3038
      %3040 = vmatprep.mubr.f32.mxu0 %v1111
      %3041 = vmatmul.mubr.f32.gmra.mrb[0].mxu0 %v1110
      %v3042 = vpop.f32.mrb[0].mxu0
      %v3043 = vadd.f32 %v2828, %v3042
      %v3044 = vpop.f32.mrb[0].mxu0
      %v3045 = vadd.f32 %v2830, %v3044
      %3046 = vmatprep.mubr.f32.mxu0 %v1117
      %3047 = vmatmul.mubr.f32.gmra.mrb[0].mxu0 %v1116
      %v3048 = vpop.f32.mrb[0].mxu0
      %v3049 = vadd.f32 %v2834, %v3048
      %v3050 = vpop.f32.mrb[0].mxu0
      %v3051 = vadd.f32 %v2836, %v3050
      %3052 = vdwg.mxu0
      %3053 = vst [vmem:[%s236] sm:$0xff] %v1615
      %3054 = vst [vmem:[%s236 + $0x8] sm:$0xff] %v1617
      %3055 = vst [vmem:[%s236 + $0x10] sm:$0xff] %v2260
      %3056 = vst [vmem:[%s236 + $0x18] sm:$0xff] %v2262
      %3057 = vst [vmem:[%s236 + $0x20] sm:$0xff] %v2905
      %3058 = vst [vmem:[%s236 + $0x28] sm:$0xff] %v2907
      %3059 = vst [vmem:[%s236 + $0x30] sm:$0xff] %v1621
      %3060 = vst [vmem:[%s236 + $0x38] sm:$0xff] %v1623
      %3061 = vst [vmem:[%s236 + $0x40] sm:$0xff] %v2266
      %3062 = vst [vmem:[%s236 + $0x48] sm:$0xff] %v2268
      %3063 = vst [vmem:[%s236 + $0x50] sm:$0xff] %v2911
      %3064 = vst [vmem:[%s236 + $0x58] sm:$0xff] %v2913
      %3065 = vst [vmem:[%s236 + $0x60] sm:$0xff] %v1627
      %3066 = vst [vmem:[%s236 + $0x68] sm:$0xff] %v1629
      %3067 = vst [vmem:[%s236 + $0x70] sm:$0xff] %v2272
      %3068 = vst [vmem:[%s236 + $0x78] sm:$0xff] %v2274
      %3069 = vst [vmem:[%s236 + $0x80] sm:$0xff] %v2917
      %3070 = vst [vmem:[%s236 + $0x88] sm:$0xff] %v2919
      %3071 = vst [vmem:[%s236 + $0x90] sm:$0xff] %v1633
      %3072 = vst [vmem:[%s236 + $0x98] sm:$0xff] %v1635
      %3073 = vst [vmem:[%s236 + $0xa0] sm:$0xff] %v2278
      %3074 = vst [vmem:[%s236 + $0xa8] sm:$0xff] %v2280
      %3075 = vst [vmem:[%s236 + $0xb0] sm:$0xff] %v2923
      %3076 = vst [vmem:[%s236 + $0xb8] sm:$0xff] %v2925
      %3077 = vst [vmem:[%s236 + $0xc0] sm:$0xff] %v1639
      %3078 = vst [vmem:[%s236 + $0xc8] sm:$0xff] %v1641
      %3079 = vst [vmem:[%s236 + $0xd0] sm:$0xff] %v2284
      %3080 = vst [vmem:[%s236 + $0xd8] sm:$0xff] %v2286
      %3081 = vst [vmem:[%s236 + $0xe0] sm:$0xff] %v2929
      %3082 = vst [vmem:[%s236 + $0xe8] sm:$0xff] %v2931
      %3083 = vst [vmem:[%s236 + $0xf0] sm:$0xff] %v1645
      %3084 = vst [vmem:[%s236 + $0xf8] sm:$0xff] %v1647
      %3085 = vst [vmem:[%s236 + $0x100] sm:$0xff] %v2290
      %3086 = vst [vmem:[%s236 + $0x108] sm:$0xff] %v2292
      %3087 = vst [vmem:[%s236 + $0x110] sm:$0xff] %v2935
      %3088 = vst [vmem:[%s236 + $0x118] sm:$0xff] %v2937
      %3089 = vst [vmem:[%s236 + $0x120] sm:$0xff] %v1651
      %3090 = vst [vmem:[%s236 + $0x128] sm:$0xff] %v1653
      %3091 = vst [vmem:[%s236 + $0x130] sm:$0xff] %v2296
      %3092 = vst [vmem:[%s236 + $0x138] sm:$0xff] %v2298
      %3093 = vst [vmem:[%s236 + $0x140] sm:$0xff] %v2941
      %3094 = vst [vmem:[%s236 + $0x148] sm:$0xff] %v2943
      %3095 = vst [vmem:[%s236 + $0x150] sm:$0xff] %v1657
      %3096 = vst [vmem:[%s236 + $0x158] sm:$0xff] %v1659
      %3097 = vst [vmem:[%s236 + $0x160] sm:$0xff] %v2302
      %3098 = vst [vmem:[%s236 + $0x168] sm:$0xff] %v2304
      %3099 = vst [vmem:[%s236 + $0x170] sm:$0xff] %v2947
      %3100 = vst [vmem:[%s236 + $0x178] sm:$0xff] %v2949
      %3101 = vst [vmem:[%s236 + $0x180] sm:$0xff] %v1663
      %3102 = vst [vmem:[%s236 + $0x188] sm:$0xff] %v1665
      %3103 = vst [vmem:[%s236 + $0x190] sm:$0xff] %v2308
      %3104 = vst [vmem:[%s236 + $0x198] sm:$0xff] %v2310
      %3105 = vst [vmem:[%s236 + $0x1a0] sm:$0xff] %v2953
      %3106 = vst [vmem:[%s236 + $0x1a8] sm:$0xff] %v2955
      %3107 = vst [vmem:[%s236 + $0x1b0] sm:$0xff] %v1669
      %3108 = vst [vmem:[%s236 + $0x1b8] sm:$0xff] %v1671
      %3109 = vst [vmem:[%s236 + $0x1c0] sm:$0xff] %v2314
      %3110 = vst [vmem:[%s236 + $0x1c8] sm:$0xff] %v2316
      %3111 = vst [vmem:[%s236 + $0x1d0] sm:$0xff] %v2959
      %3112 = vst [vmem:[%s236 + $0x1d8] sm:$0xff] %v2961
      %3113 = vst [vmem:[%s236 + $0x1e0] sm:$0xff] %v1675
      %3114 = vst [vmem:[%s236 + $0x1e8] sm:$0xff] %v1677
      %3115 = vst [vmem:[%s236 + $0x1f0] sm:$0xff] %v2320
      %3116 = vst [vmem:[%s236 + $0x1f8] sm:$0xff] %v2322
      %3117 = vst [vmem:[%s236 + $0x200] sm:$0xff] %v2965
      %3118 = vst [vmem:[%s236 + $0x208] sm:$0xff] %v2967
      %3119 = vst [vmem:[%s236 + $0x210] sm:$0xff] %v1681
      %3120 = vst [vmem:[%s236 + $0x218] sm:$0xff] %v1683
      %3121 = vst [vmem:[%s236 + $0x220] sm:$0xff] %v2326
      %3122 = vst [vmem:[%s236 + $0x228] sm:$0xff] %v2328
      %3123 = vst [vmem:[%s236 + $0x230] sm:$0xff] %v2971
      %3124 = vst [vmem:[%s236 + $0x238] sm:$0xff] %v2973
      %3125 = vst [vmem:[%s236 + $0x240] sm:$0xff] %v1687
      %3126 = vst [vmem:[%s236 + $0x248] sm:$0xff] %v1689
      %3127 = vst [vmem:[%s236 + $0x250] sm:$0xff] %v2332
      %3128 = vst [vmem:[%s236 + $0x258] sm:$0xff] %v2334
      %3129 = vst [vmem:[%s236 + $0x260] sm:$0xff] %v2977
      %3130 = vst [vmem:[%s236 + $0x268] sm:$0xff] %v2979
      %3131 = vst [vmem:[%s236 + $0x270] sm:$0xff] %v1693
      %3132 = vst [vmem:[%s236 + $0x278] sm:$0xff] %v1695
      %3133 = vst [vmem:[%s236 + $0x280] sm:$0xff] %v2338
      %3134 = vst [vmem:[%s236 + $0x288] sm:$0xff] %v2340
      %3135 = vst [vmem:[%s236 + $0x290] sm:$0xff] %v2983
      %3136 = vst [vmem:[%s236 + $0x298] sm:$0xff] %v2985
      %3137 = vst [vmem:[%s236 + $0x2a0] sm:$0xff] %v1699
      %3138 = vst [vmem:[%s236 + $0x2a8] sm:$0xff] %v1701
      %3139 = vst [vmem:[%s236 + $0x2b0] sm:$0xff] %v2344
      %3140 = vst [vmem:[%s236 + $0x2b8] sm:$0xff] %v2346
      %3141 = vst [vmem:[%s236 + $0x2c0] sm:$0xff] %v2989
      %3142 = vst [vmem:[%s236 + $0x2c8] sm:$0xff] %v2991
      %3143 = vst [vmem:[%s236 + $0x2d0] sm:$0xff] %v1705
      %3144 = vst [vmem:[%s236 + $0x2d8] sm:$0xff] %v1707
      %3145 = vst [vmem:[%s236 + $0x2e0] sm:$0xff] %v2350
      %3146 = vst [vmem:[%s236 + $0x2e8] sm:$0xff] %v2352
      %3147 = vst [vmem:[%s236 + $0x2f0] sm:$0xff] %v2995
      %3148 = vst [vmem:[%s236 + $0x2f8] sm:$0xff] %v2997
      %3149 = vst [vmem:[%s236 + $0x300] sm:$0xff] %v1711
      %3150 = vst [vmem:[%s236 + $0x308] sm:$0xff] %v1713
      %3151 = vst [vmem:[%s236 + $0x310] sm:$0xff] %v2356
      %3152 = vst [vmem:[%s236 + $0x318] sm:$0xff] %v2358
      %3153 = vst [vmem:[%s236 + $0x320] sm:$0xff] %v3001
      %3154 = vst [vmem:[%s236 + $0x328] sm:$0xff] %v3003
      %3155 = vst [vmem:[%s236 + $0x330] sm:$0xff] %v1717
      %3156 = vst [vmem:[%s236 + $0x338] sm:$0xff] %v1719
      %3157 = vst [vmem:[%s236 + $0x340] sm:$0xff] %v2362
      %3158 = vst [vmem:[%s236 + $0x348] sm:$0xff] %v2364
      %3159 = vst [vmem:[%s236 + $0x350] sm:$0xff] %v3007
      %3160 = vst [vmem:[%s236 + $0x358] sm:$0xff] %v3009
      %3161 = vst [vmem:[%s236 + $0x360] sm:$0xff] %v1723
      %3162 = vst [vmem:[%s236 + $0x368] sm:$0xff] %v1725
      %3163 = vst [vmem:[%s236 + $0x370] sm:$0xff] %v2368
      %3164 = vst [vmem:[%s236 + $0x378] sm:$0xff] %v2370
      %3165 = vst [vmem:[%s236 + $0x380] sm:$0xff] %v3013
      %3166 = vst [vmem:[%s236 + $0x388] sm:$0xff] %v3015
      %3167 = vst [vmem:[%s236 + $0x390] sm:$0xff] %v1729
      %3168 = vst [vmem:[%s236 + $0x398] sm:$0xff] %v1731
      %3169 = vst [vmem:[%s236 + $0x3a0] sm:$0xff] %v2374
      %3170 = vst [vmem:[%s236 + $0x3a8] sm:$0xff] %v2376
      %3171 = vst [vmem:[%s236 + $0x3b0] sm:$0xff] %v3019
      %3172 = vst [vmem:[%s236 + $0x3b8] sm:$0xff] %v3021
      %3173 = vst [vmem:[%s236 + $0x3c0] sm:$0xff] %v1735
      %3174 = vst [vmem:[%s236 + $0x3c8] sm:$0xff] %v1737
      %3175 = vst [vmem:[%s236 + $0x3d0] sm:$0xff] %v2380
      %3176 = vst [vmem:[%s236 + $0x3d8] sm:$0xff] %v2382
      %3177 = vst [vmem:[%s236 + $0x3e0] sm:$0xff] %v3025
      %3178 = vst [vmem:[%s236 + $0x3e8] sm:$0xff] %v3027
      %3179 = vst [vmem:[%s236 + $0x3f0] sm:$0xff] %v1741
      %3180 = vst [vmem:[%s236 + $0x3f8] sm:$0xff] %v1743
      %3181 = vst [vmem:[%s236 + $0x400] sm:$0xff] %v2386
      %3182 = vst [vmem:[%s236 + $0x408] sm:$0xff] %v2388
      %3183 = vst [vmem:[%s236 + $0x410] sm:$0xff] %v3031
      %3184 = vst [vmem:[%s236 + $0x418] sm:$0xff] %v3033
      %3185 = vst [vmem:[%s236 + $0x420] sm:$0xff] %v1747
      %3186 = vst [vmem:[%s236 + $0x428] sm:$0xff] %v1749
      %3187 = vst [vmem:[%s236 + $0x430] sm:$0xff] %v2392
      %3188 = vst [vmem:[%s236 + $0x438] sm:$0xff] %v2394
      %3189 = vst [vmem:[%s236 + $0x440] sm:$0xff] %v3037
      %3190 = vst [vmem:[%s236 + $0x448] sm:$0xff] %v3039
      %3191 = vst [vmem:[%s236 + $0x450] sm:$0xff] %v1753
      %3192 = vst [vmem:[%s236 + $0x458] sm:$0xff] %v1755
      %3193 = vst [vmem:[%s236 + $0x460] sm:$0xff] %v2398
      %3194 = vst [vmem:[%s236 + $0x468] sm:$0xff] %v2400
      %3195 = vst [vmem:[%s236 + $0x470] sm:$0xff] %v3043
      %3196 = vst [vmem:[%s236 + $0x478] sm:$0xff] %v3045
      %3197 = vst [vmem:[%s236 + $0x480] sm:$0xf] %v1759
      %3198 = vst [vmem:[%s236 + $0x488] sm:$0xf] %v1761
      %3199 = vst [vmem:[%s236 + $0x490] sm:$0xf] %v2404
      %3200 = vst [vmem:[%s236 + $0x498] sm:$0xf] %v2406
      %3201 = vst [vmem:[%s236 + $0x4a0] sm:$0xf] %v3049
      %3202 = vst [vmem:[%s236 + $0x4a8] sm:$0xf] %v3051
      %v3203 = vlaneseq
      %vm3204 = vcmp.ge.s32.totalorder %v3203, 0
      %vm3205 = vcmp.lt.s32.totalorder %v3203, 768
      %vm3206 = vmand %vm3204, %vm3205
      %s3207 = scalar_lea.vmem %s236, 1156
      %3208 = vst.msk [vmem:[%s3207] ss:$8 sm:$0xf] %vm3206, %v967
      %3209 = vst.msk [vmem:[%s3207] ss:$8 sm:$0x30] %vm3206, %v967
      %s3210 = smul.u32 6, %s19
      %p3211 = scmp.lt.s32.totalorder %s18, 1
      %s3212 = scalar_select %p3211, %s18, 1
      %p3213 = scmp.lt.s32.totalorder %s3210, 5
      %s3214 = scalar_select %p3213, %s3210, 5
      %s3215 = smul.addr %s3212, 150
      %s3216 = sadd.s32 %s3214, %s3215
      %s3217 = smul.addr %s3216, 8
      %s3218 = scalar_lea.vmem %s3, %s3217
      // Predicated region
      $region33: #{pre_work_forward.1} parent=31 // pred_check
        %p3219 = pneg %p124
      $region34: #{pre_work_forward.1} parent=31 // pred_check_branch
        %3221 = sbr.rel (%p3219) target = $region36
      $region35: #{pre_work_forward.1} parent=31 // pred_region
        %s3222 = smul.u32 6, %s19
      $region36: #{pre_work_forward.1} parent=31 // pred_fallthru
        _
    $region32: #{pre_work_forward.1} parent=5 // pred_fallthru
      _
    %p3223 = scmp.le.s32.totalorder 2, %s9
    // Predicated region
    $region37: #{pre_work_forward.1} parent=5 // pred_check
      %p3224 = pneg %p3223
    $region38: #{pre_work_forward.1} parent=5 // pred_check_branch
      %3226 = sbr.rel (%p3224) target = $region40
    $region39: #{pre_work_forward.1} parent=5 // pred_region
      %s3227 = ssub.s32 %s9, 2
      // Predicated region
      $region41: #{pre_work_forward.1} parent=39 // pred_check
        %p3228 = pneg %p130
      $region42: #{pre_work_forward.1} parent=39 // pred_check_branch
        %3230 = sbr.rel (%p3228) target = $region44
      $region43: #{pre_work_forward.1} parent=39 // pred_region
        %s3231 = smul.u32 6, %s21
        %p3232 = scmp.lt.s32.totalorder %s20, 1
        %s3233 = scalar_select %p3232, %s20, 1
        %p3234 = scmp.lt.s32.totalorder %s3231, 5
        %s3235 = scalar_select %p3234, %s3231, 5
        %s3236 = smul.addr %s3233, 150
        %s3237 = sadd.s32 %s3235, %s3236
        %s3238 = smul.addr %s3237, 8
        %s3239 = scalar_lea.vmem %s3, %s3238
      $region44: #{pre_work_forward.1} parent=39 // pred_fallthru
        _
    $region40: #{pre_work_forward.1} parent=5 // pred_fallthru
      _
  $region6: #{pre_work_forward.1} parent=0 // loop_footer
    %s13 = sadd.s32 1, %s9
  $region7: #{pre_work_forward.1} parent=0 // loop_footer_branch
    %8 = sbr.rel target = $region3
  $region8: #{pre_work_forward.1} parent=0 // loop_exit
    _

</llo_original>
